<compile_context>
chip_gen: v7x
topology: tpu7x:2x2x1
jax: 0.10.0
libtpu: 0.0.40
codegen_flags: <defaults>
</compile_context>

<pallas_src>
import numpy as np
import jax
import jax.numpy as jnp
from jax.experimental import pallas as pl
from jax.experimental.pallas import tpu as pltpu

# ---------------- Model config (small synthetic sizes) ----------------
VOCAB_SIZE = 2000
EMBED_DIM = 50
EMBED_PAD = 64          # lane-aligned embedding width (zeros in cols 50..63)
CATEGORIES = 5          # BBC-text has 5 classes
BATCH = 16              # total samples
SEQ_LEN = 64            # token sequence length
SEQ_PAD = 72            # per-sample row block: multiple of 8 and of 3
P1B = SEQ_PAD // 3      # per-sample rows after pool1 -> 24 (mult of 8 and 3)
P2B = P1B // 3          # per-sample rows after pool2 -> 8

# True (PyTorch) lengths: valid conv, floor pooling
L1 = SEQ_LEN - 2        # 62
LP1 = L1 // 3           # 20
L2 = LP1 - 2            # 18
LP2 = L2 // 3           # 6
L3 = LP2 - 2            # 4

C1, C2, C3 = 32, 64, 128
FC1 = 64
OUT_PAD = 128           # lane-dense padded classifier width (>= CATEGORIES)


# ---------------------------- Pallas kernel ----------------------------
def _make_kernel(bb):
    """Kernel processing `bb` samples per grid step, rows flattened."""
    r1 = bb * SEQ_PAD   # conv1 rows per step
    n1 = bb * P1B       # pool1 / conv2 rows per step
    n2 = bb * P2B       # pool2 / conv3 rows per step

    def kernel(xe_ref, w1_ref, b1_ref, w2_ref, b2_ref, w3_ref, b3_ref,
               wf1_ref, bf1_ref, wf2_ref, bf2_ref, out_ref,
               h1_ref, h2_ref, h3_ref):

        def shift_up(v, k):
            # out[i] = v[i + k] (rows wrap at the block end); wrapped rows only
            # ever land in per-sample padding rows, never in a valid output.
            return jnp.concatenate([v[k:, :], v[:k, :]], axis=0)

        def conv_relu(v, w_ref, b_ref):
            # k=3 "valid" conv as ONE im2col matmul over the whole block.
            xi = jnp.concatenate([v, shift_up(v, 1), shift_up(v, 2)], axis=-1)
            acc = jnp.dot(xi, w_ref[...], preferred_element_type=jnp.float32)
            return jnp.maximum(acc + b_ref[...], 0.0)

        def pool3(h_ref, n_out):
            # MaxPool1d(3,3): three stride-3 sublane loads + VPU max.
            a = h_ref[pl.ds(0, n_out, stride=3), :]
            b = h_ref[pl.ds(1, n_out, stride=3), :]
            c = h_ref[pl.ds(2, n_out, stride=3), :]
            return jnp.maximum(jnp.maximum(a, b), c)

        x = xe_ref[...]                                   # (r1, 64)
        h1_ref[...] = conv_relu(x, w1_ref, b1_ref)        # (r1, 32)
        p1 = pool3(h1_ref, n1)                            # (n1, 32)
        h2_ref[...] = conv_relu(p1, w2_ref, b2_ref)       # (n1, 64)
        p2 = pool3(h2_ref, n2)                            # (n2, 64)
        h3_ref[...] = conv_relu(p2, w3_ref, b3_ref)       # (n2, 128)

        # Global max over the L3=4 valid conv3 rows of each sample
        # (per-sample block is P2B=8 rows; rows 4..7 are padding).
        g = h3_ref[pl.ds(0, bb, stride=P2B), :]           # (bb, 128)
        for k in range(1, L3):
            g = jnp.maximum(g, h3_ref[pl.ds(k, bb, stride=P2B), :])

        # Batched classifier head (lane-dense padded output).
        z = jnp.maximum(
            jnp.dot(g, wf1_ref[...], preferred_element_type=jnp.float32)
            + bf1_ref[...], 0.0)                          # (bb, 64)
        out_ref[...] = (
            jnp.dot(z, wf2_ref[...], preferred_element_type=jnp.float32)
            + bf2_ref[...])                               # (bb, 128)

    return kernel, r1, n1, n2


def pick_batch_block(batch):
    """One block per TensorCore on v7x; a single grid step elsewhere."""
    try:
        kind = jax.devices()[0].device_kind.lower()
    except Exception:
        kind = ""
    if "v7" in kind and batch % 2 == 0:
        return batch // 2
    return batch


def cnn_forward(xe, params, batch_block=None):
    """xe: embedded tokens (B, SEQ_LEN, EMBED_DIM) float32 -> (B, CATEGORIES)."""
    w1, b1, w2, b2, w3, b3, wf1, bf1, wf2, bf2 = params
    B = xe.shape[0]
    if batch_block is None:
        batch_block = pick_batch_block(B)
    assert B % batch_block == 0

    # ---- wrapper-side layout prep (cheap XLA glue, done once) ----
    # Pad embed dim 50->64 (lane aligned) and seq 64->72 (mult of 8 and 3),
    # then flatten samples along rows so every conv/pool is one batched op.
    xe_p = jnp.zeros((B, SEQ_PAD, EMBED_PAD), jnp.float32)
    xe_p = xe_p.at[:, :SEQ_LEN, :EMBED_DIM].set(xe)
    xe_flat = xe_p.reshape(B * SEQ_PAD, EMBED_PAD)

    # Conv weights: (K, Cin, Cout) -> (K*Cin_pad, Cout); row index = k*Cin+cin
    # matches the im2col lane layout [x[l], x[l+1], x[l+2]].
    w1p = jnp.zeros((3, EMBED_PAD, C1), jnp.float32).at[:, :EMBED_DIM, :].set(w1)
    w1f = w1p.reshape(3 * EMBED_PAD, C1)
    w2f = w2.reshape(3 * C1, C2)
    w3f = w3.reshape(3 * C2, C3)
    # Lane-dense padded head: extra output lanes are exact zeros.
    wf2p = jnp.zeros((FC1, OUT_PAD), jnp.float32).at[:, :CATEGORIES].set(wf2)
    bf2p = jnp.zeros((1, OUT_PAD), jnp.float32).at[:, :CATEGORIES].set(bf2)

    kernel, r1, n1, n2 = _make_kernel(batch_block)

    def full_spec(a):
        nd = a.ndim
        return pl.BlockSpec(a.shape, lambda b, _nd=nd: (0,) * _nd)

    grid = (B // batch_block,)
    out = pl.pallas_call(
        kernel,
        out_shape=jax.ShapeDtypeStruct((B, OUT_PAD), jnp.float32),
        grid=grid,
        in_specs=[
            pl.BlockSpec((r1, EMBED_PAD), lambda b: (b, 0)),
            full_spec(w1f), full_spec(b1),
            full_spec(w2f), full_spec(b2),
            full_spec(w3f), full_spec(b3),
            full_spec(wf1), full_spec(bf1),
            full_spec(wf2p), full_spec(bf2p),
        ],
        out_specs=pl.BlockSpec((batch_block, OUT_PAD), lambda b: (b, 0)),
        scratch_shapes=[pltpu.VMEM((r1, C1), jnp.float32),
                        pltpu.VMEM((n1, C2), jnp.float32),
                        pltpu.VMEM((n2, C3), jnp.float32)],
        compiler_params=pltpu.CompilerParams(
            dimension_semantics=("parallel",)),   # batch-parallel across TCs
    )(xe_flat, w1f, b1, w2f, b2, w3f, b3, wf1, bf1, wf2p, bf2p)
    return out[:, :CATEGORIES]   # matches PyTorch squeeze()-ed logits


# ------------------------- Parameter creation --------------------------
def init_params(key):
    ks = jax.random.split(key, 11)

    def unif(k, shape, fan_in):
        bound = 1.0 / np.sqrt(fan_in)
        return jax.random.uniform(k, shape, jnp.float32, -bound, bound)

    emb = jax.random.normal(ks[0], (VOCAB_SIZE + 1, EMBED_DIM), jnp.float32)

    # PyTorch conv weight layout: (Cout, Cin, K). We keep (K, Cin, Cout).
    w1 = jnp.transpose(unif(ks[1], (C1, EMBED_DIM, 3), EMBED_DIM * 3), (2, 1, 0))
    b1 = unif(ks[2], (1, C1), EMBED_DIM * 3)
    w2 = jnp.transpose(unif(ks[3], (C2, C1, 3), C1 * 3), (2, 1, 0))
    b2 = unif(ks[4], (1, C2), C1 * 3)
    w3 = jnp.transpose(unif(ks[5], (C3, C2, 3), C2 * 3), (2, 1, 0))
    b3 = unif(ks[6], (1, C3), C2 * 3)
    # PyTorch Linear weight layout: (out, in). Kernel wants (in, out).
    wf1 = unif(ks[7], (FC1, C3), C3).T
    bf1 = unif(ks[8], (1, FC1), C3)
    wf2 = unif(ks[9], (CATEGORIES, FC1), FC1).T
    bf2 = unif(ks[10], (1, CATEGORIES), FC1)
    return emb, (w1, b1, w2, b2, w3, b3, wf1, bf1, wf2, bf2)


# ------------------------- Pure-JAX reference --------------------------
def reference_forward(xe, params):
    w1, b1, w2, b2, w3, b3, wf1, bf1, wf2, bf2 = params

    def conv_relu(x, w, b, l_out):
        acc = b[None]
        for k in range(3):
            acc = acc + jnp.einsum('blc,cd->bld', x[:, k:k + l_out, :], w[k],
                                   precision=jax.lax.Precision.HIGHEST)
        return jnp.maximum(acc, 0.0)

    def maxpool3(x):
        bsz, ln, ch = x.shape
        lp = ln // 3
        return x[:, :lp * 3, :].reshape(bsz, lp, 3, ch).max(axis=2)

    h = conv_relu(xe, w1, b1, L1)
    h = maxpool3(h)
    h = conv_relu(h, w2, b2, L2)
    h = maxpool3(h)
    h = conv_relu(h, w3, b3, L3)
    g = h.max(axis=1)
    z = jnp.maximum(g @ wf1 + bf1, 0.0)
    return z @ wf2 + bf2


# -------------------------------- Main ---------------------------------
if __name__ == "__main__":
    key = jax.random.PRNGKey(0)
    k_tok, k_par = jax.random.split(key)

    tokens = jax.random.randint(k_tok, (BATCH, SEQ_LEN), 0, VOCAB_SIZE + 1)
    emb_table, params = init_params(k_par)

    # Embedding lookup kept as plain-JAX glue (data-dependent gather).
    xe = emb_table[tokens].astype(jnp.float32)     # (B, SEQ_LEN, EMBED_DIM)

    out = cnn_forward(xe, params)
    out = jax.block_until_ready(out)

    ref = reference_forward(xe, params)
    assert out.shape == (BATCH, CATEGORIES)
    np.testing.assert_allclose(np.asarray(out), np.asarray(ref),
                               rtol=2e-2, atol=2e-2)
    print("KERNEL_OK")
</pallas_src>

<mosaic_0001>
module attributes {stable_mosaic.version = 11 : i64} {
  func.func @kernel(%arg0: i32, %arg1: memref<1152x64xf32, #tpu.memory_space<vmem>>, %arg2: memref<192x32xf32, #tpu.memory_space<vmem>>, %arg3: memref<1x32xf32, #tpu.memory_space<vmem>>, %arg4: memref<96x64xf32, #tpu.memory_space<vmem>>, %arg5: memref<1x64xf32, #tpu.memory_space<vmem>>, %arg6: memref<192x128xf32, #tpu.memory_space<vmem>>, %arg7: memref<1x128xf32, #tpu.memory_space<vmem>>, %arg8: memref<128x64xf32, #tpu.memory_space<vmem>>, %arg9: memref<1x64xf32, #tpu.memory_space<vmem>>, %arg10: memref<64x128xf32, #tpu.memory_space<vmem>>, %arg11: memref<1x128xf32, #tpu.memory_space<vmem>>, %arg12: memref<16x128xf32, #tpu.memory_space<vmem>>, %arg13: memref<1152x32xf32, #tpu.memory_space<vmem>>, %arg14: memref<384x64xf32, #tpu.memory_space<vmem>>, %arg15: memref<128x128xf32, #tpu.memory_space<vmem>>) attributes {dimension_semantics = [#tpu.dimension_semantics<parallel>], iteration_bounds = array<i64: 1>, scalar_prefetch = 0 : i64, scratch_operands = 3 : i64, tpu.core_type = #tpu.core_type<tc>, window_params = [{transform_indices = @transform_0, window_bounds = array<i64: 1152, 64>}, {pipeline_mode = #tpu.pipeline_mode<synchronous>, transform_indices = @transform_1, window_bounds = array<i64: 192, 32>}, {pipeline_mode = #tpu.pipeline_mode<synchronous>, transform_indices = @transform_2, window_bounds = array<i64: 1, 32>}, {pipeline_mode = #tpu.pipeline_mode<synchronous>, transform_indices = @transform_3, window_bounds = array<i64: 96, 64>}, {pipeline_mode = #tpu.pipeline_mode<synchronous>, transform_indices = @transform_4, window_bounds = array<i64: 1, 64>}, {pipeline_mode = #tpu.pipeline_mode<synchronous>, transform_indices = @transform_5, window_bounds = array<i64: 192, 128>}, {pipeline_mode = #tpu.pipeline_mode<synchronous>, transform_indices = @transform_6, window_bounds = array<i64: 1, 128>}, {pipeline_mode = #tpu.pipeline_mode<synchronous>, transform_indices = @transform_7, window_bounds = array<i64: 128, 64>}, {pipeline_mode = #tpu.pipeline_mode<synchronous>, transform_indices = @transform_8, window_bounds = array<i64: 1, 64>}, {pipeline_mode = #tpu.pipeline_mode<synchronous>, transform_indices = @transform_9, window_bounds = array<i64: 64, 128>}, {pipeline_mode = #tpu.pipeline_mode<synchronous>, transform_indices = @transform_10, window_bounds = array<i64: 1, 128>}, {transform_indices = @transform_11, window_bounds = array<i64: 16, 128>}]} {
    %c0 = arith.constant 0 : index
    %c0_0 = arith.constant 0 : index
    %0 = vector.load %arg1[%c0, %c0_0] : memref<1152x64xf32, #tpu.memory_space<vmem>>, vector<1152x64xf32>
    %1 = vector.extract_strided_slice %0 {offsets = [1, 0], sizes = [1151, 64], strides = [1, 1]} : vector<1152x64xf32> to vector<1151x64xf32>
    %2 = vector.extract_strided_slice %0 {offsets = [0, 0], sizes = [1, 64], strides = [1, 1]} : vector<1152x64xf32> to vector<1x64xf32>
    %3 = tpu.concatenate %1, %2 in 0 : vector<1151x64xf32>, vector<1x64xf32> -> vector<1152x64xf32>
    %4 = vector.extract_strided_slice %0 {offsets = [2, 0], sizes = [1150, 64], strides = [1, 1]} : vector<1152x64xf32> to vector<1150x64xf32>
    %5 = vector.extract_strided_slice %0 {offsets = [0, 0], sizes = [2, 64], strides = [1, 1]} : vector<1152x64xf32> to vector<2x64xf32>
    %6 = tpu.concatenate %4, %5 in 0 : vector<1150x64xf32>, vector<2x64xf32> -> vector<1152x64xf32>
    %7 = tpu.concatenate %0, %3, %6 in 1 : vector<1152x64xf32>, vector<1152x64xf32>, vector<1152x64xf32> -> vector<1152x192xf32>
    %c0_1 = arith.constant 0 : index
    %c0_2 = arith.constant 0 : index
    %8 = vector.load %arg2[%c0_1, %c0_2] : memref<192x32xf32, #tpu.memory_space<vmem>>, vector<192x32xf32>
    %cst = arith.constant dense<0.000000e+00> : vector<1152x32xf32>
    %9 = tpu.matmul %7, %8, %cst {dimension_numbers = #tpu.dot_dimension_numbers<[1], [0], [0], [1], [0, 0, 1, 1], [], []>} : vector<1152x192xf32>, vector<192x32xf32>, vector<1152x32xf32> -> vector<1152x32xf32>
    %c0_3 = arith.constant 0 : index
    %c0_4 = arith.constant 0 : index
    %10 = vector.load %arg3[%c0_3, %c0_4] : memref<1x32xf32, #tpu.memory_space<vmem>>, vector<1x32xf32>
    %11 = vector.broadcast %10 : vector<1x32xf32> to vector<1152x32xf32>
    %12 = arith.addf %9, %11 : vector<1152x32xf32>
    %cst_5 = arith.constant 0.000000e+00 : f32
    %13 = vector.broadcast %cst_5 : f32 to vector<1152x32xf32>
    %14 = arith.maximumf %12, %13 : vector<1152x32xf32>
    %c0_6 = arith.constant 0 : index
    %c0_7 = arith.constant 0 : index
    %15 = vector.load %arg13[%c0_6, %c0_7] : memref<1152x32xf32, #tpu.memory_space<vmem>>, vector<1152x32xf32>
    tpu.vector_store %arg13[%c0_6, %c0_7], %14 {strides = array<i32>} : memref<1152x32xf32, #tpu.memory_space<vmem>>, vector<1152x32xf32>,
    %c0_8 = arith.constant 0 : index
    %c0_9 = arith.constant 0 : index
    %16 = tpu.strided_load %arg13[%c0_8, %c0_9] {strides = array<i32: 3, 1>} : memref<1152x32xf32, #tpu.memory_space<vmem>>, vector<384x32xf32>
    %c1 = arith.constant 1 : index
    %c0_10 = arith.constant 0 : index
    %17 = tpu.strided_load %arg13[%c1, %c0_10] {strides = array<i32: 3, 1>} : memref<1152x32xf32, #tpu.memory_space<vmem>>, vector<384x32xf32>
    %c2 = arith.constant 2 : index
    %c0_11 = arith.constant 0 : index
    %18 = tpu.strided_load %arg13[%c2, %c0_11] {strides = array<i32: 3, 1>} : memref<1152x32xf32, #tpu.memory_space<vmem>>, vector<384x32xf32>
    %19 = arith.maximumf %16, %17 : vector<384x32xf32>
    %20 = arith.maximumf %19, %18 : vector<384x32xf32>
    %21 = vector.extract_strided_slice %20 {offsets = [1, 0], sizes = [383, 32], strides = [1, 1]} : vector<384x32xf32> to vector<383x32xf32>
    %22 = vector.extract_strided_slice %20 {offsets = [0, 0], sizes = [1, 32], strides = [1, 1]} : vector<384x32xf32> to vector<1x32xf32>
    %23 = tpu.concatenate %21, %22 in 0 : vector<383x32xf32>, vector<1x32xf32> -> vector<384x32xf32>
    %24 = vector.extract_strided_slice %20 {offsets = [2, 0], sizes = [382, 32], strides = [1, 1]} : vector<384x32xf32> to vector<382x32xf32>
    %25 = vector.extract_strided_slice %20 {offsets = [0, 0], sizes = [2, 32], strides = [1, 1]} : vector<384x32xf32> to vector<2x32xf32>
    %26 = tpu.concatenate %24, %25 in 0 : vector<382x32xf32>, vector<2x32xf32> -> vector<384x32xf32>
    %27 = tpu.concatenate %20, %23, %26 in 1 : vector<384x32xf32>, vector<384x32xf32>, vector<384x32xf32> -> vector<384x96xf32>
    %c0_12 = arith.constant 0 : index
    %c0_13 = arith.constant 0 : index
    %28 = vector.load %arg4[%c0_12, %c0_13] : memref<96x64xf32, #tpu.memory_space<vmem>>, vector<96x64xf32>
    %cst_14 = arith.constant dense<0.000000e+00> : vector<384x64xf32>
    %29 = tpu.matmul %27, %28, %cst_14 {dimension_numbers = #tpu.dot_dimension_numbers<[1], [0], [0], [1], [0, 0, 1, 1], [], []>} : vector<384x96xf32>, vector<96x64xf32>, vector<384x64xf32> -> vector<384x64xf32>
    %c0_15 = arith.constant 0 : index
    %c0_16 = arith.constant 0 : index
    %30 = vector.load %arg5[%c0_15, %c0_16] : memref<1x64xf32, #tpu.memory_space<vmem>>, vector<1x64xf32>
    %31 = vector.broadcast %30 : vector<1x64xf32> to vector<384x64xf32>
    %32 = arith.addf %29, %31 : vector<384x64xf32>
    %cst_17 = arith.constant 0.000000e+00 : f32
    %33 = vector.broadcast %cst_17 : f32 to vector<384x64xf32>
    %34 = arith.maximumf %32, %33 : vector<384x64xf32>
    %c0_18 = arith.constant 0 : index
    %c0_19 = arith.constant 0 : index
    %35 = vector.load %arg14[%c0_18, %c0_19] : memref<384x64xf32, #tpu.memory_space<vmem>>, vector<384x64xf32>
    tpu.vector_store %arg14[%c0_18, %c0_19], %34 {strides = array<i32>} : memref<384x64xf32, #tpu.memory_space<vmem>>, vector<384x64xf32>,
    %c0_20 = arith.constant 0 : index
    %c0_21 = arith.constant 0 : index
    %36 = tpu.strided_load %arg14[%c0_20, %c0_21] {strides = array<i32: 3, 1>} : memref<384x64xf32, #tpu.memory_space<vmem>>, vector<128x64xf32>
    %c1_22 = arith.constant 1 : index
    %c0_23 = arith.constant 0 : index
    %37 = tpu.strided_load %arg14[%c1_22, %c0_23] {strides = array<i32: 3, 1>} : memref<384x64xf32, #tpu.memory_space<vmem>>, vector<128x64xf32>
    %c2_24 = arith.constant 2 : index
    %c0_25 = arith.constant 0 : index
    %38 = tpu.strided_load %arg14[%c2_24, %c0_25] {strides = array<i32: 3, 1>} : memref<384x64xf32, #tpu.memory_space<vmem>>, vector<128x64xf32>
    %39 = arith.maximumf %36, %37 : vector<128x64xf32>
    %40 = arith.maximumf %39, %38 : vector<128x64xf32>
    %41 = vector.extract_strided_slice %40 {offsets = [1, 0], sizes = [127, 64], strides = [1, 1]} : vector<128x64xf32> to vector<127x64xf32>
    %42 = vector.extract_strided_slice %40 {offsets = [0, 0], sizes = [1, 64], strides = [1, 1]} : vector<128x64xf32> to vector<1x64xf32>
    %43 = tpu.concatenate %41, %42 in 0 : vector<127x64xf32>, vector<1x64xf32> -> vector<128x64xf32>
    %44 = vector.extract_strided_slice %40 {offsets = [2, 0], sizes = [126, 64], strides = [1, 1]} : vector<128x64xf32> to vector<126x64xf32>
    %45 = vector.extract_strided_slice %40 {offsets = [0, 0], sizes = [2, 64], strides = [1, 1]} : vector<128x64xf32> to vector<2x64xf32>
    %46 = tpu.concatenate %44, %45 in 0 : vector<126x64xf32>, vector<2x64xf32> -> vector<128x64xf32>
    %47 = tpu.concatenate %40, %43, %46 in 1 : vector<128x64xf32>, vector<128x64xf32>, vector<128x64xf32> -> vector<128x192xf32>
    %c0_26 = arith.constant 0 : index
    %c0_27 = arith.constant 0 : index
    %48 = vector.load %arg6[%c0_26, %c0_27] : memref<192x128xf32, #tpu.memory_space<vmem>>, vector<192x128xf32>
    %cst_28 = arith.constant dense<0.000000e+00> : vector<128x128xf32>
    %49 = tpu.matmul %47, %48, %cst_28 {dimension_numbers = #tpu.dot_dimension_numbers<[1], [0], [0], [1], [0, 0, 1, 1], [], []>} : vector<128x192xf32>, vector<192x128xf32>, vector<128x128xf32> -> vector<128x128xf32>
    %c0_29 = arith.constant 0 : index
    %c0_30 = arith.constant 0 : index
    %50 = vector.load %arg7[%c0_29, %c0_30] : memref<1x128xf32, #tpu.memory_space<vmem>>, vector<1x128xf32>
    %51 = vector.broadcast %50 : vector<1x128xf32> to vector<128x128xf32>
    %52 = arith.addf %49, %51 : vector<128x128xf32>
    %cst_31 = arith.constant 0.000000e+00 : f32
    %53 = vector.broadcast %cst_31 : f32 to vector<128x128xf32>
    %54 = arith.maximumf %52, %53 : vector<128x128xf32>
    %c0_32 = arith.constant 0 : index
    %c0_33 = arith.constant 0 : index
    %55 = vector.load %arg15[%c0_32, %c0_33] : memref<128x128xf32, #tpu.memory_space<vmem>>, vector<128x128xf32>
    tpu.vector_store %arg15[%c0_32, %c0_33], %54 {strides = array<i32>} : memref<128x128xf32, #tpu.memory_space<vmem>>, vector<128x128xf32>,
    %c0_34 = arith.constant 0 : index
    %c0_35 = arith.constant 0 : index
    %56 = tpu.strided_load %arg15[%c0_34, %c0_35] {strides = array<i32: 8, 1>} : memref<128x128xf32, #tpu.memory_space<vmem>>, vector<16x128xf32>
    %c1_36 = arith.constant 1 : index
    %c0_37 = arith.constant 0 : index
    %57 = tpu.strided_load %arg15[%c1_36, %c0_37] {strides = array<i32: 8, 1>} : memref<128x128xf32, #tpu.memory_space<vmem>>, vector<16x128xf32>
    %58 = arith.maximumf %56, %57 : vector<16x128xf32>
    %c2_38 = arith.constant 2 : index
    %c0_39 = arith.constant 0 : index
    %59 = tpu.strided_load %arg15[%c2_38, %c0_39] {strides = array<i32: 8, 1>} : memref<128x128xf32, #tpu.memory_space<vmem>>, vector<16x128xf32>
    %60 = arith.maximumf %58, %59 : vector<16x128xf32>
    %c3 = arith.constant 3 : index
    %c0_40 = arith.constant 0 : index
    %61 = tpu.strided_load %arg15[%c3, %c0_40] {strides = array<i32: 8, 1>} : memref<128x128xf32, #tpu.memory_space<vmem>>, vector<16x128xf32>
    %62 = arith.maximumf %60, %61 : vector<16x128xf32>
    %c0_41 = arith.constant 0 : index
    %c0_42 = arith.constant 0 : index
    %63 = vector.load %arg8[%c0_41, %c0_42] : memref<128x64xf32, #tpu.memory_space<vmem>>, vector<128x64xf32>
    %cst_43 = arith.constant dense<0.000000e+00> : vector<16x64xf32>
    %64 = tpu.matmul %62, %63, %cst_43 {dimension_numbers = #tpu.dot_dimension_numbers<[1], [0], [0], [1], [0, 0, 1, 1], [], []>} : vector<16x128xf32>, vector<128x64xf32>, vector<16x64xf32> -> vector<16x64xf32>
    %c0_44 = arith.constant 0 : index
    %c0_45 = arith.constant 0 : index
    %65 = vector.load %arg9[%c0_44, %c0_45] : memref<1x64xf32, #tpu.memory_space<vmem>>, vector<1x64xf32>
    %66 = vector.broadcast %65 : vector<1x64xf32> to vector<16x64xf32>
    %67 = arith.addf %64, %66 : vector<16x64xf32>
    %cst_46 = arith.constant 0.000000e+00 : f32
    %68 = vector.broadcast %cst_46 : f32 to vector<16x64xf32>
    %69 = arith.maximumf %67, %68 : vector<16x64xf32>
    %c0_47 = arith.constant 0 : index
    %c0_48 = arith.constant 0 : index
    %70 = vector.load %arg10[%c0_47, %c0_48] : memref<64x128xf32, #tpu.memory_space<vmem>>, vector<64x128xf32>
    %cst_49 = arith.constant dense<0.000000e+00> : vector<16x128xf32>
    %71 = tpu.matmul %69, %70, %cst_49 {dimension_numbers = #tpu.dot_dimension_numbers<[1], [0], [0], [1], [0, 0, 1, 1], [], []>} : vector<16x64xf32>, vector<64x128xf32>, vector<16x128xf32> -> vector<16x128xf32>
    %c0_50 = arith.constant 0 : index
    %c0_51 = arith.constant 0 : index
    %72 = vector.load %arg11[%c0_50, %c0_51] : memref<1x128xf32, #tpu.memory_space<vmem>>, vector<1x128xf32>
    %73 = vector.broadcast %72 : vector<1x128xf32> to vector<16x128xf32>
    %74 = arith.addf %71, %73 : vector<16x128xf32>
    %c0_52 = arith.constant 0 : index
    %c0_53 = arith.constant 0 : index
    %75 = vector.load %arg12[%c0_52, %c0_53] : memref<16x128xf32, #tpu.memory_space<vmem>>, vector<16x128xf32>
    tpu.vector_store %arg12[%c0_52, %c0_53], %74 {strides = array<i32>} : memref<16x128xf32, #tpu.memory_space<vmem>>, vector<16x128xf32>,
    return
  }
  func.func @transform_0(%arg0: i32) -> (i32, i32) {
    %c0_i32 = arith.constant 0 : i32
    %c0_i32_0 = arith.constant 0 : i32
    return %arg0, %c0_i32 : i32, i32
  }
  func.func @transform_1(%arg0: i32) -> (i32, i32) {
    %c0_i32 = arith.constant 0 : i32
    %c0_i32_0 = arith.constant 0 : i32
    %c0_i32_1 = arith.constant 0 : i32
    return %c0_i32, %c0_i32_0 : i32, i32
  }
  func.func @transform_2(%arg0: i32) -> (i32, i32) {
    %c0_i32 = arith.constant 0 : i32
    %c0_i32_0 = arith.constant 0 : i32
    %c0_i32_1 = arith.constant 0 : i32
    return %c0_i32, %c0_i32_0 : i32, i32
  }
  func.func @transform_3(%arg0: i32) -> (i32, i32) {
    %c0_i32 = arith.constant 0 : i32
    %c0_i32_0 = arith.constant 0 : i32
    %c0_i32_1 = arith.constant 0 : i32
    return %c0_i32, %c0_i32_0 : i32, i32
  }
  func.func @transform_4(%arg0: i32) -> (i32, i32) {
    %c0_i32 = arith.constant 0 : i32
    %c0_i32_0 = arith.constant 0 : i32
    %c0_i32_1 = arith.constant 0 : i32
    return %c0_i32, %c0_i32_0 : i32, i32
  }
  func.func @transform_5(%arg0: i32) -> (i32, i32) {
    %c0_i32 = arith.constant 0 : i32
    %c0_i32_0 = arith.constant 0 : i32
    %c0_i32_1 = arith.constant 0 : i32
    return %c0_i32, %c0_i32_0 : i32, i32
  }
  func.func @transform_6(%arg0: i32) -> (i32, i32) {
    %c0_i32 = arith.constant 0 : i32
    %c0_i32_0 = arith.constant 0 : i32
    %c0_i32_1 = arith.constant 0 : i32
    return %c0_i32, %c0_i32_0 : i32, i32
  }
  func.func @transform_7(%arg0: i32) -> (i32, i32) {
    %c0_i32 = arith.constant 0 : i32
    %c0_i32_0 = arith.constant 0 : i32
    %c0_i32_1 = arith.constant 0 : i32
    return %c0_i32, %c0_i32_0 : i32, i32
  }
  func.func @transform_8(%arg0: i32) -> (i32, i32) {
    %c0_i32 = arith.constant 0 : i32
    %c0_i32_0 = arith.constant 0 : i32
    %c0_i32_1 = arith.constant 0 : i32
    return %c0_i32, %c0_i32_0 : i32, i32
  }
  func.func @transform_9(%arg0: i32) -> (i32, i32) {
    %c0_i32 = arith.constant 0 : i32
    %c0_i32_0 = arith.constant 0 : i32
    %c0_i32_1 = arith.constant 0 : i32
    return %c0_i32, %c0_i32_0 : i32, i32
  }
  func.func @transform_10(%arg0: i32) -> (i32, i32) {
    %c0_i32 = arith.constant 0 : i32
    %c0_i32_0 = arith.constant 0 : i32
    %c0_i32_1 = arith.constant 0 : i32
    return %c0_i32, %c0_i32_0 : i32, i32
  }
  func.func @transform_11(%arg0: i32) -> (i32, i32) {
    %c0_i32 = arith.constant 0 : i32
    %c0_i32_0 = arith.constant 0 : i32
    return %arg0, %c0_i32 : i32, i32
  }
}

</mosaic_0001>

<llo_original>
// kernel: tpu_custom_call.1
$region0: #{tpu_custom_call.1}
  #allocation0 [shape = 'u32[]', space=smem, size = 0x4, offset = 0x4, fixed_abs, tag = 'smem constant byte address 0x4 - core index']
  #allocation1 [shape = 'u32[144,128]{1,0:T(1,128)}', space=vmem, size = 0x12000, scoped, tag = 'internal scratch']
  #allocation2 [shape = 'f32[1152,32]{1,0:T(8,128)}', space=vmem, size = 0x90000, scoped, tag = 'scratch operand']
  #allocation3 [shape = 'f32[384,64]{1,0:T(8,128)}', space=vmem, size = 0x30000, scoped, tag = 'scratch operand']
  #allocation4 [shape = 'f32[128,128]{1,0:T(8,128)}', space=vmem, size = 0x10000, scoped, tag = 'scratch operand']
  %s0 = inlined_call_operand.vmem [shape: f32[1152,64], index: 0, kind: input, shape index: {}]
  %s1 = inlined_call_operand.vmem [shape: f32[192,32], index: 1, kind: input, shape index: {}]
  %s2 = inlined_call_operand.vmem [shape: f32[1,32], index: 2, kind: input, shape index: {}]
  %s3 = inlined_call_operand.vmem [shape: f32[96,64], index: 3, kind: input, shape index: {}]
  %s4 = inlined_call_operand.vmem [shape: f32[1,64], index: 4, kind: input, shape index: {}]
  %s5 = inlined_call_operand.vmem [shape: f32[192,128], index: 5, kind: input, shape index: {}]
  %s6 = inlined_call_operand.vmem [shape: f32[1,128], index: 6, kind: input, shape index: {}]
  %s7 = inlined_call_operand.vmem [shape: f32[128,64], index: 7, kind: input, shape index: {}]
  %s8 = inlined_call_operand.vmem [shape: f32[1,64], index: 8, kind: input, shape index: {}]
  %s9 = inlined_call_operand.vmem [shape: f32[64,128], index: 9, kind: input, shape index: {}]
  %s10 = inlined_call_operand.vmem [shape: f32[1,128], index: 10, kind: input, shape index: {}]
  %s11 = inlined_call_operand.hbm [shape: f32[16,128], index: 11, kind: output, shape index: {}]
  %s12 = sld [smem:[#allocation0]]
  $region54: #{tpu_custom_call.1} parent=0
    _
  %s14 = ssub.s32 1, %s12
  %s15 = scalar_select 0, %s14, %s12
  $region1: #{tpu_custom_call.1} parent=0
    #allocation5 [shape = 'u8[8192]{0}', space=vmem, size = 0x2000, scoped, tag = 'output window, operand 0, single buffered']
    #allocation6 [shape = 's32[1]{0}', space=sflag, size = 0x4, scoped, tag = 'scoped memory for tpu_custom_call.1']
    %16 = vsyncpa [#allocation6], 0
    // Predicated region
    $region2: #{tpu_custom_call.1} parent=1 // pred_check
      _
    $region3: #{tpu_custom_call.1} parent=1 // pred_check_branch
      %18 = sbr.rel (0) target = $region5
    $region4: #{tpu_custom_call.1} parent=1 // pred_region
      _
    $region5: #{tpu_custom_call.1} parent=1 // pred_fallthru
      _
    // Predicated region
    $region6: #{tpu_custom_call.1} parent=1 // pred_check
      _
    $region7: #{tpu_custom_call.1} parent=1 // pred_check_branch
      %20 = sbr.rel (0) target = $region9
    $region8: #{tpu_custom_call.1} parent=1 // pred_region
      _
    $region9: #{tpu_custom_call.1} parent=1 // pred_fallthru
      _
    // Predicated region
    $region10: #{tpu_custom_call.1} parent=1 // pred_check
      _
    $region11: #{tpu_custom_call.1} parent=1 // pred_check_branch
      %22 = sbr.rel (0) target = $region13
    $region12: #{tpu_custom_call.1} parent=1 // pred_region
      _
    $region13: #{tpu_custom_call.1} parent=1 // pred_fallthru
      _
    // Predicated region
    $region14: #{tpu_custom_call.1} parent=1 // pred_check
      _
    $region15: #{tpu_custom_call.1} parent=1 // pred_check_branch
      %24 = sbr.rel (0) target = $region17
    $region16: #{tpu_custom_call.1} parent=1 // pred_region
      _
    $region17: #{tpu_custom_call.1} parent=1 // pred_fallthru
      _
    // Predicated region
    $region18: #{tpu_custom_call.1} parent=1 // pred_check
      _
    $region19: #{tpu_custom_call.1} parent=1 // pred_check_branch
      %26 = sbr.rel (0) target = $region21
    $region20: #{tpu_custom_call.1} parent=1 // pred_region
      _
    $region21: #{tpu_custom_call.1} parent=1 // pred_fallthru
      _
    // Predicated region
    $region22: #{tpu_custom_call.1} parent=1 // pred_check
      _
    $region23: #{tpu_custom_call.1} parent=1 // pred_check_branch
      %28 = sbr.rel (0) target = $region25
    $region24: #{tpu_custom_call.1} parent=1 // pred_region
      _
    $region25: #{tpu_custom_call.1} parent=1 // pred_fallthru
      _
    // Predicated region
    $region26: #{tpu_custom_call.1} parent=1 // pred_check
      _
    $region27: #{tpu_custom_call.1} parent=1 // pred_check_branch
      %30 = sbr.rel (0) target = $region29
    $region28: #{tpu_custom_call.1} parent=1 // pred_region
      _
    $region29: #{tpu_custom_call.1} parent=1 // pred_fallthru
      _
    // Predicated region
    $region30: #{tpu_custom_call.1} parent=1 // pred_check
      _
    $region31: #{tpu_custom_call.1} parent=1 // pred_check_branch
      %32 = sbr.rel (0) target = $region33
    $region32: #{tpu_custom_call.1} parent=1 // pred_region
      _
    $region33: #{tpu_custom_call.1} parent=1 // pred_fallthru
      _
    // Predicated region
    $region34: #{tpu_custom_call.1} parent=1 // pred_check
      _
    $region35: #{tpu_custom_call.1} parent=1 // pred_check_branch
      %34 = sbr.rel (0) target = $region37
    $region36: #{tpu_custom_call.1} parent=1 // pred_region
      _
    $region37: #{tpu_custom_call.1} parent=1 // pred_fallthru
      _
    // Predicated region
    $region38: #{tpu_custom_call.1} parent=1 // pred_check
      _
    $region39: #{tpu_custom_call.1} parent=1 // pred_check_branch
      %36 = sbr.rel (0) target = $region41
    $region40: #{tpu_custom_call.1} parent=1 // pred_region
      _
    $region41: #{tpu_custom_call.1} parent=1 // pred_fallthru
      _
    // Predicated region
    $region42: #{tpu_custom_call.1} parent=1 // pred_check
      _
    $region43: #{tpu_custom_call.1} parent=1 // pred_check_branch
      %38 = sbr.rel (0) target = $region45
    $region44: #{tpu_custom_call.1} parent=1 // pred_region
      _
    $region45: #{tpu_custom_call.1} parent=1 // pred_fallthru
      _
    %v39 = vld [vmem:[%s0] sm:$0xff]
    %v40 = vld [vmem:[%s0 + $0x8] sm:$0xff]
    %v41 = vld [vmem:[%s0 + $0x10] sm:$0xff]
    %v42 = vld [vmem:[%s0 + $0x18] sm:$0xff]
    %v43 = vld [vmem:[%s0 + $0x20] sm:$0xff]
    %v44 = vld [vmem:[%s0 + $0x28] sm:$0xff]
    %v45 = vld [vmem:[%s0 + $0x30] sm:$0xff]
    %v46 = vld [vmem:[%s0 + $0x38] sm:$0xff]
    %v47 = vld [vmem:[%s0 + $0x40] sm:$0xff]
    %v48 = vld [vmem:[%s0 + $0x48] sm:$0xff]
    %v49 = vld [vmem:[%s0 + $0x50] sm:$0xff]
    %v50 = vld [vmem:[%s0 + $0x58] sm:$0xff]
    %v51 = vld [vmem:[%s0 + $0x60] sm:$0xff]
    %v52 = vld [vmem:[%s0 + $0x68] sm:$0xff]
    %v53 = vld [vmem:[%s0 + $0x70] sm:$0xff]
    %v54 = vld [vmem:[%s0 + $0x78] sm:$0xff]
    %v55 = vld [vmem:[%s0 + $0x80] sm:$0xff]
    %v56 = vld [vmem:[%s0 + $0x88] sm:$0xff]
    %v57 = vld [vmem:[%s0 + $0x90] sm:$0xff]
    %v58 = vld [vmem:[%s0 + $0x98] sm:$0xff]
    %v59 = vld [vmem:[%s0 + $0xa0] sm:$0xff]
    %v60 = vld [vmem:[%s0 + $0xa8] sm:$0xff]
    %v61 = vld [vmem:[%s0 + $0xb0] sm:$0xff]
    %v62 = vld [vmem:[%s0 + $0xb8] sm:$0xff]
    %v63 = vld [vmem:[%s0 + $0xc0] sm:$0xff]
    %v64 = vld [vmem:[%s0 + $0xc8] sm:$0xff]
    %v65 = vld [vmem:[%s0 + $0xd0] sm:$0xff]
    %v66 = vld [vmem:[%s0 + $0xd8] sm:$0xff]
    %v67 = vld [vmem:[%s0 + $0xe0] sm:$0xff]
    %v68 = vld [vmem:[%s0 + $0xe8] sm:$0xff]
    %v69 = vld [vmem:[%s0 + $0xf0] sm:$0xff]
    %v70 = vld [vmem:[%s0 + $0xf8] sm:$0xff]
    %v71 = vld [vmem:[%s0 + $0x100] sm:$0xff]
    %v72 = vld [vmem:[%s0 + $0x108] sm:$0xff]
    %v73 = vld [vmem:[%s0 + $0x110] sm:$0xff]
    %v74 = vld [vmem:[%s0 + $0x118] sm:$0xff]
    %v75 = vld [vmem:[%s0 + $0x120] sm:$0xff]
    %v76 = vld [vmem:[%s0 + $0x128] sm:$0xff]
    %v77 = vld [vmem:[%s0 + $0x130] sm:$0xff]
    %v78 = vld [vmem:[%s0 + $0x138] sm:$0xff]
    %v79 = vld [vmem:[%s0 + $0x140] sm:$0xff]
    %v80 = vld [vmem:[%s0 + $0x148] sm:$0xff]
    %v81 = vld [vmem:[%s0 + $0x150] sm:$0xff]
    %v82 = vld [vmem:[%s0 + $0x158] sm:$0xff]
    %v83 = vld [vmem:[%s0 + $0x160] sm:$0xff]
    %v84 = vld [vmem:[%s0 + $0x168] sm:$0xff]
    %v85 = vld [vmem:[%s0 + $0x170] sm:$0xff]
    %v86 = vld [vmem:[%s0 + $0x178] sm:$0xff]
    %v87 = vld [vmem:[%s0 + $0x180] sm:$0xff]
    %v88 = vld [vmem:[%s0 + $0x188] sm:$0xff]
    %v89 = vld [vmem:[%s0 + $0x190] sm:$0xff]
    %v90 = vld [vmem:[%s0 + $0x198] sm:$0xff]
    %v91 = vld [vmem:[%s0 + $0x1a0] sm:$0xff]
    %v92 = vld [vmem:[%s0 + $0x1a8] sm:$0xff]
    %v93 = vld [vmem:[%s0 + $0x1b0] sm:$0xff]
    %v94 = vld [vmem:[%s0 + $0x1b8] sm:$0xff]
    %v95 = vld [vmem:[%s0 + $0x1c0] sm:$0xff]
    %v96 = vld [vmem:[%s0 + $0x1c8] sm:$0xff]
    %v97 = vld [vmem:[%s0 + $0x1d0] sm:$0xff]
    %v98 = vld [vmem:[%s0 + $0x1d8] sm:$0xff]
    %v99 = vld [vmem:[%s0 + $0x1e0] sm:$0xff]
    %v100 = vld [vmem:[%s0 + $0x1e8] sm:$0xff]
    %v101 = vld [vmem:[%s0 + $0x1f0] sm:$0xff]
    %v102 = vld [vmem:[%s0 + $0x1f8] sm:$0xff]
    %v103 = vld [vmem:[%s0 + $0x200] sm:$0xff]
    %v104 = vld [vmem:[%s0 + $0x208] sm:$0xff]
    %v105 = vld [vmem:[%s0 + $0x210] sm:$0xff]
    %v106 = vld [vmem:[%s0 + $0x218] sm:$0xff]
    %v107 = vld [vmem:[%s0 + $0x220] sm:$0xff]
    %v108 = vld [vmem:[%s0 + $0x228] sm:$0xff]
    %v109 = vld [vmem:[%s0 + $0x230] sm:$0xff]
    %v110 = vld [vmem:[%s0 + $0x238] sm:$0xff]
    %v111 = vld [vmem:[%s0 + $0x240] sm:$0xff]
    %v112 = vld [vmem:[%s0 + $0x248] sm:$0xff]
    %v113 = vld [vmem:[%s0 + $0x250] sm:$0xff]
    %v114 = vld [vmem:[%s0 + $0x258] sm:$0xff]
    %v115 = vld [vmem:[%s0 + $0x260] sm:$0xff]
    %v116 = vld [vmem:[%s0 + $0x268] sm:$0xff]
    %v117 = vld [vmem:[%s0 + $0x270] sm:$0xff]
    %v118 = vld [vmem:[%s0 + $0x278] sm:$0xff]
    %v119 = vld [vmem:[%s0 + $0x280] sm:$0xff]
    %v120 = vld [vmem:[%s0 + $0x288] sm:$0xff]
    %v121 = vld [vmem:[%s0 + $0x290] sm:$0xff]
    %v122 = vld [vmem:[%s0 + $0x298] sm:$0xff]
    %v123 = vld [vmem:[%s0 + $0x2a0] sm:$0xff]
    %v124 = vld [vmem:[%s0 + $0x2a8] sm:$0xff]
    %v125 = vld [vmem:[%s0 + $0x2b0] sm:$0xff]
    %v126 = vld [vmem:[%s0 + $0x2b8] sm:$0xff]
    %v127 = vld [vmem:[%s0 + $0x2c0] sm:$0xff]
    %v128 = vld [vmem:[%s0 + $0x2c8] sm:$0xff]
    %v129 = vld [vmem:[%s0 + $0x2d0] sm:$0xff]
    %v130 = vld [vmem:[%s0 + $0x2d8] sm:$0xff]
    %v131 = vld [vmem:[%s0 + $0x2e0] sm:$0xff]
    %v132 = vld [vmem:[%s0 + $0x2e8] sm:$0xff]
    %v133 = vld [vmem:[%s0 + $0x2f0] sm:$0xff]
    %v134 = vld [vmem:[%s0 + $0x2f8] sm:$0xff]
    %v135 = vld [vmem:[%s0 + $0x300] sm:$0xff]
    %v136 = vld [vmem:[%s0 + $0x308] sm:$0xff]
    %v137 = vld [vmem:[%s0 + $0x310] sm:$0xff]
    %v138 = vld [vmem:[%s0 + $0x318] sm:$0xff]
    %v139 = vld [vmem:[%s0 + $0x320] sm:$0xff]
    %v140 = vld [vmem:[%s0 + $0x328] sm:$0xff]
    %v141 = vld [vmem:[%s0 + $0x330] sm:$0xff]
    %v142 = vld [vmem:[%s0 + $0x338] sm:$0xff]
    %v143 = vld [vmem:[%s0 + $0x340] sm:$0xff]
    %v144 = vld [vmem:[%s0 + $0x348] sm:$0xff]
    %v145 = vld [vmem:[%s0 + $0x350] sm:$0xff]
    %v146 = vld [vmem:[%s0 + $0x358] sm:$0xff]
    %v147 = vld [vmem:[%s0 + $0x360] sm:$0xff]
    %v148 = vld [vmem:[%s0 + $0x368] sm:$0xff]
    %v149 = vld [vmem:[%s0 + $0x370] sm:$0xff]
    %v150 = vld [vmem:[%s0 + $0x378] sm:$0xff]
    %v151 = vld [vmem:[%s0 + $0x380] sm:$0xff]
    %v152 = vld [vmem:[%s0 + $0x388] sm:$0xff]
    %v153 = vld [vmem:[%s0 + $0x390] sm:$0xff]
    %v154 = vld [vmem:[%s0 + $0x398] sm:$0xff]
    %v155 = vld [vmem:[%s0 + $0x3a0] sm:$0xff]
    %v156 = vld [vmem:[%s0 + $0x3a8] sm:$0xff]
    %v157 = vld [vmem:[%s0 + $0x3b0] sm:$0xff]
    %v158 = vld [vmem:[%s0 + $0x3b8] sm:$0xff]
    %v159 = vld [vmem:[%s0 + $0x3c0] sm:$0xff]
    %v160 = vld [vmem:[%s0 + $0x3c8] sm:$0xff]
    %v161 = vld [vmem:[%s0 + $0x3d0] sm:$0xff]
    %v162 = vld [vmem:[%s0 + $0x3d8] sm:$0xff]
    %v163 = vld [vmem:[%s0 + $0x3e0] sm:$0xff]
    %v164 = vld [vmem:[%s0 + $0x3e8] sm:$0xff]
    %v165 = vld [vmem:[%s0 + $0x3f0] sm:$0xff]
    %v166 = vld [vmem:[%s0 + $0x3f8] sm:$0xff]
    %v167 = vld [vmem:[%s0 + $0x400] sm:$0xff]
    %v168 = vld [vmem:[%s0 + $0x408] sm:$0xff]
    %v169 = vld [vmem:[%s0 + $0x410] sm:$0xff]
    %v170 = vld [vmem:[%s0 + $0x418] sm:$0xff]
    %v171 = vld [vmem:[%s0 + $0x420] sm:$0xff]
    %v172 = vld [vmem:[%s0 + $0x428] sm:$0xff]
    %v173 = vld [vmem:[%s0 + $0x430] sm:$0xff]
    %v174 = vld [vmem:[%s0 + $0x438] sm:$0xff]
    %v175 = vld [vmem:[%s0 + $0x440] sm:$0xff]
    %v176 = vld [vmem:[%s0 + $0x448] sm:$0xff]
    %v177 = vld [vmem:[%s0 + $0x450] sm:$0xff]
    %v178 = vld [vmem:[%s0 + $0x458] sm:$0xff]
    %v179 = vld [vmem:[%s0 + $0x460] sm:$0xff]
    %v180 = vld [vmem:[%s0 + $0x468] sm:$0xff]
    %v181 = vld [vmem:[%s0 + $0x470] sm:$0xff]
    %v182 = vld [vmem:[%s0 + $0x478] sm:$0xff]
    %vm327 = vcmask 1046528
    %v328 = vrot.slane %v39, 1
    %v329 = vrot.slane %v40, 1
    %v330 = vsel %vm327, %v328, %v329
    %v331 = vrot.slane %v41, 1
    %v332 = vsel %vm327, %v329, %v331
    %v333 = vrot.slane %v42, 1
    %v334 = vsel %vm327, %v331, %v333
    %v335 = vrot.slane %v43, 1
    %v336 = vsel %vm327, %v333, %v335
    %v337 = vrot.slane %v44, 1
    %v338 = vsel %vm327, %v335, %v337
    %v339 = vrot.slane %v45, 1
    %v340 = vsel %vm327, %v337, %v339
    %v341 = vrot.slane %v46, 1
    %v342 = vsel %vm327, %v339, %v341
    %v343 = vrot.slane %v47, 1
    %v344 = vsel %vm327, %v341, %v343
    %v345 = vrot.slane %v48, 1
    %v346 = vsel %vm327, %v343, %v345
    %v347 = vrot.slane %v49, 1
    %v348 = vsel %vm327, %v345, %v347
    %v349 = vrot.slane %v50, 1
    %v350 = vsel %vm327, %v347, %v349
    %v351 = vrot.slane %v51, 1
    %v352 = vsel %vm327, %v349, %v351
    %v353 = vrot.slane %v52, 1
    %v354 = vsel %vm327, %v351, %v353
    %v355 = vrot.slane %v53, 1
    %v356 = vsel %vm327, %v353, %v355
    %v357 = vrot.slane %v54, 1
    %v358 = vsel %vm327, %v355, %v357
    %v359 = vrot.slane %v55, 1
    %v360 = vsel %vm327, %v357, %v359
    %v361 = vrot.slane %v56, 1
    %v362 = vsel %vm327, %v359, %v361
    %v363 = vrot.slane %v57, 1
    %v364 = vsel %vm327, %v361, %v363
    %v365 = vrot.slane %v58, 1
    %v366 = vsel %vm327, %v363, %v365
    %v367 = vrot.slane %v59, 1
    %v368 = vsel %vm327, %v365, %v367
    %v369 = vrot.slane %v60, 1
    %v370 = vsel %vm327, %v367, %v369
    %v371 = vrot.slane %v61, 1
    %v372 = vsel %vm327, %v369, %v371
    %v373 = vrot.slane %v62, 1
    %v374 = vsel %vm327, %v371, %v373
    %v375 = vrot.slane %v63, 1
    %v376 = vsel %vm327, %v373, %v375
    %v377 = vrot.slane %v64, 1
    %v378 = vsel %vm327, %v375, %v377
    %v379 = vrot.slane %v65, 1
    %v380 = vsel %vm327, %v377, %v379
    %v381 = vrot.slane %v66, 1
    %v382 = vsel %vm327, %v379, %v381
    %v383 = vrot.slane %v67, 1
    %v384 = vsel %vm327, %v381, %v383
    %v385 = vrot.slane %v68, 1
    %v386 = vsel %vm327, %v383, %v385
    %v387 = vrot.slane %v69, 1
    %v388 = vsel %vm327, %v385, %v387
    %v389 = vrot.slane %v70, 1
    %v390 = vsel %vm327, %v387, %v389
    %v391 = vrot.slane %v71, 1
    %v392 = vsel %vm327, %v389, %v391
    %v393 = vrot.slane %v72, 1
    %v394 = vsel %vm327, %v391, %v393
    %v395 = vrot.slane %v73, 1
    %v396 = vsel %vm327, %v393, %v395
    %v397 = vrot.slane %v74, 1
    %v398 = vsel %vm327, %v395, %v397
    %v399 = vrot.slane %v75, 1
    %v400 = vsel %vm327, %v397, %v399
    %v401 = vrot.slane %v76, 1
    %v402 = vsel %vm327, %v399, %v401
    %v403 = vrot.slane %v77, 1
    %v404 = vsel %vm327, %v401, %v403
    %v405 = vrot.slane %v78, 1
    %v406 = vsel %vm327, %v403, %v405
    %v407 = vrot.slane %v79, 1
    %v408 = vsel %vm327, %v405, %v407
    %v409 = vrot.slane %v80, 1
    %v410 = vsel %vm327, %v407, %v409
    %v411 = vrot.slane %v81, 1
    %v412 = vsel %vm327, %v409, %v411
    %v413 = vrot.slane %v82, 1
    %v414 = vsel %vm327, %v411, %v413
    %v415 = vrot.slane %v83, 1
    %v416 = vsel %vm327, %v413, %v415
    %v417 = vrot.slane %v84, 1
    %v418 = vsel %vm327, %v415, %v417
    %v419 = vrot.slane %v85, 1
    %v420 = vsel %vm327, %v417, %v419
    %v421 = vrot.slane %v86, 1
    %v422 = vsel %vm327, %v419, %v421
    %v423 = vrot.slane %v87, 1
    %v424 = vsel %vm327, %v421, %v423
    %v425 = vrot.slane %v88, 1
    %v426 = vsel %vm327, %v423, %v425
    %v427 = vrot.slane %v89, 1
    %v428 = vsel %vm327, %v425, %v427
    %v429 = vrot.slane %v90, 1
    %v430 = vsel %vm327, %v427, %v429
    %v431 = vrot.slane %v91, 1
    %v432 = vsel %vm327, %v429, %v431
    %v433 = vrot.slane %v92, 1
    %v434 = vsel %vm327, %v431, %v433
    %v435 = vrot.slane %v93, 1
    %v436 = vsel %vm327, %v433, %v435
    %v437 = vrot.slane %v94, 1
    %v438 = vsel %vm327, %v435, %v437
    %v439 = vrot.slane %v95, 1
    %v440 = vsel %vm327, %v437, %v439
    %v441 = vrot.slane %v96, 1
    %v442 = vsel %vm327, %v439, %v441
    %v443 = vrot.slane %v97, 1
    %v444 = vsel %vm327, %v441, %v443
    %v445 = vrot.slane %v98, 1
    %v446 = vsel %vm327, %v443, %v445
    %v447 = vrot.slane %v99, 1
    %v448 = vsel %vm327, %v445, %v447
    %v449 = vrot.slane %v100, 1
    %v450 = vsel %vm327, %v447, %v449
    %v451 = vrot.slane %v101, 1
    %v452 = vsel %vm327, %v449, %v451
    %v453 = vrot.slane %v102, 1
    %v454 = vsel %vm327, %v451, %v453
    %v455 = vrot.slane %v103, 1
    %v456 = vsel %vm327, %v453, %v455
    %v457 = vrot.slane %v104, 1
    %v458 = vsel %vm327, %v455, %v457
    %v459 = vrot.slane %v105, 1
    %v460 = vsel %vm327, %v457, %v459
    %v461 = vrot.slane %v106, 1
    %v462 = vsel %vm327, %v459, %v461
    %v463 = vrot.slane %v107, 1
    %v464 = vsel %vm327, %v461, %v463
    %v465 = vrot.slane %v108, 1
    %v466 = vsel %vm327, %v463, %v465
    %v467 = vrot.slane %v109, 1
    %v468 = vsel %vm327, %v465, %v467
    %v469 = vrot.slane %v110, 1
    %v470 = vsel %vm327, %v467, %v469
    %v471 = vrot.slane %v111, 1
    %v472 = vsel %vm327, %v469, %v471
    %v473 = vrot.slane %v112, 1
    %v474 = vsel %vm327, %v471, %v473
    %v475 = vrot.slane %v113, 1
    %v476 = vsel %vm327, %v473, %v475
    %v477 = vrot.slane %v114, 1
    %v478 = vsel %vm327, %v475, %v477
    %v479 = vrot.slane %v115, 1
    %v480 = vsel %vm327, %v477, %v479
    %v481 = vrot.slane %v116, 1
    %v482 = vsel %vm327, %v479, %v481
    %v483 = vrot.slane %v117, 1
    %v484 = vsel %vm327, %v481, %v483
    %v485 = vrot.slane %v118, 1
    %v486 = vsel %vm327, %v483, %v485
    %v487 = vrot.slane %v119, 1
    %v488 = vsel %vm327, %v485, %v487
    %v489 = vrot.slane %v120, 1
    %v490 = vsel %vm327, %v487, %v489
    %v491 = vrot.slane %v121, 1
    %v492 = vsel %vm327, %v489, %v491
    %v493 = vrot.slane %v122, 1
    %v494 = vsel %vm327, %v491, %v493
    %v495 = vrot.slane %v123, 1
    %v496 = vsel %vm327, %v493, %v495
    %v497 = vrot.slane %v124, 1
    %v498 = vsel %vm327, %v495, %v497
    %v499 = vrot.slane %v125, 1
    %v500 = vsel %vm327, %v497, %v499
    %v501 = vrot.slane %v126, 1
    %v502 = vsel %vm327, %v499, %v501
    %v503 = vrot.slane %v127, 1
    %v504 = vsel %vm327, %v501, %v503
    %v505 = vrot.slane %v128, 1
    %v506 = vsel %vm327, %v503, %v505
    %v507 = vrot.slane %v129, 1
    %v508 = vsel %vm327, %v505, %v507
    %v509 = vrot.slane %v130, 1
    %v510 = vsel %vm327, %v507, %v509
    %v511 = vrot.slane %v131, 1
    %v512 = vsel %vm327, %v509, %v511
    %v513 = vrot.slane %v132, 1
    %v514 = vsel %vm327, %v511, %v513
    %v515 = vrot.slane %v133, 1
    %v516 = vsel %vm327, %v513, %v515
    %v517 = vrot.slane %v134, 1
    %v518 = vsel %vm327, %v515, %v517
    %v519 = vrot.slane %v135, 1
    %v520 = vsel %vm327, %v517, %v519
    %v521 = vrot.slane %v136, 1
    %v522 = vsel %vm327, %v519, %v521
    %v523 = vrot.slane %v137, 1
    %v524 = vsel %vm327, %v521, %v523
    %v525 = vrot.slane %v138, 1
    %v526 = vsel %vm327, %v523, %v525
    %v527 = vrot.slane %v139, 1
    %v528 = vsel %vm327, %v525, %v527
    %v529 = vrot.slane %v140, 1
    %v530 = vsel %vm327, %v527, %v529
    %v531 = vrot.slane %v141, 1
    %v532 = vsel %vm327, %v529, %v531
    %v533 = vrot.slane %v142, 1
    %v534 = vsel %vm327, %v531, %v533
    %v535 = vrot.slane %v143, 1
    %v536 = vsel %vm327, %v533, %v535
    %v537 = vrot.slane %v144, 1
    %v538 = vsel %vm327, %v535, %v537
    %v539 = vrot.slane %v145, 1
    %v540 = vsel %vm327, %v537, %v539
    %v541 = vrot.slane %v146, 1
    %v542 = vsel %vm327, %v539, %v541
    %v543 = vrot.slane %v147, 1
    %v544 = vsel %vm327, %v541, %v543
    %v545 = vrot.slane %v148, 1
    %v546 = vsel %vm327, %v543, %v545
    %v547 = vrot.slane %v149, 1
    %v548 = vsel %vm327, %v545, %v547
    %v549 = vrot.slane %v150, 1
    %v550 = vsel %vm327, %v547, %v549
    %v551 = vrot.slane %v151, 1
    %v552 = vsel %vm327, %v549, %v551
    %v553 = vrot.slane %v152, 1
    %v554 = vsel %vm327, %v551, %v553
    %v555 = vrot.slane %v153, 1
    %v556 = vsel %vm327, %v553, %v555
    %v557 = vrot.slane %v154, 1
    %v558 = vsel %vm327, %v555, %v557
    %v559 = vrot.slane %v155, 1
    %v560 = vsel %vm327, %v557, %v559
    %v561 = vrot.slane %v156, 1
    %v562 = vsel %vm327, %v559, %v561
    %v563 = vrot.slane %v157, 1
    %v564 = vsel %vm327, %v561, %v563
    %v565 = vrot.slane %v158, 1
    %v566 = vsel %vm327, %v563, %v565
    %v567 = vrot.slane %v159, 1
    %v568 = vsel %vm327, %v565, %v567
    %v569 = vrot.slane %v160, 1
    %v570 = vsel %vm327, %v567, %v569
    %v571 = vrot.slane %v161, 1
    %v572 = vsel %vm327, %v569, %v571
    %v573 = vrot.slane %v162, 1
    %v574 = vsel %vm327, %v571, %v573
    %v575 = vrot.slane %v163, 1
    %v576 = vsel %vm327, %v573, %v575
    %v577 = vrot.slane %v164, 1
    %v578 = vsel %vm327, %v575, %v577
    %v579 = vrot.slane %v165, 1
    %v580 = vsel %vm327, %v577, %v579
    %v581 = vrot.slane %v166, 1
    %v582 = vsel %vm327, %v579, %v581
    %v583 = vrot.slane %v167, 1
    %v584 = vsel %vm327, %v581, %v583
    %v585 = vrot.slane %v168, 1
    %v586 = vsel %vm327, %v583, %v585
    %v587 = vrot.slane %v169, 1
    %v588 = vsel %vm327, %v585, %v587
    %v589 = vrot.slane %v170, 1
    %v590 = vsel %vm327, %v587, %v589
    %v591 = vrot.slane %v171, 1
    %v592 = vsel %vm327, %v589, %v591
    %v593 = vrot.slane %v172, 1
    %v594 = vsel %vm327, %v591, %v593
    %v595 = vrot.slane %v173, 1
    %v596 = vsel %vm327, %v593, %v595
    %v597 = vrot.slane %v174, 1
    %v598 = vsel %vm327, %v595, %v597
    %v599 = vrot.slane %v175, 1
    %v600 = vsel %vm327, %v597, %v599
    %v601 = vrot.slane %v176, 1
    %v602 = vsel %vm327, %v599, %v601
    %v603 = vrot.slane %v177, 1
    %v604 = vsel %vm327, %v601, %v603
    %v605 = vrot.slane %v178, 1
    %v606 = vsel %vm327, %v603, %v605
    %v607 = vrot.slane %v179, 1
    %v608 = vsel %vm327, %v605, %v607
    %v609 = vrot.slane %v180, 1
    %v610 = vsel %vm327, %v607, %v609
    %v611 = vrot.slane %v181, 1
    %v612 = vsel %vm327, %v609, %v611
    %v613 = vrot.slane %v182, 1
    %v614 = vsel %vm327, %v611, %v613
    %v617 = vsel %vm327, %v613, %v328
    %vm618 = vcmask 1045504
    %v619 = vrot.slane %v39, 2
    %v620 = vrot.slane %v40, 2
    %v621 = vsel %vm618, %v619, %v620
    %v622 = vrot.slane %v41, 2
    %v623 = vsel %vm618, %v620, %v622
    %v624 = vrot.slane %v42, 2
    %v625 = vsel %vm618, %v622, %v624
    %v626 = vrot.slane %v43, 2
    %v627 = vsel %vm618, %v624, %v626
    %v628 = vrot.slane %v44, 2
    %v629 = vsel %vm618, %v626, %v628
    %v630 = vrot.slane %v45, 2
    %v631 = vsel %vm618, %v628, %v630
    %v632 = vrot.slane %v46, 2
    %v633 = vsel %vm618, %v630, %v632
    %v634 = vrot.slane %v47, 2
    %v635 = vsel %vm618, %v632, %v634
    %v636 = vrot.slane %v48, 2
    %v637 = vsel %vm618, %v634, %v636
    %v638 = vrot.slane %v49, 2
    %v639 = vsel %vm618, %v636, %v638
    %v640 = vrot.slane %v50, 2
    %v641 = vsel %vm618, %v638, %v640
    %v642 = vrot.slane %v51, 2
    %v643 = vsel %vm618, %v640, %v642
    %v644 = vrot.slane %v52, 2
    %v645 = vsel %vm618, %v642, %v644
    %v646 = vrot.slane %v53, 2
    %v647 = vsel %vm618, %v644, %v646
    %v648 = vrot.slane %v54, 2
    %v649 = vsel %vm618, %v646, %v648
    %v650 = vrot.slane %v55, 2
    %v651 = vsel %vm618, %v648, %v650
    %v652 = vrot.slane %v56, 2
    %v653 = vsel %vm618, %v650, %v652
    %v654 = vrot.slane %v57, 2
    %v655 = vsel %vm618, %v652, %v654
    %v656 = vrot.slane %v58, 2
    %v657 = vsel %vm618, %v654, %v656
    %v658 = vrot.slane %v59, 2
    %v659 = vsel %vm618, %v656, %v658
    %v660 = vrot.slane %v60, 2
    %v661 = vsel %vm618, %v658, %v660
    %v662 = vrot.slane %v61, 2
    %v663 = vsel %vm618, %v660, %v662
    %v664 = vrot.slane %v62, 2
    %v665 = vsel %vm618, %v662, %v664
    %v666 = vrot.slane %v63, 2
    %v667 = vsel %vm618, %v664, %v666
    %v668 = vrot.slane %v64, 2
    %v669 = vsel %vm618, %v666, %v668
    %v670 = vrot.slane %v65, 2
    %v671 = vsel %vm618, %v668, %v670
    %v672 = vrot.slane %v66, 2
    %v673 = vsel %vm618, %v670, %v672
    %v674 = vrot.slane %v67, 2
    %v675 = vsel %vm618, %v672, %v674
    %v676 = vrot.slane %v68, 2
    %v677 = vsel %vm618, %v674, %v676
    %v678 = vrot.slane %v69, 2
    %v679 = vsel %vm618, %v676, %v678
    %v680 = vrot.slane %v70, 2
    %v681 = vsel %vm618, %v678, %v680
    %v682 = vrot.slane %v71, 2
    %v683 = vsel %vm618, %v680, %v682
    %v684 = vrot.slane %v72, 2
    %v685 = vsel %vm618, %v682, %v684
    %v686 = vrot.slane %v73, 2
    %v687 = vsel %vm618, %v684, %v686
    %v688 = vrot.slane %v74, 2
    %v689 = vsel %vm618, %v686, %v688
    %v690 = vrot.slane %v75, 2
    %v691 = vsel %vm618, %v688, %v690
    %v692 = vrot.slane %v76, 2
    %v693 = vsel %vm618, %v690, %v692
    %v694 = vrot.slane %v77, 2
    %v695 = vsel %vm618, %v692, %v694
    %v696 = vrot.slane %v78, 2
    %v697 = vsel %vm618, %v694, %v696
    %v698 = vrot.slane %v79, 2
    %v699 = vsel %vm618, %v696, %v698
    %v700 = vrot.slane %v80, 2
    %v701 = vsel %vm618, %v698, %v700
    %v702 = vrot.slane %v81, 2
    %v703 = vsel %vm618, %v700, %v702
    %v704 = vrot.slane %v82, 2
    %v705 = vsel %vm618, %v702, %v704
    %v706 = vrot.slane %v83, 2
    %v707 = vsel %vm618, %v704, %v706
    %v708 = vrot.slane %v84, 2
    %v709 = vsel %vm618, %v706, %v708
    %v710 = vrot.slane %v85, 2
    %v711 = vsel %vm618, %v708, %v710
    %v712 = vrot.slane %v86, 2
    %v713 = vsel %vm618, %v710, %v712
    %v714 = vrot.slane %v87, 2
    %v715 = vsel %vm618, %v712, %v714
    %v716 = vrot.slane %v88, 2
    %v717 = vsel %vm618, %v714, %v716
    %v718 = vrot.slane %v89, 2
    %v719 = vsel %vm618, %v716, %v718
    %v720 = vrot.slane %v90, 2
    %v721 = vsel %vm618, %v718, %v720
    %v722 = vrot.slane %v91, 2
    %v723 = vsel %vm618, %v720, %v722
    %v724 = vrot.slane %v92, 2
    %v725 = vsel %vm618, %v722, %v724
    %v726 = vrot.slane %v93, 2
    %v727 = vsel %vm618, %v724, %v726
    %v728 = vrot.slane %v94, 2
    %v729 = vsel %vm618, %v726, %v728
    %v730 = vrot.slane %v95, 2
    %v731 = vsel %vm618, %v728, %v730
    %v732 = vrot.slane %v96, 2
    %v733 = vsel %vm618, %v730, %v732
    %v734 = vrot.slane %v97, 2
    %v735 = vsel %vm618, %v732, %v734
    %v736 = vrot.slane %v98, 2
    %v737 = vsel %vm618, %v734, %v736
    %v738 = vrot.slane %v99, 2
    %v739 = vsel %vm618, %v736, %v738
    %v740 = vrot.slane %v100, 2
    %v741 = vsel %vm618, %v738, %v740
    %v742 = vrot.slane %v101, 2
    %v743 = vsel %vm618, %v740, %v742
    %v744 = vrot.slane %v102, 2
    %v745 = vsel %vm618, %v742, %v744
    %v746 = vrot.slane %v103, 2
    %v747 = vsel %vm618, %v744, %v746
    %v748 = vrot.slane %v104, 2
    %v749 = vsel %vm618, %v746, %v748
    %v750 = vrot.slane %v105, 2
    %v751 = vsel %vm618, %v748, %v750
    %v752 = vrot.slane %v106, 2
    %v753 = vsel %vm618, %v750, %v752
    %v754 = vrot.slane %v107, 2
    %v755 = vsel %vm618, %v752, %v754
    %v756 = vrot.slane %v108, 2
    %v757 = vsel %vm618, %v754, %v756
    %v758 = vrot.slane %v109, 2
    %v759 = vsel %vm618, %v756, %v758
    %v760 = vrot.slane %v110, 2
    %v761 = vsel %vm618, %v758, %v760
    %v762 = vrot.slane %v111, 2
    %v763 = vsel %vm618, %v760, %v762
    %v764 = vrot.slane %v112, 2
    %v765 = vsel %vm618, %v762, %v764
    %v766 = vrot.slane %v113, 2
    %v767 = vsel %vm618, %v764, %v766
    %v768 = vrot.slane %v114, 2
    %v769 = vsel %vm618, %v766, %v768
    %v770 = vrot.slane %v115, 2
    %v771 = vsel %vm618, %v768, %v770
    %v772 = vrot.slane %v116, 2
    %v773 = vsel %vm618, %v770, %v772
    %v774 = vrot.slane %v117, 2
    %v775 = vsel %vm618, %v772, %v774
    %v776 = vrot.slane %v118, 2
    %v777 = vsel %vm618, %v774, %v776
    %v778 = vrot.slane %v119, 2
    %v779 = vsel %vm618, %v776, %v778
    %v780 = vrot.slane %v120, 2
    %v781 = vsel %vm618, %v778, %v780
    %v782 = vrot.slane %v121, 2
    %v783 = vsel %vm618, %v780, %v782
    %v784 = vrot.slane %v122, 2
    %v785 = vsel %vm618, %v782, %v784
    %v786 = vrot.slane %v123, 2
    %v787 = vsel %vm618, %v784, %v786
    %v788 = vrot.slane %v124, 2
    %v789 = vsel %vm618, %v786, %v788
    %v790 = vrot.slane %v125, 2
    %v791 = vsel %vm618, %v788, %v790
    %v792 = vrot.slane %v126, 2
    %v793 = vsel %vm618, %v790, %v792
    %v794 = vrot.slane %v127, 2
    %v795 = vsel %vm618, %v792, %v794
    %v796 = vrot.slane %v128, 2
    %v797 = vsel %vm618, %v794, %v796
    %v798 = vrot.slane %v129, 2
    %v799 = vsel %vm618, %v796, %v798
    %v800 = vrot.slane %v130, 2
    %v801 = vsel %vm618, %v798, %v800
    %v802 = vrot.slane %v131, 2
    %v803 = vsel %vm618, %v800, %v802
    %v804 = vrot.slane %v132, 2
    %v805 = vsel %vm618, %v802, %v804
    %v806 = vrot.slane %v133, 2
    %v807 = vsel %vm618, %v804, %v806
    %v808 = vrot.slane %v134, 2
    %v809 = vsel %vm618, %v806, %v808
    %v810 = vrot.slane %v135, 2
    %v811 = vsel %vm618, %v808, %v810
    %v812 = vrot.slane %v136, 2
    %v813 = vsel %vm618, %v810, %v812
    %v814 = vrot.slane %v137, 2
    %v815 = vsel %vm618, %v812, %v814
    %v816 = vrot.slane %v138, 2
    %v817 = vsel %vm618, %v814, %v816
    %v818 = vrot.slane %v139, 2
    %v819 = vsel %vm618, %v816, %v818
    %v820 = vrot.slane %v140, 2
    %v821 = vsel %vm618, %v818, %v820
    %v822 = vrot.slane %v141, 2
    %v823 = vsel %vm618, %v820, %v822
    %v824 = vrot.slane %v142, 2
    %v825 = vsel %vm618, %v822, %v824
    %v826 = vrot.slane %v143, 2
    %v827 = vsel %vm618, %v824, %v826
    %v828 = vrot.slane %v144, 2
    %v829 = vsel %vm618, %v826, %v828
    %v830 = vrot.slane %v145, 2
    %v831 = vsel %vm618, %v828, %v830
    %v832 = vrot.slane %v146, 2
    %v833 = vsel %vm618, %v830, %v832
    %v834 = vrot.slane %v147, 2
    %v835 = vsel %vm618, %v832, %v834
    %v836 = vrot.slane %v148, 2
    %v837 = vsel %vm618, %v834, %v836
    %v838 = vrot.slane %v149, 2
    %v839 = vsel %vm618, %v836, %v838
    %v840 = vrot.slane %v150, 2
    %v841 = vsel %vm618, %v838, %v840
    %v842 = vrot.slane %v151, 2
    %v843 = vsel %vm618, %v840, %v842
    %v844 = vrot.slane %v152, 2
    %v845 = vsel %vm618, %v842, %v844
    %v846 = vrot.slane %v153, 2
    %v847 = vsel %vm618, %v844, %v846
    %v848 = vrot.slane %v154, 2
    %v849 = vsel %vm618, %v846, %v848
    %v850 = vrot.slane %v155, 2
    %v851 = vsel %vm618, %v848, %v850
    %v852 = vrot.slane %v156, 2
    %v853 = vsel %vm618, %v850, %v852
    %v854 = vrot.slane %v157, 2
    %v855 = vsel %vm618, %v852, %v854
    %v856 = vrot.slane %v158, 2
    %v857 = vsel %vm618, %v854, %v856
    %v858 = vrot.slane %v159, 2
    %v859 = vsel %vm618, %v856, %v858
    %v860 = vrot.slane %v160, 2
    %v861 = vsel %vm618, %v858, %v860
    %v862 = vrot.slane %v161, 2
    %v863 = vsel %vm618, %v860, %v862
    %v864 = vrot.slane %v162, 2
    %v865 = vsel %vm618, %v862, %v864
    %v866 = vrot.slane %v163, 2
    %v867 = vsel %vm618, %v864, %v866
    %v868 = vrot.slane %v164, 2
    %v869 = vsel %vm618, %v866, %v868
    %v870 = vrot.slane %v165, 2
    %v871 = vsel %vm618, %v868, %v870
    %v872 = vrot.slane %v166, 2
    %v873 = vsel %vm618, %v870, %v872
    %v874 = vrot.slane %v167, 2
    %v875 = vsel %vm618, %v872, %v874
    %v876 = vrot.slane %v168, 2
    %v877 = vsel %vm618, %v874, %v876
    %v878 = vrot.slane %v169, 2
    %v879 = vsel %vm618, %v876, %v878
    %v880 = vrot.slane %v170, 2
    %v881 = vsel %vm618, %v878, %v880
    %v882 = vrot.slane %v171, 2
    %v883 = vsel %vm618, %v880, %v882
    %v884 = vrot.slane %v172, 2
    %v885 = vsel %vm618, %v882, %v884
    %v886 = vrot.slane %v173, 2
    %v887 = vsel %vm618, %v884, %v886
    %v888 = vrot.slane %v174, 2
    %v889 = vsel %vm618, %v886, %v888
    %v890 = vrot.slane %v175, 2
    %v891 = vsel %vm618, %v888, %v890
    %v892 = vrot.slane %v176, 2
    %v893 = vsel %vm618, %v890, %v892
    %v894 = vrot.slane %v177, 2
    %v895 = vsel %vm618, %v892, %v894
    %v896 = vrot.slane %v178, 2
    %v897 = vsel %vm618, %v894, %v896
    %v898 = vrot.slane %v179, 2
    %v899 = vsel %vm618, %v896, %v898
    %v900 = vrot.slane %v180, 2
    %v901 = vsel %vm618, %v898, %v900
    %v902 = vrot.slane %v181, 2
    %v903 = vsel %vm618, %v900, %v902
    %v904 = vrot.slane %v182, 2
    %v905 = vsel %vm618, %v902, %v904
    %v908 = vsel %vm618, %v904, %v619
    %910 = vrot.lane.b32.xlu0 %v330, 64
    %v911 = vpop.permute.xlu0 %910
    %912 = vrot.lane.b32.xlu0 %v332, 64
    %v913 = vpop.permute.xlu0 %912
    %914 = vrot.lane.b32.xlu0 %v334, 64
    %v915 = vpop.permute.xlu0 %914
    %916 = vrot.lane.b32.xlu0 %v336, 64
    %v917 = vpop.permute.xlu0 %916
    %918 = vrot.lane.b32.xlu0 %v338, 64
    %v919 = vpop.permute.xlu0 %918
    %920 = vrot.lane.b32.xlu0 %v340, 64
    %v921 = vpop.permute.xlu0 %920
    %922 = vrot.lane.b32.xlu0 %v342, 64
    %v923 = vpop.permute.xlu0 %922
    %924 = vrot.lane.b32.xlu0 %v344, 64
    %v925 = vpop.permute.xlu0 %924
    %926 = vrot.lane.b32.xlu0 %v346, 64
    %v927 = vpop.permute.xlu0 %926
    %928 = vrot.lane.b32.xlu0 %v348, 64
    %v929 = vpop.permute.xlu0 %928
    %930 = vrot.lane.b32.xlu0 %v350, 64
    %v931 = vpop.permute.xlu0 %930
    %932 = vrot.lane.b32.xlu0 %v352, 64
    %v933 = vpop.permute.xlu0 %932
    %934 = vrot.lane.b32.xlu0 %v354, 64
    %v935 = vpop.permute.xlu0 %934
    %936 = vrot.lane.b32.xlu0 %v356, 64
    %v937 = vpop.permute.xlu0 %936
    %938 = vrot.lane.b32.xlu0 %v358, 64
    %v939 = vpop.permute.xlu0 %938
    %940 = vrot.lane.b32.xlu0 %v360, 64
    %v941 = vpop.permute.xlu0 %940
    %942 = vrot.lane.b32.xlu0 %v362, 64
    %v943 = vpop.permute.xlu0 %942
    %944 = vrot.lane.b32.xlu0 %v364, 64
    %v945 = vpop.permute.xlu0 %944
    %946 = vrot.lane.b32.xlu0 %v366, 64
    %v947 = vpop.permute.xlu0 %946
    %948 = vrot.lane.b32.xlu0 %v368, 64
    %v949 = vpop.permute.xlu0 %948
    %950 = vrot.lane.b32.xlu0 %v370, 64
    %v951 = vpop.permute.xlu0 %950
    %952 = vrot.lane.b32.xlu0 %v372, 64
    %v953 = vpop.permute.xlu0 %952
    %954 = vrot.lane.b32.xlu0 %v374, 64
    %v955 = vpop.permute.xlu0 %954
    %956 = vrot.lane.b32.xlu0 %v376, 64
    %v957 = vpop.permute.xlu0 %956
    %958 = vrot.lane.b32.xlu0 %v378, 64
    %v959 = vpop.permute.xlu0 %958
    %960 = vrot.lane.b32.xlu0 %v380, 64
    %v961 = vpop.permute.xlu0 %960
    %962 = vrot.lane.b32.xlu0 %v382, 64
    %v963 = vpop.permute.xlu0 %962
    %964 = vrot.lane.b32.xlu0 %v384, 64
    %v965 = vpop.permute.xlu0 %964
    %966 = vrot.lane.b32.xlu0 %v386, 64
    %v967 = vpop.permute.xlu0 %966
    %968 = vrot.lane.b32.xlu0 %v388, 64
    %v969 = vpop.permute.xlu0 %968
    %970 = vrot.lane.b32.xlu0 %v390, 64
    %v971 = vpop.permute.xlu0 %970
    %972 = vrot.lane.b32.xlu0 %v392, 64
    %v973 = vpop.permute.xlu0 %972
    %974 = vrot.lane.b32.xlu0 %v394, 64
    %v975 = vpop.permute.xlu0 %974
    %976 = vrot.lane.b32.xlu0 %v396, 64
    %v977 = vpop.permute.xlu0 %976
    %978 = vrot.lane.b32.xlu0 %v398, 64
    %v979 = vpop.permute.xlu0 %978
    %980 = vrot.lane.b32.xlu0 %v400, 64
    %v981 = vpop.permute.xlu0 %980
    %982 = vrot.lane.b32.xlu0 %v402, 64
    %v983 = vpop.permute.xlu0 %982
    %984 = vrot.lane.b32.xlu0 %v404, 64
    %v985 = vpop.permute.xlu0 %984
    %986 = vrot.lane.b32.xlu0 %v406, 64
    %v987 = vpop.permute.xlu0 %986
    %988 = vrot.lane.b32.xlu0 %v408, 64
    %v989 = vpop.permute.xlu0 %988
    %990 = vrot.lane.b32.xlu0 %v410, 64
    %v991 = vpop.permute.xlu0 %990
    %992 = vrot.lane.b32.xlu0 %v412, 64
    %v993 = vpop.permute.xlu0 %992
    %994 = vrot.lane.b32.xlu0 %v414, 64
    %v995 = vpop.permute.xlu0 %994
    %996 = vrot.lane.b32.xlu0 %v416, 64
    %v997 = vpop.permute.xlu0 %996
    %998 = vrot.lane.b32.xlu0 %v418, 64
    %v999 = vpop.permute.xlu0 %998
    %1000 = vrot.lane.b32.xlu0 %v420, 64
    %v1001 = vpop.permute.xlu0 %1000
    %1002 = vrot.lane.b32.xlu0 %v422, 64
    %v1003 = vpop.permute.xlu0 %1002
    %1004 = vrot.lane.b32.xlu0 %v424, 64
    %v1005 = vpop.permute.xlu0 %1004
    %1006 = vrot.lane.b32.xlu0 %v426, 64
    %v1007 = vpop.permute.xlu0 %1006
    %1008 = vrot.lane.b32.xlu0 %v428, 64
    %v1009 = vpop.permute.xlu0 %1008
    %1010 = vrot.lane.b32.xlu0 %v430, 64
    %v1011 = vpop.permute.xlu0 %1010
    %1012 = vrot.lane.b32.xlu0 %v432, 64
    %v1013 = vpop.permute.xlu0 %1012
    %1014 = vrot.lane.b32.xlu0 %v434, 64
    %v1015 = vpop.permute.xlu0 %1014
    %1016 = vrot.lane.b32.xlu0 %v436, 64
    %v1017 = vpop.permute.xlu0 %1016
    %1018 = vrot.lane.b32.xlu0 %v438, 64
    %v1019 = vpop.permute.xlu0 %1018
    %1020 = vrot.lane.b32.xlu0 %v440, 64
    %v1021 = vpop.permute.xlu0 %1020
    %1022 = vrot.lane.b32.xlu0 %v442, 64
    %v1023 = vpop.permute.xlu0 %1022
    %1024 = vrot.lane.b32.xlu0 %v444, 64
    %v1025 = vpop.permute.xlu0 %1024
    %1026 = vrot.lane.b32.xlu0 %v446, 64
    %v1027 = vpop.permute.xlu0 %1026
    %1028 = vrot.lane.b32.xlu0 %v448, 64
    %v1029 = vpop.permute.xlu0 %1028
    %1030 = vrot.lane.b32.xlu0 %v450, 64
    %v1031 = vpop.permute.xlu0 %1030
    %1032 = vrot.lane.b32.xlu0 %v452, 64
    %v1033 = vpop.permute.xlu0 %1032
    %1034 = vrot.lane.b32.xlu0 %v454, 64
    %v1035 = vpop.permute.xlu0 %1034
    %1036 = vrot.lane.b32.xlu0 %v456, 64
    %v1037 = vpop.permute.xlu0 %1036
    %1038 = vrot.lane.b32.xlu0 %v458, 64
    %v1039 = vpop.permute.xlu0 %1038
    %1040 = vrot.lane.b32.xlu0 %v460, 64
    %v1041 = vpop.permute.xlu0 %1040
    %1042 = vrot.lane.b32.xlu0 %v462, 64
    %v1043 = vpop.permute.xlu0 %1042
    %1044 = vrot.lane.b32.xlu0 %v464, 64
    %v1045 = vpop.permute.xlu0 %1044
    %1046 = vrot.lane.b32.xlu0 %v466, 64
    %v1047 = vpop.permute.xlu0 %1046
    %1048 = vrot.lane.b32.xlu0 %v468, 64
    %v1049 = vpop.permute.xlu0 %1048
    %1050 = vrot.lane.b32.xlu0 %v470, 64
    %v1051 = vpop.permute.xlu0 %1050
    %1052 = vrot.lane.b32.xlu0 %v472, 64
    %v1053 = vpop.permute.xlu0 %1052
    %1054 = vrot.lane.b32.xlu0 %v474, 64
    %v1055 = vpop.permute.xlu0 %1054
    %1056 = vrot.lane.b32.xlu0 %v476, 64
    %v1057 = vpop.permute.xlu0 %1056
    %1058 = vrot.lane.b32.xlu0 %v478, 64
    %v1059 = vpop.permute.xlu0 %1058
    %1060 = vrot.lane.b32.xlu0 %v480, 64
    %v1061 = vpop.permute.xlu0 %1060
    %1062 = vrot.lane.b32.xlu0 %v482, 64
    %v1063 = vpop.permute.xlu0 %1062
    %1064 = vrot.lane.b32.xlu0 %v484, 64
    %v1065 = vpop.permute.xlu0 %1064
    %1066 = vrot.lane.b32.xlu0 %v486, 64
    %v1067 = vpop.permute.xlu0 %1066
    %1068 = vrot.lane.b32.xlu0 %v488, 64
    %v1069 = vpop.permute.xlu0 %1068
    %1070 = vrot.lane.b32.xlu0 %v490, 64
    %v1071 = vpop.permute.xlu0 %1070
    %1072 = vrot.lane.b32.xlu0 %v492, 64
    %v1073 = vpop.permute.xlu0 %1072
    %1074 = vrot.lane.b32.xlu0 %v494, 64
    %v1075 = vpop.permute.xlu0 %1074
    %1076 = vrot.lane.b32.xlu0 %v496, 64
    %v1077 = vpop.permute.xlu0 %1076
    %1078 = vrot.lane.b32.xlu0 %v498, 64
    %v1079 = vpop.permute.xlu0 %1078
    %1080 = vrot.lane.b32.xlu0 %v500, 64
    %v1081 = vpop.permute.xlu0 %1080
    %1082 = vrot.lane.b32.xlu0 %v502, 64
    %v1083 = vpop.permute.xlu0 %1082
    %1084 = vrot.lane.b32.xlu0 %v504, 64
    %v1085 = vpop.permute.xlu0 %1084
    %1086 = vrot.lane.b32.xlu0 %v506, 64
    %v1087 = vpop.permute.xlu0 %1086
    %1088 = vrot.lane.b32.xlu0 %v508, 64
    %v1089 = vpop.permute.xlu0 %1088
    %1090 = vrot.lane.b32.xlu0 %v510, 64
    %v1091 = vpop.permute.xlu0 %1090
    %1092 = vrot.lane.b32.xlu0 %v512, 64
    %v1093 = vpop.permute.xlu0 %1092
    %1094 = vrot.lane.b32.xlu0 %v514, 64
    %v1095 = vpop.permute.xlu0 %1094
    %1096 = vrot.lane.b32.xlu0 %v516, 64
    %v1097 = vpop.permute.xlu0 %1096
    %1098 = vrot.lane.b32.xlu0 %v518, 64
    %v1099 = vpop.permute.xlu0 %1098
    %1100 = vrot.lane.b32.xlu0 %v520, 64
    %v1101 = vpop.permute.xlu0 %1100
    %1102 = vrot.lane.b32.xlu0 %v522, 64
    %v1103 = vpop.permute.xlu0 %1102
    %1104 = vrot.lane.b32.xlu0 %v524, 64
    %v1105 = vpop.permute.xlu0 %1104
    %1106 = vrot.lane.b32.xlu0 %v526, 64
    %v1107 = vpop.permute.xlu0 %1106
    %1108 = vrot.lane.b32.xlu0 %v528, 64
    %v1109 = vpop.permute.xlu0 %1108
    %1110 = vrot.lane.b32.xlu0 %v530, 64
    %v1111 = vpop.permute.xlu0 %1110
    %1112 = vrot.lane.b32.xlu0 %v532, 64
    %v1113 = vpop.permute.xlu0 %1112
    %1114 = vrot.lane.b32.xlu0 %v534, 64
    %v1115 = vpop.permute.xlu0 %1114
    %1116 = vrot.lane.b32.xlu0 %v536, 64
    %v1117 = vpop.permute.xlu0 %1116
    %1118 = vrot.lane.b32.xlu0 %v538, 64
    %v1119 = vpop.permute.xlu0 %1118
    %1120 = vrot.lane.b32.xlu0 %v540, 64
    %v1121 = vpop.permute.xlu0 %1120
    %1122 = vrot.lane.b32.xlu0 %v542, 64
    %v1123 = vpop.permute.xlu0 %1122
    %1124 = vrot.lane.b32.xlu0 %v544, 64
    %v1125 = vpop.permute.xlu0 %1124
    %1126 = vrot.lane.b32.xlu0 %v546, 64
    %v1127 = vpop.permute.xlu0 %1126
    %1128 = vrot.lane.b32.xlu0 %v548, 64
    %v1129 = vpop.permute.xlu0 %1128
    %1130 = vrot.lane.b32.xlu0 %v550, 64
    %v1131 = vpop.permute.xlu0 %1130
    %1132 = vrot.lane.b32.xlu0 %v552, 64
    %v1133 = vpop.permute.xlu0 %1132
    %1134 = vrot.lane.b32.xlu0 %v554, 64
    %v1135 = vpop.permute.xlu0 %1134
    %1136 = vrot.lane.b32.xlu0 %v556, 64
    %v1137 = vpop.permute.xlu0 %1136
    %1138 = vrot.lane.b32.xlu0 %v558, 64
    %v1139 = vpop.permute.xlu0 %1138
    %1140 = vrot.lane.b32.xlu0 %v560, 64
    %v1141 = vpop.permute.xlu0 %1140
    %1142 = vrot.lane.b32.xlu0 %v562, 64
    %v1143 = vpop.permute.xlu0 %1142
    %1144 = vrot.lane.b32.xlu0 %v564, 64
    %v1145 = vpop.permute.xlu0 %1144
    %1146 = vrot.lane.b32.xlu0 %v566, 64
    %v1147 = vpop.permute.xlu0 %1146
    %1148 = vrot.lane.b32.xlu0 %v568, 64
    %v1149 = vpop.permute.xlu0 %1148
    %1150 = vrot.lane.b32.xlu0 %v570, 64
    %v1151 = vpop.permute.xlu0 %1150
    %1152 = vrot.lane.b32.xlu0 %v572, 64
    %v1153 = vpop.permute.xlu0 %1152
    %1154 = vrot.lane.b32.xlu0 %v574, 64
    %v1155 = vpop.permute.xlu0 %1154
    %1156 = vrot.lane.b32.xlu0 %v576, 64
    %v1157 = vpop.permute.xlu0 %1156
    %1158 = vrot.lane.b32.xlu0 %v578, 64
    %v1159 = vpop.permute.xlu0 %1158
    %1160 = vrot.lane.b32.xlu0 %v580, 64
    %v1161 = vpop.permute.xlu0 %1160
    %1162 = vrot.lane.b32.xlu0 %v582, 64
    %v1163 = vpop.permute.xlu0 %1162
    %1164 = vrot.lane.b32.xlu0 %v584, 64
    %v1165 = vpop.permute.xlu0 %1164
    %1166 = vrot.lane.b32.xlu0 %v586, 64
    %v1167 = vpop.permute.xlu0 %1166
    %1168 = vrot.lane.b32.xlu0 %v588, 64
    %v1169 = vpop.permute.xlu0 %1168
    %1170 = vrot.lane.b32.xlu0 %v590, 64
    %v1171 = vpop.permute.xlu0 %1170
    %1172 = vrot.lane.b32.xlu0 %v592, 64
    %v1173 = vpop.permute.xlu0 %1172
    %1174 = vrot.lane.b32.xlu0 %v594, 64
    %v1175 = vpop.permute.xlu0 %1174
    %1176 = vrot.lane.b32.xlu0 %v596, 64
    %v1177 = vpop.permute.xlu0 %1176
    %1178 = vrot.lane.b32.xlu0 %v598, 64
    %v1179 = vpop.permute.xlu0 %1178
    %1180 = vrot.lane.b32.xlu0 %v600, 64
    %v1181 = vpop.permute.xlu0 %1180
    %1182 = vrot.lane.b32.xlu0 %v602, 64
    %v1183 = vpop.permute.xlu0 %1182
    %1184 = vrot.lane.b32.xlu0 %v604, 64
    %v1185 = vpop.permute.xlu0 %1184
    %1186 = vrot.lane.b32.xlu0 %v606, 64
    %v1187 = vpop.permute.xlu0 %1186
    %1188 = vrot.lane.b32.xlu0 %v608, 64
    %v1189 = vpop.permute.xlu0 %1188
    %1190 = vrot.lane.b32.xlu0 %v610, 64
    %v1191 = vpop.permute.xlu0 %1190
    %1192 = vrot.lane.b32.xlu0 %v612, 64
    %v1193 = vpop.permute.xlu0 %1192
    %1194 = vrot.lane.b32.xlu0 %v614, 64
    %v1195 = vpop.permute.xlu0 %1194
    %1196 = vrot.lane.b32.xlu0 %v617, 64
    %v1197 = vpop.permute.xlu0 %1196
    %vm1342 = vcmask 523264
    %v1343 = vsel %vm1342, %v39, %v911
    %v1344 = vsel %vm1342, %v40, %v913
    %v1345 = vsel %vm1342, %v41, %v915
    %v1346 = vsel %vm1342, %v42, %v917
    %v1347 = vsel %vm1342, %v43, %v919
    %v1348 = vsel %vm1342, %v44, %v921
    %v1349 = vsel %vm1342, %v45, %v923
    %v1350 = vsel %vm1342, %v46, %v925
    %v1351 = vsel %vm1342, %v47, %v927
    %v1352 = vsel %vm1342, %v48, %v929
    %v1353 = vsel %vm1342, %v49, %v931
    %v1354 = vsel %vm1342, %v50, %v933
    %v1355 = vsel %vm1342, %v51, %v935
    %v1356 = vsel %vm1342, %v52, %v937
    %v1357 = vsel %vm1342, %v53, %v939
    %v1358 = vsel %vm1342, %v54, %v941
    %v1359 = vsel %vm1342, %v55, %v943
    %v1360 = vsel %vm1342, %v56, %v945
    %v1361 = vsel %vm1342, %v57, %v947
    %v1362 = vsel %vm1342, %v58, %v949
    %v1363 = vsel %vm1342, %v59, %v951
    %v1364 = vsel %vm1342, %v60, %v953
    %v1365 = vsel %vm1342, %v61, %v955
    %v1366 = vsel %vm1342, %v62, %v957
    %v1367 = vsel %vm1342, %v63, %v959
    %v1368 = vsel %vm1342, %v64, %v961
    %v1369 = vsel %vm1342, %v65, %v963
    %v1370 = vsel %vm1342, %v66, %v965
    %v1371 = vsel %vm1342, %v67, %v967
    %v1372 = vsel %vm1342, %v68, %v969
    %v1373 = vsel %vm1342, %v69, %v971
    %v1374 = vsel %vm1342, %v70, %v973
    %v1375 = vsel %vm1342, %v71, %v975
    %v1376 = vsel %vm1342, %v72, %v977
    %v1377 = vsel %vm1342, %v73, %v979
    %v1378 = vsel %vm1342, %v74, %v981
    %v1379 = vsel %vm1342, %v75, %v983
    %v1380 = vsel %vm1342, %v76, %v985
    %v1381 = vsel %vm1342, %v77, %v987
    %v1382 = vsel %vm1342, %v78, %v989
    %v1383 = vsel %vm1342, %v79, %v991
    %v1384 = vsel %vm1342, %v80, %v993
    %v1385 = vsel %vm1342, %v81, %v995
    %v1386 = vsel %vm1342, %v82, %v997
    %v1387 = vsel %vm1342, %v83, %v999
    %v1388 = vsel %vm1342, %v84, %v1001
    %v1389 = vsel %vm1342, %v85, %v1003
    %v1390 = vsel %vm1342, %v86, %v1005
    %v1391 = vsel %vm1342, %v87, %v1007
    %v1392 = vsel %vm1342, %v88, %v1009
    %v1393 = vsel %vm1342, %v89, %v1011
    %v1394 = vsel %vm1342, %v90, %v1013
    %v1395 = vsel %vm1342, %v91, %v1015
    %v1396 = vsel %vm1342, %v92, %v1017
    %v1397 = vsel %vm1342, %v93, %v1019
    %v1398 = vsel %vm1342, %v94, %v1021
    %v1399 = vsel %vm1342, %v95, %v1023
    %v1400 = vsel %vm1342, %v96, %v1025
    %v1401 = vsel %vm1342, %v97, %v1027
    %v1402 = vsel %vm1342, %v98, %v1029
    %v1403 = vsel %vm1342, %v99, %v1031
    %v1404 = vsel %vm1342, %v100, %v1033
    %v1405 = vsel %vm1342, %v101, %v1035
    %v1406 = vsel %vm1342, %v102, %v1037
    %v1407 = vsel %vm1342, %v103, %v1039
    %v1408 = vsel %vm1342, %v104, %v1041
    %v1409 = vsel %vm1342, %v105, %v1043
    %v1410 = vsel %vm1342, %v106, %v1045
    %v1411 = vsel %vm1342, %v107, %v1047
    %v1412 = vsel %vm1342, %v108, %v1049
    %v1413 = vsel %vm1342, %v109, %v1051
    %v1414 = vsel %vm1342, %v110, %v1053
    %v1415 = vsel %vm1342, %v111, %v1055
    %v1416 = vsel %vm1342, %v112, %v1057
    %v1417 = vsel %vm1342, %v113, %v1059
    %v1418 = vsel %vm1342, %v114, %v1061
    %v1419 = vsel %vm1342, %v115, %v1063
    %v1420 = vsel %vm1342, %v116, %v1065
    %v1421 = vsel %vm1342, %v117, %v1067
    %v1422 = vsel %vm1342, %v118, %v1069
    %v1423 = vsel %vm1342, %v119, %v1071
    %v1424 = vsel %vm1342, %v120, %v1073
    %v1425 = vsel %vm1342, %v121, %v1075
    %v1426 = vsel %vm1342, %v122, %v1077
    %v1427 = vsel %vm1342, %v123, %v1079
    %v1428 = vsel %vm1342, %v124, %v1081
    %v1429 = vsel %vm1342, %v125, %v1083
    %v1430 = vsel %vm1342, %v126, %v1085
    %v1431 = vsel %vm1342, %v127, %v1087
    %v1432 = vsel %vm1342, %v128, %v1089
    %v1433 = vsel %vm1342, %v129, %v1091
    %v1434 = vsel %vm1342, %v130, %v1093
    %v1435 = vsel %vm1342, %v131, %v1095
    %v1436 = vsel %vm1342, %v132, %v1097
    %v1437 = vsel %vm1342, %v133, %v1099
    %v1438 = vsel %vm1342, %v134, %v1101
    %v1439 = vsel %vm1342, %v135, %v1103
    %v1440 = vsel %vm1342, %v136, %v1105
    %v1441 = vsel %vm1342, %v137, %v1107
    %v1442 = vsel %vm1342, %v138, %v1109
    %v1443 = vsel %vm1342, %v139, %v1111
    %v1444 = vsel %vm1342, %v140, %v1113
    %v1445 = vsel %vm1342, %v141, %v1115
    %v1446 = vsel %vm1342, %v142, %v1117
    %v1447 = vsel %vm1342, %v143, %v1119
    %v1448 = vsel %vm1342, %v144, %v1121
    %v1449 = vsel %vm1342, %v145, %v1123
    %v1450 = vsel %vm1342, %v146, %v1125
    %v1451 = vsel %vm1342, %v147, %v1127
    %v1452 = vsel %vm1342, %v148, %v1129
    %v1453 = vsel %vm1342, %v149, %v1131
    %v1454 = vsel %vm1342, %v150, %v1133
    %v1455 = vsel %vm1342, %v151, %v1135
    %v1456 = vsel %vm1342, %v152, %v1137
    %v1457 = vsel %vm1342, %v153, %v1139
    %v1458 = vsel %vm1342, %v154, %v1141
    %v1459 = vsel %vm1342, %v155, %v1143
    %v1460 = vsel %vm1342, %v156, %v1145
    %v1461 = vsel %vm1342, %v157, %v1147
    %v1462 = vsel %vm1342, %v158, %v1149
    %v1463 = vsel %vm1342, %v159, %v1151
    %v1464 = vsel %vm1342, %v160, %v1153
    %v1465 = vsel %vm1342, %v161, %v1155
    %v1466 = vsel %vm1342, %v162, %v1157
    %v1467 = vsel %vm1342, %v163, %v1159
    %v1468 = vsel %vm1342, %v164, %v1161
    %v1469 = vsel %vm1342, %v165, %v1163
    %v1470 = vsel %vm1342, %v166, %v1165
    %v1471 = vsel %vm1342, %v167, %v1167
    %v1472 = vsel %vm1342, %v168, %v1169
    %v1473 = vsel %vm1342, %v169, %v1171
    %v1474 = vsel %vm1342, %v170, %v1173
    %v1475 = vsel %vm1342, %v171, %v1175
    %v1476 = vsel %vm1342, %v172, %v1177
    %v1477 = vsel %vm1342, %v173, %v1179
    %v1478 = vsel %vm1342, %v174, %v1181
    %v1479 = vsel %vm1342, %v175, %v1183
    %v1480 = vsel %vm1342, %v176, %v1185
    %v1481 = vsel %vm1342, %v177, %v1187
    %v1482 = vsel %vm1342, %v178, %v1189
    %v1483 = vsel %vm1342, %v179, %v1191
    %v1484 = vsel %vm1342, %v180, %v1193
    %v1485 = vsel %vm1342, %v181, %v1195
    %v1486 = vsel %vm1342, %v182, %v1197
    %v1487 = vld [vmem:[%s1] sm:$0xff]
    %v1488 = vld [vmem:[%s1 + $0x8] sm:$0xff]
    %v1489 = vld [vmem:[%s1 + $0x10] sm:$0xff]
    %v1490 = vld [vmem:[%s1 + $0x18] sm:$0xff]
    %v1491 = vld [vmem:[%s1 + $0x20] sm:$0xff]
    %v1492 = vld [vmem:[%s1 + $0x28] sm:$0xff]
    %v1493 = vld [vmem:[%s1 + $0x30] sm:$0xff]
    %v1494 = vld [vmem:[%s1 + $0x38] sm:$0xff]
    %v1495 = vld [vmem:[%s1 + $0x40] sm:$0xff]
    %v1496 = vld [vmem:[%s1 + $0x48] sm:$0xff]
    %v1497 = vld [vmem:[%s1 + $0x50] sm:$0xff]
    %v1498 = vld [vmem:[%s1 + $0x58] sm:$0xff]
    %v1499 = vld [vmem:[%s1 + $0x60] sm:$0xff]
    %v1500 = vld [vmem:[%s1 + $0x68] sm:$0xff]
    %v1501 = vld [vmem:[%s1 + $0x70] sm:$0xff]
    %v1502 = vld [vmem:[%s1 + $0x78] sm:$0xff]
    %v1503 = vld [vmem:[%s1 + $0x80] sm:$0xff]
    %v1504 = vld [vmem:[%s1 + $0x88] sm:$0xff]
    %v1505 = vld [vmem:[%s1 + $0x90] sm:$0xff]
    %v1506 = vld [vmem:[%s1 + $0x98] sm:$0xff]
    %v1507 = vld [vmem:[%s1 + $0xa0] sm:$0xff]
    %v1508 = vld [vmem:[%s1 + $0xa8] sm:$0xff]
    %v1509 = vld [vmem:[%s1 + $0xb0] sm:$0xff]
    %v1510 = vld [vmem:[%s1 + $0xb8] sm:$0xff]
    %v1511 = vld [vmem:[%s2] sm:$0x1]
    %v1513 = vlaneseq
    %v1514 = vshrl.u32 %v1513, 7
    %v1515 = vsub.s32 0, %v1514
    %v1516 = vrot.slane %v1511, %v1515
    %v1518 = vsel %vm1342, %v621, 0
    %v1520 = vsel %vm1342, %v623, 0
    %v1522 = vsel %vm1342, %v625, 0
    %v1524 = vsel %vm1342, %v627, 0
    %v1526 = vsel %vm1342, %v629, 0
    %v1528 = vsel %vm1342, %v631, 0
    %v1530 = vsel %vm1342, %v633, 0
    %v1532 = vsel %vm1342, %v635, 0
    %v1534 = vsel %vm1342, %v637, 0
    %v1536 = vsel %vm1342, %v639, 0
    %v1538 = vsel %vm1342, %v641, 0
    %v1540 = vsel %vm1342, %v643, 0
    %v1542 = vsel %vm1342, %v645, 0
    %v1544 = vsel %vm1342, %v647, 0
    %v1546 = vsel %vm1342, %v649, 0
    %v1548 = vsel %vm1342, %v651, 0
    %v1550 = vsel %vm1342, %v653, 0
    %v1552 = vsel %vm1342, %v655, 0
    %v1554 = vsel %vm1342, %v657, 0
    %v1556 = vsel %vm1342, %v659, 0
    %v1558 = vsel %vm1342, %v661, 0
    %v1560 = vsel %vm1342, %v663, 0
    %v1562 = vsel %vm1342, %v665, 0
    %v1564 = vsel %vm1342, %v667, 0
    %v1566 = vsel %vm1342, %v669, 0
    %v1568 = vsel %vm1342, %v671, 0
    %v1570 = vsel %vm1342, %v673, 0
    %v1572 = vsel %vm1342, %v675, 0
    %v1574 = vsel %vm1342, %v677, 0
    %v1576 = vsel %vm1342, %v679, 0
    %v1578 = vsel %vm1342, %v681, 0
    %v1580 = vsel %vm1342, %v683, 0
    %v1582 = vsel %vm1342, %v685, 0
    %v1584 = vsel %vm1342, %v687, 0
    %v1586 = vsel %vm1342, %v689, 0
    %v1588 = vsel %vm1342, %v691, 0
    %v1590 = vsel %vm1342, %v693, 0
    %v1592 = vsel %vm1342, %v695, 0
    %v1594 = vsel %vm1342, %v697, 0
    %v1596 = vsel %vm1342, %v699, 0
    %v1598 = vsel %vm1342, %v701, 0
    %v1600 = vsel %vm1342, %v703, 0
    %v1602 = vsel %vm1342, %v705, 0
    %v1604 = vsel %vm1342, %v707, 0
    %v1606 = vsel %vm1342, %v709, 0
    %v1608 = vsel %vm1342, %v711, 0
    %v1610 = vsel %vm1342, %v713, 0
    %v1612 = vsel %vm1342, %v715, 0
    %v1614 = vsel %vm1342, %v717, 0
    %v1616 = vsel %vm1342, %v719, 0
    %v1618 = vsel %vm1342, %v721, 0
    %v1620 = vsel %vm1342, %v723, 0
    %v1622 = vsel %vm1342, %v725, 0
    %v1624 = vsel %vm1342, %v727, 0
    %v1626 = vsel %vm1342, %v729, 0
    %v1628 = vsel %vm1342, %v731, 0
    %v1630 = vsel %vm1342, %v733, 0
    %v1632 = vsel %vm1342, %v735, 0
    %v1634 = vsel %vm1342, %v737, 0
    %v1636 = vsel %vm1342, %v739, 0
    %v1638 = vsel %vm1342, %v741, 0
    %v1640 = vsel %vm1342, %v743, 0
    %v1642 = vsel %vm1342, %v745, 0
    %v1644 = vsel %vm1342, %v747, 0
    %v1646 = vsel %vm1342, %v749, 0
    %v1648 = vsel %vm1342, %v751, 0
    %v1650 = vsel %vm1342, %v753, 0
    %v1652 = vsel %vm1342, %v755, 0
    %v1654 = vsel %vm1342, %v757, 0
    %v1656 = vsel %vm1342, %v759, 0
    %v1658 = vsel %vm1342, %v761, 0
    %v1660 = vsel %vm1342, %v763, 0
    %v1662 = vsel %vm1342, %v765, 0
    %v1664 = vsel %vm1342, %v767, 0
    %v1666 = vsel %vm1342, %v769, 0
    %v1668 = vsel %vm1342, %v771, 0
    %v1670 = vsel %vm1342, %v773, 0
    %v1672 = vsel %vm1342, %v775, 0
    %v1674 = vsel %vm1342, %v777, 0
    %v1676 = vsel %vm1342, %v779, 0
    %v1678 = vsel %vm1342, %v781, 0
    %v1680 = vsel %vm1342, %v783, 0
    %v1682 = vsel %vm1342, %v785, 0
    %v1684 = vsel %vm1342, %v787, 0
    %v1686 = vsel %vm1342, %v789, 0
    %v1688 = vsel %vm1342, %v791, 0
    %v1690 = vsel %vm1342, %v793, 0
    %v1692 = vsel %vm1342, %v795, 0
    %v1694 = vsel %vm1342, %v797, 0
    %v1696 = vsel %vm1342, %v799, 0
    %v1698 = vsel %vm1342, %v801, 0
    %v1700 = vsel %vm1342, %v803, 0
    %v1702 = vsel %vm1342, %v805, 0
    %v1704 = vsel %vm1342, %v807, 0
    %v1706 = vsel %vm1342, %v809, 0
    %v1708 = vsel %vm1342, %v811, 0
    %v1710 = vsel %vm1342, %v813, 0
    %v1712 = vsel %vm1342, %v815, 0
    %v1714 = vsel %vm1342, %v817, 0
    %v1716 = vsel %vm1342, %v819, 0
    %v1718 = vsel %vm1342, %v821, 0
    %v1720 = vsel %vm1342, %v823, 0
    %v1722 = vsel %vm1342, %v825, 0
    %v1724 = vsel %vm1342, %v827, 0
    %v1726 = vsel %vm1342, %v829, 0
    %v1728 = vsel %vm1342, %v831, 0
    %v1730 = vsel %vm1342, %v833, 0
    %v1732 = vsel %vm1342, %v835, 0
    %v1734 = vsel %vm1342, %v837, 0
    %v1736 = vsel %vm1342, %v839, 0
    %v1738 = vsel %vm1342, %v841, 0
    %v1740 = vsel %vm1342, %v843, 0
    %v1742 = vsel %vm1342, %v845, 0
    %v1744 = vsel %vm1342, %v847, 0
    %v1746 = vsel %vm1342, %v849, 0
    %v1748 = vsel %vm1342, %v851, 0
    %v1750 = vsel %vm1342, %v853, 0
    %v1752 = vsel %vm1342, %v855, 0
    %v1754 = vsel %vm1342, %v857, 0
    %v1756 = vsel %vm1342, %v859, 0
    %v1758 = vsel %vm1342, %v861, 0
    %v1760 = vsel %vm1342, %v863, 0
    %v1762 = vsel %vm1342, %v865, 0
    %v1764 = vsel %vm1342, %v867, 0
    %v1766 = vsel %vm1342, %v869, 0
    %v1768 = vsel %vm1342, %v871, 0
    %v1770 = vsel %vm1342, %v873, 0
    %v1772 = vsel %vm1342, %v875, 0
    %v1774 = vsel %vm1342, %v877, 0
    %v1776 = vsel %vm1342, %v879, 0
    %v1778 = vsel %vm1342, %v881, 0
    %v1780 = vsel %vm1342, %v883, 0
    %v1782 = vsel %vm1342, %v885, 0
    %v1784 = vsel %vm1342, %v887, 0
    %v1786 = vsel %vm1342, %v889, 0
    %v1788 = vsel %vm1342, %v891, 0
    %v1790 = vsel %vm1342, %v893, 0
    %v1792 = vsel %vm1342, %v895, 0
    %v1794 = vsel %vm1342, %v897, 0
    %v1796 = vsel %vm1342, %v899, 0
    %v1798 = vsel %vm1342, %v901, 0
    %v1800 = vsel %vm1342, %v903, 0
    %v1802 = vsel %vm1342, %v905, 0
    %v1805 = vsel %vm1342, %v908, 0
    %1807 = vmatprep.subr.mxu0 0.0
    %1808 = vmatpush1.msra.mxu0 %v1487
    %1809 = vmatprep.subr.mxu0 0.0
    %1810 = vmatpush1.msra.mxu0 %v1488
    %1811 = vmatprep.subr.mxu0 0.0
    %1812 = vmatpush1.msra.mxu0 %v1489
    %1813 = vmatprep.subr.mxu0 0.0
    %1814 = vmatpush1.msra.mxu0 %v1490
    %1815 = vmatprep.subr.mxu0 0.0
    %1816 = vmatpush1.msra.mxu0 %v1491
    %1817 = vmatprep.subr.mxu0 0.0
    %1818 = vmatpush1.msra.mxu0 %v1492
    %1819 = vmatprep.subr.mxu0 0.0
    %1820 = vmatpush1.msra.mxu0 %v1493
    %1821 = vmatprep.subr.mxu0 0.0
    %1822 = vmatpush1.msra.mxu0 %v1494
    %1823 = vmatprep.subr.mxu0 0.0
    %1824 = vmatpush1.msra.mxu0 %v1495
    %1825 = vmatprep.subr.mxu0 0.0
    %1826 = vmatpush1.msra.mxu0 %v1496
    %1827 = vmatprep.subr.mxu0 0.0
    %1828 = vmatpush1.msra.mxu0 %v1497
    %1829 = vmatprep.subr.mxu0 0.0
    %1830 = vmatpush1.msra.mxu0 %v1498
    %1831 = vmatprep.subr.mxu0 0.0
    %1832 = vmatpush1.msra.mxu0 %v1499
    %1833 = vmatprep.subr.mxu0 0.0
    %1834 = vmatpush1.msra.mxu0 %v1500
    %1835 = vmatprep.subr.mxu0 0.0
    %1836 = vmatpush1.msra.mxu0 %v1501
    %1837 = vmatprep.subr.mxu0 0.0
    %1838 = vmatpush1.msra.mxu0 %v1502
    %1839 = vmatprep.subr.mxu0 0.0
    %1840 = vmatpush1.msra.mxu0 %v1503
    %1841 = vmatprep.subr.mxu0 0.0
    %1842 = vmatpush1.msra.mxu0 %v1504
    %1843 = vmatprep.subr.mxu0 0.0
    %1844 = vmatpush1.msra.mxu0 %v1505
    %1845 = vmatprep.subr.mxu0 0.0
    %1846 = vmatpush1.msra.mxu0 %v1506
    %1847 = vmatprep.subr.mxu0 0.0
    %1848 = vmatpush1.msra.mxu0 %v1507
    %1849 = vmatprep.subr.mxu0 0.0
    %1850 = vmatpush1.msra.mxu0 %v1508
    %1851 = vmatprep.subr.mxu0 0.0
    %1852 = vmatpush1.msra.mxu0 %v1509
    %1853 = vmatprep.subr.mxu0 0.0
    %1854 = vmatpush1.msra.mxu0 %v1510
    %1855 = vmatprep.subr.mxu0 0.0
    %1856 = vmatpush1.msra.mxu0 0.0
    %1857 = vmatprep.subr.mxu0 0.0
    %1858 = vmatpush1.msra.mxu0 0.0
    %1859 = vmatprep.subr.mxu0 0.0
    %1860 = vmatpush1.msra.mxu0 0.0
    %1861 = vmatprep.subr.mxu0 0.0
    %1862 = vmatpush1.msra.mxu0 0.0
    %1863 = vmatprep.subr.mxu0 0.0
    %1864 = vmatpush1.msra.mxu0 0.0
    %1865 = vmatprep.subr.mxu0 0.0
    %1866 = vmatpush1.msra.mxu0 0.0
    %1867 = vmatprep.subr.mxu0 0.0
    %1868 = vmatpush1.msra.mxu0 0.0
    %1869 = vmatprep.subr.mxu0 0.0
    %1870 = vmatpush1.msra.mxu0 0.0
    %1871 = vmatprep.mubr.f32.mxu0 %v1518
    %1872 = vmatmul.mubr.f32.gmra.mrb[0].mxu0 %v1343
    %v1873 = vpop.f32.mrb[0].mxu0
    %v1874 = vadd.f32 %v1516, %v1873
    %v1875 = vpop.f32.mrb[0].mxu0
    %1876 = vmatprep.mubr.f32.mxu0 %v1520
    %1877 = vmatmul.mubr.f32.gmra.mrb[0].mxu0 %v1344
    %v1878 = vpop.f32.mrb[0].mxu0
    %v1879 = vadd.f32 %v1516, %v1878
    %v1880 = vpop.f32.mrb[0].mxu0
    %1881 = vmatprep.mubr.f32.mxu0 %v1522
    %1882 = vmatmul.mubr.f32.gmra.mrb[0].mxu0 %v1345
    %v1883 = vpop.f32.mrb[0].mxu0
    %v1884 = vadd.f32 %v1516, %v1883
    %v1885 = vpop.f32.mrb[0].mxu0
    %1886 = vmatprep.mubr.f32.mxu0 %v1524
    %1887 = vmatmul.mubr.f32.gmra.mrb[0].mxu0 %v1346
    %v1888 = vpop.f32.mrb[0].mxu0
    %v1889 = vadd.f32 %v1516, %v1888
    %v1890 = vpop.f32.mrb[0].mxu0
    %1891 = vmatprep.mubr.f32.mxu0 %v1526
    %1892 = vmatmul.mubr.f32.gmra.mrb[0].mxu0 %v1347
    %v1893 = vpop.f32.mrb[0].mxu0
    %v1894 = vadd.f32 %v1516, %v1893
    %v1895 = vpop.f32.mrb[0].mxu0
    %1896 = vmatprep.mubr.f32.mxu0 %v1528
    %1897 = vmatmul.mubr.f32.gmra.mrb[0].mxu0 %v1348
    %v1898 = vpop.f32.mrb[0].mxu0
    %v1899 = vadd.f32 %v1516, %v1898
    %v1900 = vpop.f32.mrb[0].mxu0
    %1901 = vmatprep.mubr.f32.mxu0 %v1530
    %1902 = vmatmul.mubr.f32.gmra.mrb[0].mxu0 %v1349
    %v1903 = vpop.f32.mrb[0].mxu0
    %v1904 = vadd.f32 %v1516, %v1903
    %v1905 = vpop.f32.mrb[0].mxu0
    %1906 = vmatprep.mubr.f32.mxu0 %v1532
    %1907 = vmatmul.mubr.f32.gmra.mrb[0].mxu0 %v1350
    %v1908 = vpop.f32.mrb[0].mxu0
    %v1909 = vadd.f32 %v1516, %v1908
    %v1910 = vpop.f32.mrb[0].mxu0
    %1911 = vmatprep.mubr.f32.mxu0 %v1534
    %1912 = vmatmul.mubr.f32.gmra.mrb[0].mxu0 %v1351
    %v1913 = vpop.f32.mrb[0].mxu0
    %v1914 = vadd.f32 %v1516, %v1913
    %v1915 = vpop.f32.mrb[0].mxu0
    %1916 = vmatprep.mubr.f32.mxu0 %v1536
    %1917 = vmatmul.mubr.f32.gmra.mrb[0].mxu0 %v1352
    %v1918 = vpop.f32.mrb[0].mxu0
    %v1919 = vadd.f32 %v1516, %v1918
    %v1920 = vpop.f32.mrb[0].mxu0
    %1921 = vmatprep.mubr.f32.mxu0 %v1538
    %1922 = vmatmul.mubr.f32.gmra.mrb[0].mxu0 %v1353
    %v1923 = vpop.f32.mrb[0].mxu0
    %v1924 = vadd.f32 %v1516, %v1923
    %v1925 = vpop.f32.mrb[0].mxu0
    %1926 = vmatprep.mubr.f32.mxu0 %v1540
    %1927 = vmatmul.mubr.f32.gmra.mrb[0].mxu0 %v1354
    %v1928 = vpop.f32.mrb[0].mxu0
    %v1929 = vadd.f32 %v1516, %v1928
    %v1930 = vpop.f32.mrb[0].mxu0
    %1931 = vmatprep.mubr.f32.mxu0 %v1542
    %1932 = vmatmul.mubr.f32.gmra.mrb[0].mxu0 %v1355
    %v1933 = vpop.f32.mrb[0].mxu0
    %v1934 = vadd.f32 %v1516, %v1933
    %v1935 = vpop.f32.mrb[0].mxu0
    %1936 = vmatprep.mubr.f32.mxu0 %v1544
    %1937 = vmatmul.mubr.f32.gmra.mrb[0].mxu0 %v1356
    %v1938 = vpop.f32.mrb[0].mxu0
    %v1939 = vadd.f32 %v1516, %v1938
    %v1940 = vpop.f32.mrb[0].mxu0
    %1941 = vmatprep.mubr.f32.mxu0 %v1546
    %1942 = vmatmul.mubr.f32.gmra.mrb[0].mxu0 %v1357
    %v1943 = vpop.f32.mrb[0].mxu0
    %v1944 = vadd.f32 %v1516, %v1943
    %v1945 = vpop.f32.mrb[0].mxu0
    %1946 = vmatprep.mubr.f32.mxu0 %v1548
    %1947 = vmatmul.mubr.f32.gmra.mrb[0].mxu0 %v1358
    %v1948 = vpop.f32.mrb[0].mxu0
    %v1949 = vadd.f32 %v1516, %v1948
    %v1950 = vpop.f32.mrb[0].mxu0
    %1951 = vmatprep.mubr.f32.mxu0 %v1550
    %1952 = vmatmul.mubr.f32.gmra.mrb[0].mxu0 %v1359
    %v1953 = vpop.f32.mrb[0].mxu0
    %v1954 = vadd.f32 %v1516, %v1953
    %v1955 = vpop.f32.mrb[0].mxu0
    %1956 = vmatprep.mubr.f32.mxu0 %v1552
    %1957 = vmatmul.mubr.f32.gmra.mrb[0].mxu0 %v1360
    %v1958 = vpop.f32.mrb[0].mxu0
    %v1959 = vadd.f32 %v1516, %v1958
    %v1960 = vpop.f32.mrb[0].mxu0
    %1961 = vmatprep.mubr.f32.mxu0 %v1554
    %1962 = vmatmul.mubr.f32.gmra.mrb[0].mxu0 %v1361
    %v1963 = vpop.f32.mrb[0].mxu0
    %v1964 = vadd.f32 %v1516, %v1963
    %v1965 = vpop.f32.mrb[0].mxu0
    %1966 = vmatprep.mubr.f32.mxu0 %v1556
    %1967 = vmatmul.mubr.f32.gmra.mrb[0].mxu0 %v1362
    %v1968 = vpop.f32.mrb[0].mxu0
    %v1969 = vadd.f32 %v1516, %v1968
    %v1970 = vpop.f32.mrb[0].mxu0
    %1971 = vmatprep.mubr.f32.mxu0 %v1558
    %1972 = vmatmul.mubr.f32.gmra.mrb[0].mxu0 %v1363
    %v1973 = vpop.f32.mrb[0].mxu0
    %v1974 = vadd.f32 %v1516, %v1973
    %v1975 = vpop.f32.mrb[0].mxu0
    %1976 = vmatprep.mubr.f32.mxu0 %v1560
    %1977 = vmatmul.mubr.f32.gmra.mrb[0].mxu0 %v1364
    %v1978 = vpop.f32.mrb[0].mxu0
    %v1979 = vadd.f32 %v1516, %v1978
    %v1980 = vpop.f32.mrb[0].mxu0
    %1981 = vmatprep.mubr.f32.mxu0 %v1562
    %1982 = vmatmul.mubr.f32.gmra.mrb[0].mxu0 %v1365
    %v1983 = vpop.f32.mrb[0].mxu0
    %v1984 = vadd.f32 %v1516, %v1983
    %v1985 = vpop.f32.mrb[0].mxu0
    %1986 = vmatprep.mubr.f32.mxu0 %v1564
    %1987 = vmatmul.mubr.f32.gmra.mrb[0].mxu0 %v1366
    %v1988 = vpop.f32.mrb[0].mxu0
    %v1989 = vadd.f32 %v1516, %v1988
    %v1990 = vpop.f32.mrb[0].mxu0
    %1991 = vmatprep.mubr.f32.mxu0 %v1566
    %1992 = vmatmul.mubr.f32.gmra.mrb[0].mxu0 %v1367
    %v1993 = vpop.f32.mrb[0].mxu0
    %v1994 = vadd.f32 %v1516, %v1993
    %v1995 = vpop.f32.mrb[0].mxu0
    %1996 = vmatprep.mubr.f32.mxu0 %v1568
    %1997 = vmatmul.mubr.f32.gmra.mrb[0].mxu0 %v1368
    %v1998 = vpop.f32.mrb[0].mxu0
    %v1999 = vadd.f32 %v1516, %v1998
    %v2000 = vpop.f32.mrb[0].mxu0
    %2001 = vmatprep.mubr.f32.mxu0 %v1570
    %2002 = vmatmul.mubr.f32.gmra.mrb[0].mxu0 %v1369
    %v2003 = vpop.f32.mrb[0].mxu0
    %v2004 = vadd.f32 %v1516, %v2003
    %v2005 = vpop.f32.mrb[0].mxu0
    %2006 = vmatprep.mubr.f32.mxu0 %v1572
    %2007 = vmatmul.mubr.f32.gmra.mrb[0].mxu0 %v1370
    %v2008 = vpop.f32.mrb[0].mxu0
    %v2009 = vadd.f32 %v1516, %v2008
    %v2010 = vpop.f32.mrb[0].mxu0
    %2011 = vmatprep.mubr.f32.mxu0 %v1574
    %2012 = vmatmul.mubr.f32.gmra.mrb[0].mxu0 %v1371
    %v2013 = vpop.f32.mrb[0].mxu0
    %v2014 = vadd.f32 %v1516, %v2013
    %v2015 = vpop.f32.mrb[0].mxu0
    %2016 = vmatprep.mubr.f32.mxu0 %v1576
    %2017 = vmatmul.mubr.f32.gmra.mrb[0].mxu0 %v1372
    %v2018 = vpop.f32.mrb[0].mxu0
    %v2019 = vadd.f32 %v1516, %v2018
    %v2020 = vpop.f32.mrb[0].mxu0
    %2021 = vmatprep.mubr.f32.mxu0 %v1578
    %2022 = vmatmul.mubr.f32.gmra.mrb[0].mxu0 %v1373
    %v2023 = vpop.f32.mrb[0].mxu0
    %v2024 = vadd.f32 %v1516, %v2023
    %v2025 = vpop.f32.mrb[0].mxu0
    %2026 = vmatprep.mubr.f32.mxu0 %v1580
    %2027 = vmatmul.mubr.f32.gmra.mrb[0].mxu0 %v1374
    %v2028 = vpop.f32.mrb[0].mxu0
    %v2029 = vadd.f32 %v1516, %v2028
    %v2030 = vpop.f32.mrb[0].mxu0
    %2031 = vmatprep.mubr.f32.mxu0 %v1582
    %2032 = vmatmul.mubr.f32.gmra.mrb[0].mxu0 %v1375
    %v2033 = vpop.f32.mrb[0].mxu0
    %v2034 = vadd.f32 %v1516, %v2033
    %v2035 = vpop.f32.mrb[0].mxu0
    %2036 = vmatprep.mubr.f32.mxu0 %v1584
    %2037 = vmatmul.mubr.f32.gmra.mrb[0].mxu0 %v1376
    %v2038 = vpop.f32.mrb[0].mxu0
    %v2039 = vadd.f32 %v1516, %v2038
    %v2040 = vpop.f32.mrb[0].mxu0
    %2041 = vmatprep.mubr.f32.mxu0 %v1586
    %2042 = vmatmul.mubr.f32.gmra.mrb[0].mxu0 %v1377
    %v2043 = vpop.f32.mrb[0].mxu0
    %v2044 = vadd.f32 %v1516, %v2043
    %v2045 = vpop.f32.mrb[0].mxu0
    %2046 = vmatprep.mubr.f32.mxu0 %v1588
    %2047 = vmatmul.mubr.f32.gmra.mrb[0].mxu0 %v1378
    %v2048 = vpop.f32.mrb[0].mxu0
    %v2049 = vadd.f32 %v1516, %v2048
    %v2050 = vpop.f32.mrb[0].mxu0
    %2051 = vmatprep.mubr.f32.mxu0 %v1590
    %2052 = vmatmul.mubr.f32.gmra.mrb[0].mxu0 %v1379
    %v2053 = vpop.f32.mrb[0].mxu0
    %v2054 = vadd.f32 %v1516, %v2053
    %v2055 = vpop.f32.mrb[0].mxu0
    %2056 = vmatprep.mubr.f32.mxu0 %v1592
    %2057 = vmatmul.mubr.f32.gmra.mrb[0].mxu0 %v1380
    %v2058 = vpop.f32.mrb[0].mxu0
    %v2059 = vadd.f32 %v1516, %v2058
    %v2060 = vpop.f32.mrb[0].mxu0
    %2061 = vmatprep.mubr.f32.mxu0 %v1594
    %2062 = vmatmul.mubr.f32.gmra.mrb[0].mxu0 %v1381
    %v2063 = vpop.f32.mrb[0].mxu0
    %v2064 = vadd.f32 %v1516, %v2063
    %v2065 = vpop.f32.mrb[0].mxu0
    %2066 = vmatprep.mubr.f32.mxu0 %v1596
    %2067 = vmatmul.mubr.f32.gmra.mrb[0].mxu0 %v1382
    %v2068 = vpop.f32.mrb[0].mxu0
    %v2069 = vadd.f32 %v1516, %v2068
    %v2070 = vpop.f32.mrb[0].mxu0
    %2071 = vmatprep.mubr.f32.mxu0 %v1598
    %2072 = vmatmul.mubr.f32.gmra.mrb[0].mxu0 %v1383
    %v2073 = vpop.f32.mrb[0].mxu0
    %v2074 = vadd.f32 %v1516, %v2073
    %v2075 = vpop.f32.mrb[0].mxu0
    %2076 = vmatprep.mubr.f32.mxu0 %v1600
    %2077 = vmatmul.mubr.f32.gmra.mrb[0].mxu0 %v1384
    %v2078 = vpop.f32.mrb[0].mxu0
    %v2079 = vadd.f32 %v1516, %v2078
    %v2080 = vpop.f32.mrb[0].mxu0
    %2081 = vmatprep.mubr.f32.mxu0 %v1602
    %2082 = vmatmul.mubr.f32.gmra.mrb[0].mxu0 %v1385
    %v2083 = vpop.f32.mrb[0].mxu0
    %v2084 = vadd.f32 %v1516, %v2083
    %v2085 = vpop.f32.mrb[0].mxu0
    %2086 = vmatprep.mubr.f32.mxu0 %v1604
    %2087 = vmatmul.mubr.f32.gmra.mrb[0].mxu0 %v1386
    %v2088 = vpop.f32.mrb[0].mxu0
    %v2089 = vadd.f32 %v1516, %v2088
    %v2090 = vpop.f32.mrb[0].mxu0
    %2091 = vmatprep.mubr.f32.mxu0 %v1606
    %2092 = vmatmul.mubr.f32.gmra.mrb[0].mxu0 %v1387
    %v2093 = vpop.f32.mrb[0].mxu0
    %v2094 = vadd.f32 %v1516, %v2093
    %v2095 = vpop.f32.mrb[0].mxu0
    %2096 = vmatprep.mubr.f32.mxu0 %v1608
    %2097 = vmatmul.mubr.f32.gmra.mrb[0].mxu0 %v1388
    %v2098 = vpop.f32.mrb[0].mxu0
    %v2099 = vadd.f32 %v1516, %v2098
    %v2100 = vpop.f32.mrb[0].mxu0
    %2101 = vmatprep.mubr.f32.mxu0 %v1610
    %2102 = vmatmul.mubr.f32.gmra.mrb[0].mxu0 %v1389
    %v2103 = vpop.f32.mrb[0].mxu0
    %v2104 = vadd.f32 %v1516, %v2103
    %v2105 = vpop.f32.mrb[0].mxu0
    %2106 = vmatprep.mubr.f32.mxu0 %v1612
    %2107 = vmatmul.mubr.f32.gmra.mrb[0].mxu0 %v1390
    %v2108 = vpop.f32.mrb[0].mxu0
    %v2109 = vadd.f32 %v1516, %v2108
    %v2110 = vpop.f32.mrb[0].mxu0
    %2111 = vmatprep.mubr.f32.mxu0 %v1614
    %2112 = vmatmul.mubr.f32.gmra.mrb[0].mxu0 %v1391
    %v2113 = vpop.f32.mrb[0].mxu0
    %v2114 = vadd.f32 %v1516, %v2113
    %v2115 = vpop.f32.mrb[0].mxu0
    %2116 = vmatprep.mubr.f32.mxu0 %v1616
    %2117 = vmatmul.mubr.f32.gmra.mrb[0].mxu0 %v1392
    %v2118 = vpop.f32.mrb[0].mxu0
    %v2119 = vadd.f32 %v1516, %v2118
    %v2120 = vpop.f32.mrb[0].mxu0
    %2121 = vmatprep.mubr.f32.mxu0 %v1618
    %2122 = vmatmul.mubr.f32.gmra.mrb[0].mxu0 %v1393
    %v2123 = vpop.f32.mrb[0].mxu0
    %v2124 = vadd.f32 %v1516, %v2123
    %v2125 = vpop.f32.mrb[0].mxu0
    %2126 = vmatprep.mubr.f32.mxu0 %v1620
    %2127 = vmatmul.mubr.f32.gmra.mrb[0].mxu0 %v1394
    %v2128 = vpop.f32.mrb[0].mxu0
    %v2129 = vadd.f32 %v1516, %v2128
    %v2130 = vpop.f32.mrb[0].mxu0
    %2131 = vmatprep.mubr.f32.mxu0 %v1622
    %2132 = vmatmul.mubr.f32.gmra.mrb[0].mxu0 %v1395
    %v2133 = vpop.f32.mrb[0].mxu0
    %v2134 = vadd.f32 %v1516, %v2133
    %v2135 = vpop.f32.mrb[0].mxu0
    %2136 = vmatprep.mubr.f32.mxu0 %v1624
    %2137 = vmatmul.mubr.f32.gmra.mrb[0].mxu0 %v1396
    %v2138 = vpop.f32.mrb[0].mxu0
    %v2139 = vadd.f32 %v1516, %v2138
    %v2140 = vpop.f32.mrb[0].mxu0
    %2141 = vmatprep.mubr.f32.mxu0 %v1626
    %2142 = vmatmul.mubr.f32.gmra.mrb[0].mxu0 %v1397
    %v2143 = vpop.f32.mrb[0].mxu0
    %v2144 = vadd.f32 %v1516, %v2143
    %v2145 = vpop.f32.mrb[0].mxu0
    %2146 = vmatprep.mubr.f32.mxu0 %v1628
    %2147 = vmatmul.mubr.f32.gmra.mrb[0].mxu0 %v1398
    %v2148 = vpop.f32.mrb[0].mxu0
    %v2149 = vadd.f32 %v1516, %v2148
    %v2150 = vpop.f32.mrb[0].mxu0
    %2151 = vmatprep.mubr.f32.mxu0 %v1630
    %2152 = vmatmul.mubr.f32.gmra.mrb[0].mxu0 %v1399
    %v2153 = vpop.f32.mrb[0].mxu0
    %v2154 = vadd.f32 %v1516, %v2153
    %v2155 = vpop.f32.mrb[0].mxu0
    %2156 = vmatprep.mubr.f32.mxu0 %v1632
    %2157 = vmatmul.mubr.f32.gmra.mrb[0].mxu0 %v1400
    %v2158 = vpop.f32.mrb[0].mxu0
    %v2159 = vadd.f32 %v1516, %v2158
    %v2160 = vpop.f32.mrb[0].mxu0
    %2161 = vmatprep.mubr.f32.mxu0 %v1634
    %2162 = vmatmul.mubr.f32.gmra.mrb[0].mxu0 %v1401
    %v2163 = vpop.f32.mrb[0].mxu0
    %v2164 = vadd.f32 %v1516, %v2163
    %v2165 = vpop.f32.mrb[0].mxu0
    %2166 = vmatprep.mubr.f32.mxu0 %v1636
    %2167 = vmatmul.mubr.f32.gmra.mrb[0].mxu0 %v1402
    %v2168 = vpop.f32.mrb[0].mxu0
    %v2169 = vadd.f32 %v1516, %v2168
    %v2170 = vpop.f32.mrb[0].mxu0
    %2171 = vmatprep.mubr.f32.mxu0 %v1638
    %2172 = vmatmul.mubr.f32.gmra.mrb[0].mxu0 %v1403
    %v2173 = vpop.f32.mrb[0].mxu0
    %v2174 = vadd.f32 %v1516, %v2173
    %v2175 = vpop.f32.mrb[0].mxu0
    %2176 = vmatprep.mubr.f32.mxu0 %v1640
    %2177 = vmatmul.mubr.f32.gmra.mrb[0].mxu0 %v1404
    %v2178 = vpop.f32.mrb[0].mxu0
    %v2179 = vadd.f32 %v1516, %v2178
    %v2180 = vpop.f32.mrb[0].mxu0
    %2181 = vmatprep.mubr.f32.mxu0 %v1642
    %2182 = vmatmul.mubr.f32.gmra.mrb[0].mxu0 %v1405
    %v2183 = vpop.f32.mrb[0].mxu0
    %v2184 = vadd.f32 %v1516, %v2183
    %v2185 = vpop.f32.mrb[0].mxu0
    %2186 = vmatprep.mubr.f32.mxu0 %v1644
    %2187 = vmatmul.mubr.f32.gmra.mrb[0].mxu0 %v1406
    %v2188 = vpop.f32.mrb[0].mxu0
    %v2189 = vadd.f32 %v1516, %v2188
    %v2190 = vpop.f32.mrb[0].mxu0
    %2191 = vmatprep.mubr.f32.mxu0 %v1646
    %2192 = vmatmul.mubr.f32.gmra.mrb[0].mxu0 %v1407
    %v2193 = vpop.f32.mrb[0].mxu0
    %v2194 = vadd.f32 %v1516, %v2193
    %v2195 = vpop.f32.mrb[0].mxu0
    %2196 = vmatprep.mubr.f32.mxu0 %v1648
    %2197 = vmatmul.mubr.f32.gmra.mrb[0].mxu0 %v1408
    %v2198 = vpop.f32.mrb[0].mxu0
    %v2199 = vadd.f32 %v1516, %v2198
    %v2200 = vpop.f32.mrb[0].mxu0
    %2201 = vmatprep.mubr.f32.mxu0 %v1650
    %2202 = vmatmul.mubr.f32.gmra.mrb[0].mxu0 %v1409
    %v2203 = vpop.f32.mrb[0].mxu0
    %v2204 = vadd.f32 %v1516, %v2203
    %v2205 = vpop.f32.mrb[0].mxu0
    %2206 = vmatprep.mubr.f32.mxu0 %v1652
    %2207 = vmatmul.mubr.f32.gmra.mrb[0].mxu0 %v1410
    %v2208 = vpop.f32.mrb[0].mxu0
    %v2209 = vadd.f32 %v1516, %v2208
    %v2210 = vpop.f32.mrb[0].mxu0
    %2211 = vmatprep.mubr.f32.mxu0 %v1654
    %2212 = vmatmul.mubr.f32.gmra.mrb[0].mxu0 %v1411
    %v2213 = vpop.f32.mrb[0].mxu0
    %v2214 = vadd.f32 %v1516, %v2213
    %v2215 = vpop.f32.mrb[0].mxu0
    %2216 = vmatprep.mubr.f32.mxu0 %v1656
    %2217 = vmatmul.mubr.f32.gmra.mrb[0].mxu0 %v1412
    %v2218 = vpop.f32.mrb[0].mxu0
    %v2219 = vadd.f32 %v1516, %v2218
    %v2220 = vpop.f32.mrb[0].mxu0
    %2221 = vmatprep.mubr.f32.mxu0 %v1658
    %2222 = vmatmul.mubr.f32.gmra.mrb[0].mxu0 %v1413
    %v2223 = vpop.f32.mrb[0].mxu0
    %v2224 = vadd.f32 %v1516, %v2223
    %v2225 = vpop.f32.mrb[0].mxu0
    %2226 = vmatprep.mubr.f32.mxu0 %v1660
    %2227 = vmatmul.mubr.f32.gmra.mrb[0].mxu0 %v1414
    %v2228 = vpop.f32.mrb[0].mxu0
    %v2229 = vadd.f32 %v1516, %v2228
    %v2230 = vpop.f32.mrb[0].mxu0
    %2231 = vmatprep.mubr.f32.mxu0 %v1662
    %2232 = vmatmul.mubr.f32.gmra.mrb[0].mxu0 %v1415
    %v2233 = vpop.f32.mrb[0].mxu0
    %v2234 = vadd.f32 %v1516, %v2233
    %v2235 = vpop.f32.mrb[0].mxu0
    %2236 = vmatprep.mubr.f32.mxu0 %v1664
    %2237 = vmatmul.mubr.f32.gmra.mrb[0].mxu0 %v1416
    %v2238 = vpop.f32.mrb[0].mxu0
    %v2239 = vadd.f32 %v1516, %v2238
    %v2240 = vpop.f32.mrb[0].mxu0
    %2241 = vmatprep.mubr.f32.mxu0 %v1666
    %2242 = vmatmul.mubr.f32.gmra.mrb[0].mxu0 %v1417
    %v2243 = vpop.f32.mrb[0].mxu0
    %v2244 = vadd.f32 %v1516, %v2243
    %v2245 = vpop.f32.mrb[0].mxu0
    %2246 = vmatprep.mubr.f32.mxu0 %v1668
    %2247 = vmatmul.mubr.f32.gmra.mrb[0].mxu0 %v1418
    %v2248 = vpop.f32.mrb[0].mxu0
    %v2249 = vadd.f32 %v1516, %v2248
    %v2250 = vpop.f32.mrb[0].mxu0
    %2251 = vmatprep.mubr.f32.mxu0 %v1670
    %2252 = vmatmul.mubr.f32.gmra.mrb[0].mxu0 %v1419
    %v2253 = vpop.f32.mrb[0].mxu0
    %v2254 = vadd.f32 %v1516, %v2253
    %v2255 = vpop.f32.mrb[0].mxu0
    %2256 = vmatprep.mubr.f32.mxu0 %v1672
    %2257 = vmatmul.mubr.f32.gmra.mrb[0].mxu0 %v1420
    %v2258 = vpop.f32.mrb[0].mxu0
    %v2259 = vadd.f32 %v1516, %v2258
    %v2260 = vpop.f32.mrb[0].mxu0
    %2261 = vmatprep.mubr.f32.mxu0 %v1674
    %2262 = vmatmul.mubr.f32.gmra.mrb[0].mxu0 %v1421
    %v2263 = vpop.f32.mrb[0].mxu0
    %v2264 = vadd.f32 %v1516, %v2263
    %v2265 = vpop.f32.mrb[0].mxu0
    %2266 = vmatprep.mubr.f32.mxu0 %v1676
    %2267 = vmatmul.mubr.f32.gmra.mrb[0].mxu0 %v1422
    %v2268 = vpop.f32.mrb[0].mxu0
    %v2269 = vadd.f32 %v1516, %v2268
    %v2270 = vpop.f32.mrb[0].mxu0
    %2271 = vmatprep.mubr.f32.mxu0 %v1678
    %2272 = vmatmul.mubr.f32.gmra.mrb[0].mxu0 %v1423
    %v2273 = vpop.f32.mrb[0].mxu0
    %v2274 = vadd.f32 %v1516, %v2273
    %v2275 = vpop.f32.mrb[0].mxu0
    %2276 = vmatprep.mubr.f32.mxu0 %v1680
    %2277 = vmatmul.mubr.f32.gmra.mrb[0].mxu0 %v1424
    %v2278 = vpop.f32.mrb[0].mxu0
    %v2279 = vadd.f32 %v1516, %v2278
    %v2280 = vpop.f32.mrb[0].mxu0
    %2281 = vmatprep.mubr.f32.mxu0 %v1682
    %2282 = vmatmul.mubr.f32.gmra.mrb[0].mxu0 %v1425
    %v2283 = vpop.f32.mrb[0].mxu0
    %v2284 = vadd.f32 %v1516, %v2283
    %v2285 = vpop.f32.mrb[0].mxu0
    %2286 = vmatprep.mubr.f32.mxu0 %v1684
    %2287 = vmatmul.mubr.f32.gmra.mrb[0].mxu0 %v1426
    %v2288 = vpop.f32.mrb[0].mxu0
    %v2289 = vadd.f32 %v1516, %v2288
    %v2290 = vpop.f32.mrb[0].mxu0
    %2291 = vmatprep.mubr.f32.mxu0 %v1686
    %2292 = vmatmul.mubr.f32.gmra.mrb[0].mxu0 %v1427
    %v2293 = vpop.f32.mrb[0].mxu0
    %v2294 = vadd.f32 %v1516, %v2293
    %v2295 = vpop.f32.mrb[0].mxu0
    %2296 = vmatprep.mubr.f32.mxu0 %v1688
    %2297 = vmatmul.mubr.f32.gmra.mrb[0].mxu0 %v1428
    %v2298 = vpop.f32.mrb[0].mxu0
    %v2299 = vadd.f32 %v1516, %v2298
    %v2300 = vpop.f32.mrb[0].mxu0
    %2301 = vmatprep.mubr.f32.mxu0 %v1690
    %2302 = vmatmul.mubr.f32.gmra.mrb[0].mxu0 %v1429
    %v2303 = vpop.f32.mrb[0].mxu0
    %v2304 = vadd.f32 %v1516, %v2303
    %v2305 = vpop.f32.mrb[0].mxu0
    %2306 = vmatprep.mubr.f32.mxu0 %v1692
    %2307 = vmatmul.mubr.f32.gmra.mrb[0].mxu0 %v1430
    %v2308 = vpop.f32.mrb[0].mxu0
    %v2309 = vadd.f32 %v1516, %v2308
    %v2310 = vpop.f32.mrb[0].mxu0
    %2311 = vmatprep.mubr.f32.mxu0 %v1694
    %2312 = vmatmul.mubr.f32.gmra.mrb[0].mxu0 %v1431
    %v2313 = vpop.f32.mrb[0].mxu0
    %v2314 = vadd.f32 %v1516, %v2313
    %v2315 = vpop.f32.mrb[0].mxu0
    %2316 = vmatprep.mubr.f32.mxu0 %v1696
    %2317 = vmatmul.mubr.f32.gmra.mrb[0].mxu0 %v1432
    %v2318 = vpop.f32.mrb[0].mxu0
    %v2319 = vadd.f32 %v1516, %v2318
    %v2320 = vpop.f32.mrb[0].mxu0
    %2321 = vmatprep.mubr.f32.mxu0 %v1698
    %2322 = vmatmul.mubr.f32.gmra.mrb[0].mxu0 %v1433
    %v2323 = vpop.f32.mrb[0].mxu0
    %v2324 = vadd.f32 %v1516, %v2323
    %v2325 = vpop.f32.mrb[0].mxu0
    %2326 = vmatprep.mubr.f32.mxu0 %v1700
    %2327 = vmatmul.mubr.f32.gmra.mrb[0].mxu0 %v1434
    %v2328 = vpop.f32.mrb[0].mxu0
    %v2329 = vadd.f32 %v1516, %v2328
    %v2330 = vpop.f32.mrb[0].mxu0
    %2331 = vmatprep.mubr.f32.mxu0 %v1702
    %2332 = vmatmul.mubr.f32.gmra.mrb[0].mxu0 %v1435
    %v2333 = vpop.f32.mrb[0].mxu0
    %v2334 = vadd.f32 %v1516, %v2333
    %v2335 = vpop.f32.mrb[0].mxu0
    %2336 = vmatprep.mubr.f32.mxu0 %v1704
    %2337 = vmatmul.mubr.f32.gmra.mrb[0].mxu0 %v1436
    %v2338 = vpop.f32.mrb[0].mxu0
    %v2339 = vadd.f32 %v1516, %v2338
    %v2340 = vpop.f32.mrb[0].mxu0
    %2341 = vmatprep.mubr.f32.mxu0 %v1706
    %2342 = vmatmul.mubr.f32.gmra.mrb[0].mxu0 %v1437
    %v2343 = vpop.f32.mrb[0].mxu0
    %v2344 = vadd.f32 %v1516, %v2343
    %v2345 = vpop.f32.mrb[0].mxu0
    %2346 = vmatprep.mubr.f32.mxu0 %v1708
    %2347 = vmatmul.mubr.f32.gmra.mrb[0].mxu0 %v1438
    %v2348 = vpop.f32.mrb[0].mxu0
    %v2349 = vadd.f32 %v1516, %v2348
    %v2350 = vpop.f32.mrb[0].mxu0
    %2351 = vmatprep.mubr.f32.mxu0 %v1710
    %2352 = vmatmul.mubr.f32.gmra.mrb[0].mxu0 %v1439
    %v2353 = vpop.f32.mrb[0].mxu0
    %v2354 = vadd.f32 %v1516, %v2353
    %v2355 = vpop.f32.mrb[0].mxu0
    %2356 = vmatprep.mubr.f32.mxu0 %v1712
    %2357 = vmatmul.mubr.f32.gmra.mrb[0].mxu0 %v1440
    %v2358 = vpop.f32.mrb[0].mxu0
    %v2359 = vadd.f32 %v1516, %v2358
    %v2360 = vpop.f32.mrb[0].mxu0
    %2361 = vmatprep.mubr.f32.mxu0 %v1714
    %2362 = vmatmul.mubr.f32.gmra.mrb[0].mxu0 %v1441
    %v2363 = vpop.f32.mrb[0].mxu0
    %v2364 = vadd.f32 %v1516, %v2363
    %v2365 = vpop.f32.mrb[0].mxu0
    %2366 = vmatprep.mubr.f32.mxu0 %v1716
    %2367 = vmatmul.mubr.f32.gmra.mrb[0].mxu0 %v1442
    %v2368 = vpop.f32.mrb[0].mxu0
    %v2369 = vadd.f32 %v1516, %v2368
    %v2370 = vpop.f32.mrb[0].mxu0
    %2371 = vmatprep.mubr.f32.mxu0 %v1718
    %2372 = vmatmul.mubr.f32.gmra.mrb[0].mxu0 %v1443
    %v2373 = vpop.f32.mrb[0].mxu0
    %v2374 = vadd.f32 %v1516, %v2373
    %v2375 = vpop.f32.mrb[0].mxu0
    %2376 = vmatprep.mubr.f32.mxu0 %v1720
    %2377 = vmatmul.mubr.f32.gmra.mrb[0].mxu0 %v1444
    %v2378 = vpop.f32.mrb[0].mxu0
    %v2379 = vadd.f32 %v1516, %v2378
    %v2380 = vpop.f32.mrb[0].mxu0
    %2381 = vmatprep.mubr.f32.mxu0 %v1722
    %2382 = vmatmul.mubr.f32.gmra.mrb[0].mxu0 %v1445
    %v2383 = vpop.f32.mrb[0].mxu0
    %v2384 = vadd.f32 %v1516, %v2383
    %v2385 = vpop.f32.mrb[0].mxu0
    %2386 = vmatprep.mubr.f32.mxu0 %v1724
    %2387 = vmatmul.mubr.f32.gmra.mrb[0].mxu0 %v1446
    %v2388 = vpop.f32.mrb[0].mxu0
    %v2389 = vadd.f32 %v1516, %v2388
    %v2390 = vpop.f32.mrb[0].mxu0
    %2391 = vmatprep.mubr.f32.mxu0 %v1726
    %2392 = vmatmul.mubr.f32.gmra.mrb[0].mxu0 %v1447
    %v2393 = vpop.f32.mrb[0].mxu0
    %v2394 = vadd.f32 %v1516, %v2393
    %v2395 = vpop.f32.mrb[0].mxu0
    %2396 = vmatprep.mubr.f32.mxu0 %v1728
    %2397 = vmatmul.mubr.f32.gmra.mrb[0].mxu0 %v1448
    %v2398 = vpop.f32.mrb[0].mxu0
    %v2399 = vadd.f32 %v1516, %v2398
    %v2400 = vpop.f32.mrb[0].mxu0
    %2401 = vmatprep.mubr.f32.mxu0 %v1730
    %2402 = vmatmul.mubr.f32.gmra.mrb[0].mxu0 %v1449
    %v2403 = vpop.f32.mrb[0].mxu0
    %v2404 = vadd.f32 %v1516, %v2403
    %v2405 = vpop.f32.mrb[0].mxu0
    %2406 = vmatprep.mubr.f32.mxu0 %v1732
    %2407 = vmatmul.mubr.f32.gmra.mrb[0].mxu0 %v1450
    %v2408 = vpop.f32.mrb[0].mxu0
    %v2409 = vadd.f32 %v1516, %v2408
    %v2410 = vpop.f32.mrb[0].mxu0
    %2411 = vmatprep.mubr.f32.mxu0 %v1734
    %2412 = vmatmul.mubr.f32.gmra.mrb[0].mxu0 %v1451
    %v2413 = vpop.f32.mrb[0].mxu0
    %v2414 = vadd.f32 %v1516, %v2413
    %v2415 = vpop.f32.mrb[0].mxu0
    %2416 = vmatprep.mubr.f32.mxu0 %v1736
    %2417 = vmatmul.mubr.f32.gmra.mrb[0].mxu0 %v1452
    %v2418 = vpop.f32.mrb[0].mxu0
    %v2419 = vadd.f32 %v1516, %v2418
    %v2420 = vpop.f32.mrb[0].mxu0
    %2421 = vmatprep.mubr.f32.mxu0 %v1738
    %2422 = vmatmul.mubr.f32.gmra.mrb[0].mxu0 %v1453
    %v2423 = vpop.f32.mrb[0].mxu0
    %v2424 = vadd.f32 %v1516, %v2423
    %v2425 = vpop.f32.mrb[0].mxu0
    %2426 = vmatprep.mubr.f32.mxu0 %v1740
    %2427 = vmatmul.mubr.f32.gmra.mrb[0].mxu0 %v1454
    %v2428 = vpop.f32.mrb[0].mxu0
    %v2429 = vadd.f32 %v1516, %v2428
    %v2430 = vpop.f32.mrb[0].mxu0
    %2431 = vmatprep.mubr.f32.mxu0 %v1742
    %2432 = vmatmul.mubr.f32.gmra.mrb[0].mxu0 %v1455
    %v2433 = vpop.f32.mrb[0].mxu0
    %v2434 = vadd.f32 %v1516, %v2433
    %v2435 = vpop.f32.mrb[0].mxu0
    %2436 = vmatprep.mubr.f32.mxu0 %v1744
    %2437 = vmatmul.mubr.f32.gmra.mrb[0].mxu0 %v1456
    %v2438 = vpop.f32.mrb[0].mxu0
    %v2439 = vadd.f32 %v1516, %v2438
    %v2440 = vpop.f32.mrb[0].mxu0
    %2441 = vmatprep.mubr.f32.mxu0 %v1746
    %2442 = vmatmul.mubr.f32.gmra.mrb[0].mxu0 %v1457
    %v2443 = vpop.f32.mrb[0].mxu0
    %v2444 = vadd.f32 %v1516, %v2443
    %v2445 = vpop.f32.mrb[0].mxu0
    %2446 = vmatprep.mubr.f32.mxu0 %v1748
    %2447 = vmatmul.mubr.f32.gmra.mrb[0].mxu0 %v1458
    %v2448 = vpop.f32.mrb[0].mxu0
    %v2449 = vadd.f32 %v1516, %v2448
    %v2450 = vpop.f32.mrb[0].mxu0
    %2451 = vmatprep.mubr.f32.mxu0 %v1750
    %2452 = vmatmul.mubr.f32.gmra.mrb[0].mxu0 %v1459
    %v2453 = vpop.f32.mrb[0].mxu0
    %v2454 = vadd.f32 %v1516, %v2453
    %v2455 = vpop.f32.mrb[0].mxu0
    %2456 = vmatprep.mubr.f32.mxu0 %v1752
    %2457 = vmatmul.mubr.f32.gmra.mrb[0].mxu0 %v1460
    %v2458 = vpop.f32.mrb[0].mxu0
    %v2459 = vadd.f32 %v1516, %v2458
    %v2460 = vpop.f32.mrb[0].mxu0
    %2461 = vmatprep.mubr.f32.mxu0 %v1754
    %2462 = vmatmul.mubr.f32.gmra.mrb[0].mxu0 %v1461
    %v2463 = vpop.f32.mrb[0].mxu0
    %v2464 = vadd.f32 %v1516, %v2463
    %v2465 = vpop.f32.mrb[0].mxu0
    %2466 = vmatprep.mubr.f32.mxu0 %v1756
    %2467 = vmatmul.mubr.f32.gmra.mrb[0].mxu0 %v1462
    %v2468 = vpop.f32.mrb[0].mxu0
    %v2469 = vadd.f32 %v1516, %v2468
    %v2470 = vpop.f32.mrb[0].mxu0
    %2471 = vmatprep.mubr.f32.mxu0 %v1758
    %2472 = vmatmul.mubr.f32.gmra.mrb[0].mxu0 %v1463
    %v2473 = vpop.f32.mrb[0].mxu0
    %v2474 = vadd.f32 %v1516, %v2473
    %v2475 = vpop.f32.mrb[0].mxu0
    %2476 = vmatprep.mubr.f32.mxu0 %v1760
    %2477 = vmatmul.mubr.f32.gmra.mrb[0].mxu0 %v1464
    %v2478 = vpop.f32.mrb[0].mxu0
    %v2479 = vadd.f32 %v1516, %v2478
    %v2480 = vpop.f32.mrb[0].mxu0
    %2481 = vmatprep.mubr.f32.mxu0 %v1762
    %2482 = vmatmul.mubr.f32.gmra.mrb[0].mxu0 %v1465
    %v2483 = vpop.f32.mrb[0].mxu0
    %v2484 = vadd.f32 %v1516, %v2483
    %v2485 = vpop.f32.mrb[0].mxu0
    %2486 = vmatprep.mubr.f32.mxu0 %v1764
    %2487 = vmatmul.mubr.f32.gmra.mrb[0].mxu0 %v1466
    %v2488 = vpop.f32.mrb[0].mxu0
    %v2489 = vadd.f32 %v1516, %v2488
    %v2490 = vpop.f32.mrb[0].mxu0
    %2491 = vmatprep.mubr.f32.mxu0 %v1766
    %2492 = vmatmul.mubr.f32.gmra.mrb[0].mxu0 %v1467
    %v2493 = vpop.f32.mrb[0].mxu0
    %v2494 = vadd.f32 %v1516, %v2493
    %v2495 = vpop.f32.mrb[0].mxu0
    %2496 = vmatprep.mubr.f32.mxu0 %v1768
    %2497 = vmatmul.mubr.f32.gmra.mrb[0].mxu0 %v1468
    %v2498 = vpop.f32.mrb[0].mxu0
    %v2499 = vadd.f32 %v1516, %v2498
    %v2500 = vpop.f32.mrb[0].mxu0
    %2501 = vmatprep.mubr.f32.mxu0 %v1770
    %2502 = vmatmul.mubr.f32.gmra.mrb[0].mxu0 %v1469
    %v2503 = vpop.f32.mrb[0].mxu0
    %v2504 = vadd.f32 %v1516, %v2503
    %v2505 = vpop.f32.mrb[0].mxu0
    %2506 = vmatprep.mubr.f32.mxu0 %v1772
    %2507 = vmatmul.mubr.f32.gmra.mrb[0].mxu0 %v1470
    %v2508 = vpop.f32.mrb[0].mxu0
    %v2509 = vadd.f32 %v1516, %v2508
    %v2510 = vpop.f32.mrb[0].mxu0
    %2511 = vmatprep.mubr.f32.mxu0 %v1774
    %2512 = vmatmul.mubr.f32.gmra.mrb[0].mxu0 %v1471
    %v2513 = vpop.f32.mrb[0].mxu0
    %v2514 = vadd.f32 %v1516, %v2513
    %v2515 = vpop.f32.mrb[0].mxu0
    %2516 = vmatprep.mubr.f32.mxu0 %v1776
    %2517 = vmatmul.mubr.f32.gmra.mrb[0].mxu0 %v1472
    %v2518 = vpop.f32.mrb[0].mxu0
    %v2519 = vadd.f32 %v1516, %v2518
    %v2520 = vpop.f32.mrb[0].mxu0
    %2521 = vmatprep.mubr.f32.mxu0 %v1778
    %2522 = vmatmul.mubr.f32.gmra.mrb[0].mxu0 %v1473
    %v2523 = vpop.f32.mrb[0].mxu0
    %v2524 = vadd.f32 %v1516, %v2523
    %v2525 = vpop.f32.mrb[0].mxu0
    %2526 = vmatprep.mubr.f32.mxu0 %v1780
    %2527 = vmatmul.mubr.f32.gmra.mrb[0].mxu0 %v1474
    %v2528 = vpop.f32.mrb[0].mxu0
    %v2529 = vadd.f32 %v1516, %v2528
    %v2530 = vpop.f32.mrb[0].mxu0
    %2531 = vmatprep.mubr.f32.mxu0 %v1782
    %2532 = vmatmul.mubr.f32.gmra.mrb[0].mxu0 %v1475
    %v2533 = vpop.f32.mrb[0].mxu0
    %v2534 = vadd.f32 %v1516, %v2533
    %v2535 = vpop.f32.mrb[0].mxu0
    %2536 = vmatprep.mubr.f32.mxu0 %v1784
    %2537 = vmatmul.mubr.f32.gmra.mrb[0].mxu0 %v1476
    %v2538 = vpop.f32.mrb[0].mxu0
    %v2539 = vadd.f32 %v1516, %v2538
    %v2540 = vpop.f32.mrb[0].mxu0
    %2541 = vmatprep.mubr.f32.mxu0 %v1786
    %2542 = vmatmul.mubr.f32.gmra.mrb[0].mxu0 %v1477
    %v2543 = vpop.f32.mrb[0].mxu0
    %v2544 = vadd.f32 %v1516, %v2543
    %v2545 = vpop.f32.mrb[0].mxu0
    %2546 = vmatprep.mubr.f32.mxu0 %v1788
    %2547 = vmatmul.mubr.f32.gmra.mrb[0].mxu0 %v1478
    %v2548 = vpop.f32.mrb[0].mxu0
    %v2549 = vadd.f32 %v1516, %v2548
    %v2550 = vpop.f32.mrb[0].mxu0
    %2551 = vmatprep.mubr.f32.mxu0 %v1790
    %2552 = vmatmul.mubr.f32.gmra.mrb[0].mxu0 %v1479
    %v2553 = vpop.f32.mrb[0].mxu0
    %v2554 = vadd.f32 %v1516, %v2553
    %v2555 = vpop.f32.mrb[0].mxu0
    %2556 = vmatprep.mubr.f32.mxu0 %v1792
    %2557 = vmatmul.mubr.f32.gmra.mrb[0].mxu0 %v1480
    %v2558 = vpop.f32.mrb[0].mxu0
    %v2559 = vadd.f32 %v1516, %v2558
    %v2560 = vpop.f32.mrb[0].mxu0
    %2561 = vmatprep.mubr.f32.mxu0 %v1794
    %2562 = vmatmul.mubr.f32.gmra.mrb[0].mxu0 %v1481
    %v2563 = vpop.f32.mrb[0].mxu0
    %v2564 = vadd.f32 %v1516, %v2563
    %v2565 = vpop.f32.mrb[0].mxu0
    %2566 = vmatprep.mubr.f32.mxu0 %v1796
    %2567 = vmatmul.mubr.f32.gmra.mrb[0].mxu0 %v1482
    %v2568 = vpop.f32.mrb[0].mxu0
    %v2569 = vadd.f32 %v1516, %v2568
    %v2570 = vpop.f32.mrb[0].mxu0
    %2571 = vmatprep.mubr.f32.mxu0 %v1798
    %2572 = vmatmul.mubr.f32.gmra.mrb[0].mxu0 %v1483
    %v2573 = vpop.f32.mrb[0].mxu0
    %v2574 = vadd.f32 %v1516, %v2573
    %v2575 = vpop.f32.mrb[0].mxu0
    %2576 = vmatprep.mubr.f32.mxu0 %v1800
    %2577 = vmatmul.mubr.f32.gmra.mrb[0].mxu0 %v1484
    %v2578 = vpop.f32.mrb[0].mxu0
    %v2579 = vadd.f32 %v1516, %v2578
    %v2580 = vpop.f32.mrb[0].mxu0
    %2581 = vmatprep.mubr.f32.mxu0 %v1802
    %2582 = vmatmul.mubr.f32.gmra.mrb[0].mxu0 %v1485
    %v2583 = vpop.f32.mrb[0].mxu0
    %v2584 = vadd.f32 %v1516, %v2583
    %v2585 = vpop.f32.mrb[0].mxu0
    %2586 = vmatprep.mubr.f32.mxu0 %v1805
    %2587 = vmatmul.mubr.f32.gmra.mrb[0].mxu0 %v1486
    %v2588 = vpop.f32.mrb[0].mxu0
    %v2589 = vadd.f32 %v1516, %v2588
    %v2590 = vpop.f32.mrb[0].mxu0
    %2591 = vdwg.mxu0
    %v2592 = vmax.f32 %v1874, 0.0
    %v2593 = vmax.f32 %v1879, 0.0
    %v2594 = vmax.f32 %v1884, 0.0
    %v2595 = vmax.f32 %v1889, 0.0
    %v2596 = vmax.f32 %v1894, 0.0
    %v2597 = vmax.f32 %v1899, 0.0
    %v2598 = vmax.f32 %v1904, 0.0
    %v2599 = vmax.f32 %v1909, 0.0
    %v2600 = vmax.f32 %v1914, 0.0
    %v2601 = vmax.f32 %v1919, 0.0
    %v2602 = vmax.f32 %v1924, 0.0
    %v2603 = vmax.f32 %v1929, 0.0
    %v2604 = vmax.f32 %v1934, 0.0
    %v2605 = vmax.f32 %v1939, 0.0
    %v2606 = vmax.f32 %v1944, 0.0
    %v2607 = vmax.f32 %v1949, 0.0
    %v2608 = vmax.f32 %v1954, 0.0
    %v2609 = vmax.f32 %v1959, 0.0
    %v2610 = vmax.f32 %v1964, 0.0
    %v2611 = vmax.f32 %v1969, 0.0
    %v2612 = vmax.f32 %v1974, 0.0
    %v2613 = vmax.f32 %v1979, 0.0
    %v2614 = vmax.f32 %v1984, 0.0
    %v2615 = vmax.f32 %v1989, 0.0
    %v2616 = vmax.f32 %v1994, 0.0
    %v2617 = vmax.f32 %v1999, 0.0
    %v2618 = vmax.f32 %v2004, 0.0
    %v2619 = vmax.f32 %v2009, 0.0
    %v2620 = vmax.f32 %v2014, 0.0
    %v2621 = vmax.f32 %v2019, 0.0
    %v2622 = vmax.f32 %v2024, 0.0
    %v2623 = vmax.f32 %v2029, 0.0
    %v2624 = vmax.f32 %v2034, 0.0
    %v2625 = vmax.f32 %v2039, 0.0
    %v2626 = vmax.f32 %v2044, 0.0
    %v2627 = vmax.f32 %v2049, 0.0
    %v2628 = vmax.f32 %v2054, 0.0
    %v2629 = vmax.f32 %v2059, 0.0
    %v2630 = vmax.f32 %v2064, 0.0
    %v2631 = vmax.f32 %v2069, 0.0
    %v2632 = vmax.f32 %v2074, 0.0
    %v2633 = vmax.f32 %v2079, 0.0
    %v2634 = vmax.f32 %v2084, 0.0
    %v2635 = vmax.f32 %v2089, 0.0
    %v2636 = vmax.f32 %v2094, 0.0
    %v2637 = vmax.f32 %v2099, 0.0
    %v2638 = vmax.f32 %v2104, 0.0
    %v2639 = vmax.f32 %v2109, 0.0
    %v2640 = vmax.f32 %v2114, 0.0
    %v2641 = vmax.f32 %v2119, 0.0
    %v2642 = vmax.f32 %v2124, 0.0
    %v2643 = vmax.f32 %v2129, 0.0
    %v2644 = vmax.f32 %v2134, 0.0
    %v2645 = vmax.f32 %v2139, 0.0
    %v2646 = vmax.f32 %v2144, 0.0
    %v2647 = vmax.f32 %v2149, 0.0
    %v2648 = vmax.f32 %v2154, 0.0
    %v2649 = vmax.f32 %v2159, 0.0
    %v2650 = vmax.f32 %v2164, 0.0
    %v2651 = vmax.f32 %v2169, 0.0
    %v2652 = vmax.f32 %v2174, 0.0
    %v2653 = vmax.f32 %v2179, 0.0
    %v2654 = vmax.f32 %v2184, 0.0
    %v2655 = vmax.f32 %v2189, 0.0
    %v2656 = vmax.f32 %v2194, 0.0
    %v2657 = vmax.f32 %v2199, 0.0
    %v2658 = vmax.f32 %v2204, 0.0
    %v2659 = vmax.f32 %v2209, 0.0
    %v2660 = vmax.f32 %v2214, 0.0
    %v2661 = vmax.f32 %v2219, 0.0
    %v2662 = vmax.f32 %v2224, 0.0
    %v2663 = vmax.f32 %v2229, 0.0
    %v2664 = vmax.f32 %v2234, 0.0
    %v2665 = vmax.f32 %v2239, 0.0
    %v2666 = vmax.f32 %v2244, 0.0
    %v2667 = vmax.f32 %v2249, 0.0
    %v2668 = vmax.f32 %v2254, 0.0
    %v2669 = vmax.f32 %v2259, 0.0
    %v2670 = vmax.f32 %v2264, 0.0
    %v2671 = vmax.f32 %v2269, 0.0
    %v2672 = vmax.f32 %v2274, 0.0
    %v2673 = vmax.f32 %v2279, 0.0
    %v2674 = vmax.f32 %v2284, 0.0
    %v2675 = vmax.f32 %v2289, 0.0
    %v2676 = vmax.f32 %v2294, 0.0
    %v2677 = vmax.f32 %v2299, 0.0
    %v2678 = vmax.f32 %v2304, 0.0
    %v2679 = vmax.f32 %v2309, 0.0
    %v2680 = vmax.f32 %v2314, 0.0
    %v2681 = vmax.f32 %v2319, 0.0
    %v2682 = vmax.f32 %v2324, 0.0
    %v2683 = vmax.f32 %v2329, 0.0
    %v2684 = vmax.f32 %v2334, 0.0
    %v2685 = vmax.f32 %v2339, 0.0
    %v2686 = vmax.f32 %v2344, 0.0
    %v2687 = vmax.f32 %v2349, 0.0
    %v2688 = vmax.f32 %v2354, 0.0
    %v2689 = vmax.f32 %v2359, 0.0
    %v2690 = vmax.f32 %v2364, 0.0
    %v2691 = vmax.f32 %v2369, 0.0
    %v2692 = vmax.f32 %v2374, 0.0
    %v2693 = vmax.f32 %v2379, 0.0
    %v2694 = vmax.f32 %v2384, 0.0
    %v2695 = vmax.f32 %v2389, 0.0
    %v2696 = vmax.f32 %v2394, 0.0
    %v2697 = vmax.f32 %v2399, 0.0
    %v2698 = vmax.f32 %v2404, 0.0
    %v2699 = vmax.f32 %v2409, 0.0
    %v2700 = vmax.f32 %v2414, 0.0
    %v2701 = vmax.f32 %v2419, 0.0
    %v2702 = vmax.f32 %v2424, 0.0
    %v2703 = vmax.f32 %v2429, 0.0
    %v2704 = vmax.f32 %v2434, 0.0
    %v2705 = vmax.f32 %v2439, 0.0
    %v2706 = vmax.f32 %v2444, 0.0
    %v2707 = vmax.f32 %v2449, 0.0
    %v2708 = vmax.f32 %v2454, 0.0
    %v2709 = vmax.f32 %v2459, 0.0
    %v2710 = vmax.f32 %v2464, 0.0
    %v2711 = vmax.f32 %v2469, 0.0
    %v2712 = vmax.f32 %v2474, 0.0
    %v2713 = vmax.f32 %v2479, 0.0
    %v2714 = vmax.f32 %v2484, 0.0
    %v2715 = vmax.f32 %v2489, 0.0
    %v2716 = vmax.f32 %v2494, 0.0
    %v2717 = vmax.f32 %v2499, 0.0
    %v2718 = vmax.f32 %v2504, 0.0
    %v2719 = vmax.f32 %v2509, 0.0
    %v2720 = vmax.f32 %v2514, 0.0
    %v2721 = vmax.f32 %v2519, 0.0
    %v2722 = vmax.f32 %v2524, 0.0
    %v2723 = vmax.f32 %v2529, 0.0
    %v2724 = vmax.f32 %v2534, 0.0
    %v2725 = vmax.f32 %v2539, 0.0
    %v2726 = vmax.f32 %v2544, 0.0
    %v2727 = vmax.f32 %v2549, 0.0
    %v2728 = vmax.f32 %v2554, 0.0
    %v2729 = vmax.f32 %v2559, 0.0
    %v2730 = vmax.f32 %v2564, 0.0
    %v2731 = vmax.f32 %v2569, 0.0
    %v2732 = vmax.f32 %v2574, 0.0
    %v2733 = vmax.f32 %v2579, 0.0
    %v2734 = vmax.f32 %v2584, 0.0
    %v2735 = vmax.f32 %v2589, 0.0
    %vm2736 = vcmask 261120
    %2737 = vst.msk [vmem:[#allocation2] sm:$0xff] %vm2736, %v2592
    %2738 = vst.msk [vmem:[#allocation2 + $0x8] sm:$0xff] %vm2736, %v2593
    %2739 = vst.msk [vmem:[#allocation2 + $0x10] sm:$0xff] %vm2736, %v2594
    %2740 = vst.msk [vmem:[#allocation2 + $0x18] sm:$0xff] %vm2736, %v2595
    %2741 = vst.msk [vmem:[#allocation2 + $0x20] sm:$0xff] %vm2736, %v2596
    %2742 = vst.msk [vmem:[#allocation2 + $0x28] sm:$0xff] %vm2736, %v2597
    %2743 = vst.msk [vmem:[#allocation2 + $0x30] sm:$0xff] %vm2736, %v2598
    %2744 = vst.msk [vmem:[#allocation2 + $0x38] sm:$0xff] %vm2736, %v2599
    %2745 = vst.msk [vmem:[#allocation2 + $0x40] sm:$0xff] %vm2736, %v2600
    %2746 = vst.msk [vmem:[#allocation2 + $0x48] sm:$0xff] %vm2736, %v2601
    %2747 = vst.msk [vmem:[#allocation2 + $0x50] sm:$0xff] %vm2736, %v2602
    %2748 = vst.msk [vmem:[#allocation2 + $0x58] sm:$0xff] %vm2736, %v2603
    %2749 = vst.msk [vmem:[#allocation2 + $0x60] sm:$0xff] %vm2736, %v2604
    %2750 = vst.msk [vmem:[#allocation2 + $0x68] sm:$0xff] %vm2736, %v2605
    %2751 = vst.msk [vmem:[#allocation2 + $0x70] sm:$0xff] %vm2736, %v2606
    %2752 = vst.msk [vmem:[#allocation2 + $0x78] sm:$0xff] %vm2736, %v2607
    %2753 = vst.msk [vmem:[#allocation2 + $0x80] sm:$0xff] %vm2736, %v2608
    %2754 = vst.msk [vmem:[#allocation2 + $0x88] sm:$0xff] %vm2736, %v2609
    %2755 = vst.msk [vmem:[#allocation2 + $0x90] sm:$0xff] %vm2736, %v2610
    %2756 = vst.msk [vmem:[#allocation2 + $0x98] sm:$0xff] %vm2736, %v2611
    %2757 = vst.msk [vmem:[#allocation2 + $0xa0] sm:$0xff] %vm2736, %v2612
    %2758 = vst.msk [vmem:[#allocation2 + $0xa8] sm:$0xff] %vm2736, %v2613
    %2759 = vst.msk [vmem:[#allocation2 + $0xb0] sm:$0xff] %vm2736, %v2614
    %2760 = vst.msk [vmem:[#allocation2 + $0xb8] sm:$0xff] %vm2736, %v2615
    %2761 = vst.msk [vmem:[#allocation2 + $0xc0] sm:$0xff] %vm2736, %v2616
    %2762 = vst.msk [vmem:[#allocation2 + $0xc8] sm:$0xff] %vm2736, %v2617
    %2763 = vst.msk [vmem:[#allocation2 + $0xd0] sm:$0xff] %vm2736, %v2618
    %2764 = vst.msk [vmem:[#allocation2 + $0xd8] sm:$0xff] %vm2736, %v2619
    %2765 = vst.msk [vmem:[#allocation2 + $0xe0] sm:$0xff] %vm2736, %v2620
    %2766 = vst.msk [vmem:[#allocation2 + $0xe8] sm:$0xff] %vm2736, %v2621
    %2767 = vst.msk [vmem:[#allocation2 + $0xf0] sm:$0xff] %vm2736, %v2622
    %2768 = vst.msk [vmem:[#allocation2 + $0xf8] sm:$0xff] %vm2736, %v2623
    %2769 = vst.msk [vmem:[#allocation2 + $0x100] sm:$0xff] %vm2736, %v2624
    %2770 = vst.msk [vmem:[#allocation2 + $0x108] sm:$0xff] %vm2736, %v2625
    %2771 = vst.msk [vmem:[#allocation2 + $0x110] sm:$0xff] %vm2736, %v2626
    %2772 = vst.msk [vmem:[#allocation2 + $0x118] sm:$0xff] %vm2736, %v2627
    %2773 = vst.msk [vmem:[#allocation2 + $0x120] sm:$0xff] %vm2736, %v2628
    %2774 = vst.msk [vmem:[#allocation2 + $0x128] sm:$0xff] %vm2736, %v2629
    %2775 = vst.msk [vmem:[#allocation2 + $0x130] sm:$0xff] %vm2736, %v2630
    %2776 = vst.msk [vmem:[#allocation2 + $0x138] sm:$0xff] %vm2736, %v2631
    %2777 = vst.msk [vmem:[#allocation2 + $0x140] sm:$0xff] %vm2736, %v2632
    %2778 = vst.msk [vmem:[#allocation2 + $0x148] sm:$0xff] %vm2736, %v2633
    %2779 = vst.msk [vmem:[#allocation2 + $0x150] sm:$0xff] %vm2736, %v2634
    %2780 = vst.msk [vmem:[#allocation2 + $0x158] sm:$0xff] %vm2736, %v2635
    %2781 = vst.msk [vmem:[#allocation2 + $0x160] sm:$0xff] %vm2736, %v2636
    %2782 = vst.msk [vmem:[#allocation2 + $0x168] sm:$0xff] %vm2736, %v2637
    %2783 = vst.msk [vmem:[#allocation2 + $0x170] sm:$0xff] %vm2736, %v2638
    %2784 = vst.msk [vmem:[#allocation2 + $0x178] sm:$0xff] %vm2736, %v2639
    %2785 = vst.msk [vmem:[#allocation2 + $0x180] sm:$0xff] %vm2736, %v2640
    %2786 = vst.msk [vmem:[#allocation2 + $0x188] sm:$0xff] %vm2736, %v2641
    %2787 = vst.msk [vmem:[#allocation2 + $0x190] sm:$0xff] %vm2736, %v2642
    %2788 = vst.msk [vmem:[#allocation2 + $0x198] sm:$0xff] %vm2736, %v2643
    %2789 = vst.msk [vmem:[#allocation2 + $0x1a0] sm:$0xff] %vm2736, %v2644
    %2790 = vst.msk [vmem:[#allocation2 + $0x1a8] sm:$0xff] %vm2736, %v2645
    %2791 = vst.msk [vmem:[#allocation2 + $0x1b0] sm:$0xff] %vm2736, %v2646
    %2792 = vst.msk [vmem:[#allocation2 + $0x1b8] sm:$0xff] %vm2736, %v2647
    %2793 = vst.msk [vmem:[#allocation2 + $0x1c0] sm:$0xff] %vm2736, %v2648
    %2794 = vst.msk [vmem:[#allocation2 + $0x1c8] sm:$0xff] %vm2736, %v2649
    %2795 = vst.msk [vmem:[#allocation2 + $0x1d0] sm:$0xff] %vm2736, %v2650
    %2796 = vst.msk [vmem:[#allocation2 + $0x1d8] sm:$0xff] %vm2736, %v2651
    %2797 = vst.msk [vmem:[#allocation2 + $0x1e0] sm:$0xff] %vm2736, %v2652
    %2798 = vst.msk [vmem:[#allocation2 + $0x1e8] sm:$0xff] %vm2736, %v2653
    %2799 = vst.msk [vmem:[#allocation2 + $0x1f0] sm:$0xff] %vm2736, %v2654
    %2800 = vst.msk [vmem:[#allocation2 + $0x1f8] sm:$0xff] %vm2736, %v2655
    %2801 = vst.msk [vmem:[#allocation2 + $0x200] sm:$0xff] %vm2736, %v2656
    %2802 = vst.msk [vmem:[#allocation2 + $0x208] sm:$0xff] %vm2736, %v2657
    %2803 = vst.msk [vmem:[#allocation2 + $0x210] sm:$0xff] %vm2736, %v2658
    %2804 = vst.msk [vmem:[#allocation2 + $0x218] sm:$0xff] %vm2736, %v2659
    %2805 = vst.msk [vmem:[#allocation2 + $0x220] sm:$0xff] %vm2736, %v2660
    %2806 = vst.msk [vmem:[#allocation2 + $0x228] sm:$0xff] %vm2736, %v2661
    %2807 = vst.msk [vmem:[#allocation2 + $0x230] sm:$0xff] %vm2736, %v2662
    %2808 = vst.msk [vmem:[#allocation2 + $0x238] sm:$0xff] %vm2736, %v2663
    %2809 = vst.msk [vmem:[#allocation2 + $0x240] sm:$0xff] %vm2736, %v2664
    %2810 = vst.msk [vmem:[#allocation2 + $0x248] sm:$0xff] %vm2736, %v2665
    %2811 = vst.msk [vmem:[#allocation2 + $0x250] sm:$0xff] %vm2736, %v2666
    %2812 = vst.msk [vmem:[#allocation2 + $0x258] sm:$0xff] %vm2736, %v2667
    %2813 = vst.msk [vmem:[#allocation2 + $0x260] sm:$0xff] %vm2736, %v2668
    %2814 = vst.msk [vmem:[#allocation2 + $0x268] sm:$0xff] %vm2736, %v2669
    %2815 = vst.msk [vmem:[#allocation2 + $0x270] sm:$0xff] %vm2736, %v2670
    %2816 = vst.msk [vmem:[#allocation2 + $0x278] sm:$0xff] %vm2736, %v2671
    %2817 = vst.msk [vmem:[#allocation2 + $0x280] sm:$0xff] %vm2736, %v2672
    %2818 = vst.msk [vmem:[#allocation2 + $0x288] sm:$0xff] %vm2736, %v2673
    %2819 = vst.msk [vmem:[#allocation2 + $0x290] sm:$0xff] %vm2736, %v2674
    %2820 = vst.msk [vmem:[#allocation2 + $0x298] sm:$0xff] %vm2736, %v2675
    %2821 = vst.msk [vmem:[#allocation2 + $0x2a0] sm:$0xff] %vm2736, %v2676
    %2822 = vst.msk [vmem:[#allocation2 + $0x2a8] sm:$0xff] %vm2736, %v2677
    %2823 = vst.msk [vmem:[#allocation2 + $0x2b0] sm:$0xff] %vm2736, %v2678
    %2824 = vst.msk [vmem:[#allocation2 + $0x2b8] sm:$0xff] %vm2736, %v2679
    %2825 = vst.msk [vmem:[#allocation2 + $0x2c0] sm:$0xff] %vm2736, %v2680
    %2826 = vst.msk [vmem:[#allocation2 + $0x2c8] sm:$0xff] %vm2736, %v2681
    %2827 = vst.msk [vmem:[#allocation2 + $0x2d0] sm:$0xff] %vm2736, %v2682
    %2828 = vst.msk [vmem:[#allocation2 + $0x2d8] sm:$0xff] %vm2736, %v2683
    %2829 = vst.msk [vmem:[#allocation2 + $0x2e0] sm:$0xff] %vm2736, %v2684
    %2830 = vst.msk [vmem:[#allocation2 + $0x2e8] sm:$0xff] %vm2736, %v2685
    %2831 = vst.msk [vmem:[#allocation2 + $0x2f0] sm:$0xff] %vm2736, %v2686
    %2832 = vst.msk [vmem:[#allocation2 + $0x2f8] sm:$0xff] %vm2736, %v2687
    %2833 = vst.msk [vmem:[#allocation2 + $0x300] sm:$0xff] %vm2736, %v2688
    %2834 = vst.msk [vmem:[#allocation2 + $0x308] sm:$0xff] %vm2736, %v2689
    %2835 = vst.msk [vmem:[#allocation2 + $0x310] sm:$0xff] %vm2736, %v2690
    %2836 = vst.msk [vmem:[#allocation2 + $0x318] sm:$0xff] %vm2736, %v2691
    %2837 = vst.msk [vmem:[#allocation2 + $0x320] sm:$0xff] %vm2736, %v2692
    %2838 = vst.msk [vmem:[#allocation2 + $0x328] sm:$0xff] %vm2736, %v2693
    %2839 = vst.msk [vmem:[#allocation2 + $0x330] sm:$0xff] %vm2736, %v2694
    %2840 = vst.msk [vmem:[#allocation2 + $0x338] sm:$0xff] %vm2736, %v2695
    %2841 = vst.msk [vmem:[#allocation2 + $0x340] sm:$0xff] %vm2736, %v2696
    %2842 = vst.msk [vmem:[#allocation2 + $0x348] sm:$0xff] %vm2736, %v2697
    %2843 = vst.msk [vmem:[#allocation2 + $0x350] sm:$0xff] %vm2736, %v2698
    %2844 = vst.msk [vmem:[#allocation2 + $0x358] sm:$0xff] %vm2736, %v2699
    %2845 = vst.msk [vmem:[#allocation2 + $0x360] sm:$0xff] %vm2736, %v2700
    %2846 = vst.msk [vmem:[#allocation2 + $0x368] sm:$0xff] %vm2736, %v2701
    %2847 = vst.msk [vmem:[#allocation2 + $0x370] sm:$0xff] %vm2736, %v2702
    %2848 = vst.msk [vmem:[#allocation2 + $0x378] sm:$0xff] %vm2736, %v2703
    %2849 = vst.msk [vmem:[#allocation2 + $0x380] sm:$0xff] %vm2736, %v2704
    %2850 = vst.msk [vmem:[#allocation2 + $0x388] sm:$0xff] %vm2736, %v2705
    %2851 = vst.msk [vmem:[#allocation2 + $0x390] sm:$0xff] %vm2736, %v2706
    %2852 = vst.msk [vmem:[#allocation2 + $0x398] sm:$0xff] %vm2736, %v2707
    %2853 = vst.msk [vmem:[#allocation2 + $0x3a0] sm:$0xff] %vm2736, %v2708
    %2854 = vst.msk [vmem:[#allocation2 + $0x3a8] sm:$0xff] %vm2736, %v2709
    %2855 = vst.msk [vmem:[#allocation2 + $0x3b0] sm:$0xff] %vm2736, %v2710
    %2856 = vst.msk [vmem:[#allocation2 + $0x3b8] sm:$0xff] %vm2736, %v2711
    %2857 = vst.msk [vmem:[#allocation2 + $0x3c0] sm:$0xff] %vm2736, %v2712
    %2858 = vst.msk [vmem:[#allocation2 + $0x3c8] sm:$0xff] %vm2736, %v2713
    %2859 = vst.msk [vmem:[#allocation2 + $0x3d0] sm:$0xff] %vm2736, %v2714
    %2860 = vst.msk [vmem:[#allocation2 + $0x3d8] sm:$0xff] %vm2736, %v2715
    %2861 = vst.msk [vmem:[#allocation2 + $0x3e0] sm:$0xff] %vm2736, %v2716
    %2862 = vst.msk [vmem:[#allocation2 + $0x3e8] sm:$0xff] %vm2736, %v2717
    %2863 = vst.msk [vmem:[#allocation2 + $0x3f0] sm:$0xff] %vm2736, %v2718
    %2864 = vst.msk [vmem:[#allocation2 + $0x3f8] sm:$0xff] %vm2736, %v2719
    %2865 = vst.msk [vmem:[#allocation2 + $0x400] sm:$0xff] %vm2736, %v2720
    %2866 = vst.msk [vmem:[#allocation2 + $0x408] sm:$0xff] %vm2736, %v2721
    %2867 = vst.msk [vmem:[#allocation2 + $0x410] sm:$0xff] %vm2736, %v2722
    %2868 = vst.msk [vmem:[#allocation2 + $0x418] sm:$0xff] %vm2736, %v2723
    %2869 = vst.msk [vmem:[#allocation2 + $0x420] sm:$0xff] %vm2736, %v2724
    %2870 = vst.msk [vmem:[#allocation2 + $0x428] sm:$0xff] %vm2736, %v2725
    %2871 = vst.msk [vmem:[#allocation2 + $0x430] sm:$0xff] %vm2736, %v2726
    %2872 = vst.msk [vmem:[#allocation2 + $0x438] sm:$0xff] %vm2736, %v2727
    %2873 = vst.msk [vmem:[#allocation2 + $0x440] sm:$0xff] %vm2736, %v2728
    %2874 = vst.msk [vmem:[#allocation2 + $0x448] sm:$0xff] %vm2736, %v2729
    %2875 = vst.msk [vmem:[#allocation2 + $0x450] sm:$0xff] %vm2736, %v2730
    %2876 = vst.msk [vmem:[#allocation2 + $0x458] sm:$0xff] %vm2736, %v2731
    %2877 = vst.msk [vmem:[#allocation2 + $0x460] sm:$0xff] %vm2736, %v2732
    %2878 = vst.msk [vmem:[#allocation2 + $0x468] sm:$0xff] %vm2736, %v2733
    %2879 = vst.msk [vmem:[#allocation2 + $0x470] sm:$0xff] %vm2736, %v2734
    %2880 = vst.msk [vmem:[#allocation2 + $0x478] sm:$0xff] %vm2736, %v2735
    %v2881 = vld [vmem:[#allocation2] ss:$3 sm:$0xff]
    %s2882 = scalar_lea.vmem [#allocation2], 24
    %v2883 = vld [vmem:[%s2882] ss:$3 sm:$0xff]
    %s2884 = scalar_lea.vmem [#allocation2], 48
    %v2885 = vld [vmem:[%s2884] ss:$3 sm:$0xff]
    %s2886 = scalar_lea.vmem [#allocation2], 72
    %v2887 = vld [vmem:[%s2886] ss:$3 sm:$0xff]
    %s2888 = scalar_lea.vmem [#allocation2], 96
    %v2889 = vld [vmem:[%s2888] ss:$3 sm:$0xff]
    %s2890 = scalar_lea.vmem [#allocation2], 120
    %v2891 = vld [vmem:[%s2890] ss:$3 sm:$0xff]
    %s2892 = scalar_lea.vmem [#allocation2], 144
    %v2893 = vld [vmem:[%s2892] ss:$3 sm:$0xff]
    %s2894 = scalar_lea.vmem [#allocation2], 168
    %v2895 = vld [vmem:[%s2894] ss:$3 sm:$0xff]
    %s2896 = scalar_lea.vmem [#allocation2], 192
    %v2897 = vld [vmem:[%s2896] ss:$3 sm:$0xff]
    %s2898 = scalar_lea.vmem [#allocation2], 216
    %v2899 = vld [vmem:[%s2898] ss:$3 sm:$0xff]
    %s2900 = scalar_lea.vmem [#allocation2], 240
    %v2901 = vld [vmem:[%s2900] ss:$3 sm:$0xff]
    %s2902 = scalar_lea.vmem [#allocation2], 264
    %v2903 = vld [vmem:[%s2902] ss:$3 sm:$0xff]
    %s2904 = scalar_lea.vmem [#allocation2], 288
    %v2905 = vld [vmem:[%s2904] ss:$3 sm:$0xff]
    %s2906 = scalar_lea.vmem [#allocation2], 312
    %v2907 = vld [vmem:[%s2906] ss:$3 sm:$0xff]
    %s2908 = scalar_lea.vmem [#allocation2], 336
    %v2909 = vld [vmem:[%s2908] ss:$3 sm:$0xff]
    %s2910 = scalar_lea.vmem [#allocation2], 360
    %v2911 = vld [vmem:[%s2910] ss:$3 sm:$0xff]
    %s2912 = scalar_lea.vmem [#allocation2], 384
    %v2913 = vld [vmem:[%s2912] ss:$3 sm:$0xff]
    %s2914 = scalar_lea.vmem [#allocation2], 408
    %v2915 = vld [vmem:[%s2914] ss:$3 sm:$0xff]
    %s2916 = scalar_lea.vmem [#allocation2], 432
    %v2917 = vld [vmem:[%s2916] ss:$3 sm:$0xff]
    %s2918 = scalar_lea.vmem [#allocation2], 456
    %v2919 = vld [vmem:[%s2918] ss:$3 sm:$0xff]
    %s2920 = scalar_lea.vmem [#allocation2], 480
    %v2921 = vld [vmem:[%s2920] ss:$3 sm:$0xff]
    %s2922 = scalar_lea.vmem [#allocation2], 504
    %v2923 = vld [vmem:[%s2922] ss:$3 sm:$0xff]
    %s2924 = scalar_lea.vmem [#allocation2], 528
    %v2925 = vld [vmem:[%s2924] ss:$3 sm:$0xff]
    %s2926 = scalar_lea.vmem [#allocation2], 552
    %v2927 = vld [vmem:[%s2926] ss:$3 sm:$0xff]
    %s2928 = scalar_lea.vmem [#allocation2], 576
    %v2929 = vld [vmem:[%s2928] ss:$3 sm:$0xff]
    %s2930 = scalar_lea.vmem [#allocation2], 600
    %v2931 = vld [vmem:[%s2930] ss:$3 sm:$0xff]
    %s2932 = scalar_lea.vmem [#allocation2], 624
    %v2933 = vld [vmem:[%s2932] ss:$3 sm:$0xff]
    %s2934 = scalar_lea.vmem [#allocation2], 648
    %v2935 = vld [vmem:[%s2934] ss:$3 sm:$0xff]
    %s2936 = scalar_lea.vmem [#allocation2], 672
    %v2937 = vld [vmem:[%s2936] ss:$3 sm:$0xff]
    %s2938 = scalar_lea.vmem [#allocation2], 696
    %v2939 = vld [vmem:[%s2938] ss:$3 sm:$0xff]
    %s2940 = scalar_lea.vmem [#allocation2], 720
    %v2941 = vld [vmem:[%s2940] ss:$3 sm:$0xff]
    %s2942 = scalar_lea.vmem [#allocation2], 744
    %v2943 = vld [vmem:[%s2942] ss:$3 sm:$0xff]
    %s2944 = scalar_lea.vmem [#allocation2], 768
    %v2945 = vld [vmem:[%s2944] ss:$3 sm:$0xff]
    %s2946 = scalar_lea.vmem [#allocation2], 792
    %v2947 = vld [vmem:[%s2946] ss:$3 sm:$0xff]
    %s2948 = scalar_lea.vmem [#allocation2], 816
    %v2949 = vld [vmem:[%s2948] ss:$3 sm:$0xff]
    %s2950 = scalar_lea.vmem [#allocation2], 840
    %v2951 = vld [vmem:[%s2950] ss:$3 sm:$0xff]
    %s2952 = scalar_lea.vmem [#allocation2], 864
    %v2953 = vld [vmem:[%s2952] ss:$3 sm:$0xff]
    %s2954 = scalar_lea.vmem [#allocation2], 888
    %v2955 = vld [vmem:[%s2954] ss:$3 sm:$0xff]
    %s2956 = scalar_lea.vmem [#allocation2], 912
    %v2957 = vld [vmem:[%s2956] ss:$3 sm:$0xff]
    %s2958 = scalar_lea.vmem [#allocation2], 936
    %v2959 = vld [vmem:[%s2958] ss:$3 sm:$0xff]
    %s2960 = scalar_lea.vmem [#allocation2], 960
    %v2961 = vld [vmem:[%s2960] ss:$3 sm:$0xff]
    %s2962 = scalar_lea.vmem [#allocation2], 984
    %v2963 = vld [vmem:[%s2962] ss:$3 sm:$0xff]
    %s2964 = scalar_lea.vmem [#allocation2], 1008
    %v2965 = vld [vmem:[%s2964] ss:$3 sm:$0xff]
    %s2966 = scalar_lea.vmem [#allocation2], 1032
    %v2967 = vld [vmem:[%s2966] ss:$3 sm:$0xff]
    %s2968 = scalar_lea.vmem [#allocation2], 1056
    %v2969 = vld [vmem:[%s2968] ss:$3 sm:$0xff]
    %s2970 = scalar_lea.vmem [#allocation2], 1080
    %v2971 = vld [vmem:[%s2970] ss:$3 sm:$0xff]
    %s2972 = scalar_lea.vmem [#allocation2], 1104
    %v2973 = vld [vmem:[%s2972] ss:$3 sm:$0xff]
    %s2974 = scalar_lea.vmem [#allocation2], 1128
    %v2975 = vld [vmem:[%s2974] ss:$3 sm:$0xff]
    %s2976 = scalar_lea.vmem [#allocation2], 1
    %v2977 = vld [vmem:[%s2976] ss:$3 sm:$0xff]
    %s2978 = scalar_lea.vmem [#allocation2], 25
    %v2979 = vld [vmem:[%s2978] ss:$3 sm:$0xff]
    %s2980 = scalar_lea.vmem [#allocation2], 49
    %v2981 = vld [vmem:[%s2980] ss:$3 sm:$0xff]
    %s2982 = scalar_lea.vmem [#allocation2], 73
    %v2983 = vld [vmem:[%s2982] ss:$3 sm:$0xff]
    %s2984 = scalar_lea.vmem [#allocation2], 97
    %v2985 = vld [vmem:[%s2984] ss:$3 sm:$0xff]
    %s2986 = scalar_lea.vmem [#allocation2], 121
    %v2987 = vld [vmem:[%s2986] ss:$3 sm:$0xff]
    %s2988 = scalar_lea.vmem [#allocation2], 145
    %v2989 = vld [vmem:[%s2988] ss:$3 sm:$0xff]
    %s2990 = scalar_lea.vmem [#allocation2], 169
    %v2991 = vld [vmem:[%s2990] ss:$3 sm:$0xff]
    %s2992 = scalar_lea.vmem [#allocation2], 193
    %v2993 = vld [vmem:[%s2992] ss:$3 sm:$0xff]
    %s2994 = scalar_lea.vmem [#allocation2], 217
    %v2995 = vld [vmem:[%s2994] ss:$3 sm:$0xff]
    %s2996 = scalar_lea.vmem [#allocation2], 241
    %v2997 = vld [vmem:[%s2996] ss:$3 sm:$0xff]
    %s2998 = scalar_lea.vmem [#allocation2], 265
    %v2999 = vld [vmem:[%s2998] ss:$3 sm:$0xff]
    %s3000 = scalar_lea.vmem [#allocation2], 289
    %v3001 = vld [vmem:[%s3000] ss:$3 sm:$0xff]
    %s3002 = scalar_lea.vmem [#allocation2], 313
    %v3003 = vld [vmem:[%s3002] ss:$3 sm:$0xff]
    %s3004 = scalar_lea.vmem [#allocation2], 337
    %v3005 = vld [vmem:[%s3004] ss:$3 sm:$0xff]
    %s3006 = scalar_lea.vmem [#allocation2], 361
    %v3007 = vld [vmem:[%s3006] ss:$3 sm:$0xff]
    %s3008 = scalar_lea.vmem [#allocation2], 385
    %v3009 = vld [vmem:[%s3008] ss:$3 sm:$0xff]
    %s3010 = scalar_lea.vmem [#allocation2], 409
    %v3011 = vld [vmem:[%s3010] ss:$3 sm:$0xff]
    %s3012 = scalar_lea.vmem [#allocation2], 433
    %v3013 = vld [vmem:[%s3012] ss:$3 sm:$0xff]
    %s3014 = scalar_lea.vmem [#allocation2], 457
    %v3015 = vld [vmem:[%s3014] ss:$3 sm:$0xff]
    %s3016 = scalar_lea.vmem [#allocation2], 481
    %v3017 = vld [vmem:[%s3016] ss:$3 sm:$0xff]
    %s3018 = scalar_lea.vmem [#allocation2], 505
    %v3019 = vld [vmem:[%s3018] ss:$3 sm:$0xff]
    %s3020 = scalar_lea.vmem [#allocation2], 529
    %v3021 = vld [vmem:[%s3020] ss:$3 sm:$0xff]
    %s3022 = scalar_lea.vmem [#allocation2], 553
    %v3023 = vld [vmem:[%s3022] ss:$3 sm:$0xff]
    %s3024 = scalar_lea.vmem [#allocation2], 577
    %v3025 = vld [vmem:[%s3024] ss:$3 sm:$0xff]
    %s3026 = scalar_lea.vmem [#allocation2], 601
    %v3027 = vld [vmem:[%s3026] ss:$3 sm:$0xff]
    %s3028 = scalar_lea.vmem [#allocation2], 625
    %v3029 = vld [vmem:[%s3028] ss:$3 sm:$0xff]
    %s3030 = scalar_lea.vmem [#allocation2], 649
    %v3031 = vld [vmem:[%s3030] ss:$3 sm:$0xff]
    %s3032 = scalar_lea.vmem [#allocation2], 673
    %v3033 = vld [vmem:[%s3032] ss:$3 sm:$0xff]
    %s3034 = scalar_lea.vmem [#allocation2], 697
    %v3035 = vld [vmem:[%s3034] ss:$3 sm:$0xff]
    %s3036 = scalar_lea.vmem [#allocation2], 721
    %v3037 = vld [vmem:[%s3036] ss:$3 sm:$0xff]
    %s3038 = scalar_lea.vmem [#allocation2], 745
    %v3039 = vld [vmem:[%s3038] ss:$3 sm:$0xff]
    %s3040 = scalar_lea.vmem [#allocation2], 769
    %v3041 = vld [vmem:[%s3040] ss:$3 sm:$0xff]
    %s3042 = scalar_lea.vmem [#allocation2], 793
    %v3043 = vld [vmem:[%s3042] ss:$3 sm:$0xff]
    %s3044 = scalar_lea.vmem [#allocation2], 817
    %v3045 = vld [vmem:[%s3044] ss:$3 sm:$0xff]
    %s3046 = scalar_lea.vmem [#allocation2], 841
    %v3047 = vld [vmem:[%s3046] ss:$3 sm:$0xff]
    %s3048 = scalar_lea.vmem [#allocation2], 865
    %v3049 = vld [vmem:[%s3048] ss:$3 sm:$0xff]
    %s3050 = scalar_lea.vmem [#allocation2], 889
    %v3051 = vld [vmem:[%s3050] ss:$3 sm:$0xff]
    %s3052 = scalar_lea.vmem [#allocation2], 913
    %v3053 = vld [vmem:[%s3052] ss:$3 sm:$0xff]
    %s3054 = scalar_lea.vmem [#allocation2], 937
    %v3055 = vld [vmem:[%s3054] ss:$3 sm:$0xff]
    %s3056 = scalar_lea.vmem [#allocation2], 961
    %v3057 = vld [vmem:[%s3056] ss:$3 sm:$0xff]
    %s3058 = scalar_lea.vmem [#allocation2], 985
    %v3059 = vld [vmem:[%s3058] ss:$3 sm:$0xff]
    %s3060 = scalar_lea.vmem [#allocation2], 1009
    %v3061 = vld [vmem:[%s3060] ss:$3 sm:$0xff]
    %s3062 = scalar_lea.vmem [#allocation2], 1033
    %v3063 = vld [vmem:[%s3062] ss:$3 sm:$0xff]
    %s3064 = scalar_lea.vmem [#allocation2], 1057
    %v3065 = vld [vmem:[%s3064] ss:$3 sm:$0xff]
    %s3066 = scalar_lea.vmem [#allocation2], 1081
    %v3067 = vld [vmem:[%s3066] ss:$3 sm:$0xff]
    %s3068 = scalar_lea.vmem [#allocation2], 1105
    %v3069 = vld [vmem:[%s3068] ss:$3 sm:$0xff]
    %s3070 = scalar_lea.vmem [#allocation2], 1129
    %v3071 = vld [vmem:[%s3070] ss:$3 sm:$0xff]
    %s3072 = scalar_lea.vmem [#allocation2], 2
    %v3073 = vld [vmem:[%s3072] ss:$3 sm:$0xff]
    %s3074 = scalar_lea.vmem [#allocation2], 26
    %v3075 = vld [vmem:[%s3074] ss:$3 sm:$0xff]
    %s3076 = scalar_lea.vmem [#allocation2], 50
    %v3077 = vld [vmem:[%s3076] ss:$3 sm:$0xff]
    %s3078 = scalar_lea.vmem [#allocation2], 74
    %v3079 = vld [vmem:[%s3078] ss:$3 sm:$0xff]
    %s3080 = scalar_lea.vmem [#allocation2], 98
    %v3081 = vld [vmem:[%s3080] ss:$3 sm:$0xff]
    %s3082 = scalar_lea.vmem [#allocation2], 122
    %v3083 = vld [vmem:[%s3082] ss:$3 sm:$0xff]
    %s3084 = scalar_lea.vmem [#allocation2], 146
    %v3085 = vld [vmem:[%s3084] ss:$3 sm:$0xff]
    %s3086 = scalar_lea.vmem [#allocation2], 170
    %v3087 = vld [vmem:[%s3086] ss:$3 sm:$0xff]
    %s3088 = scalar_lea.vmem [#allocation2], 194
    %v3089 = vld [vmem:[%s3088] ss:$3 sm:$0xff]
    %s3090 = scalar_lea.vmem [#allocation2], 218
    %v3091 = vld [vmem:[%s3090] ss:$3 sm:$0xff]
    %s3092 = scalar_lea.vmem [#allocation2], 242
    %v3093 = vld [vmem:[%s3092] ss:$3 sm:$0xff]
    %s3094 = scalar_lea.vmem [#allocation2], 266
    %v3095 = vld [vmem:[%s3094] ss:$3 sm:$0xff]
    %s3096 = scalar_lea.vmem [#allocation2], 290
    %v3097 = vld [vmem:[%s3096] ss:$3 sm:$0xff]
    %s3098 = scalar_lea.vmem [#allocation2], 314
    %v3099 = vld [vmem:[%s3098] ss:$3 sm:$0xff]
    %s3100 = scalar_lea.vmem [#allocation2], 338
    %v3101 = vld [vmem:[%s3100] ss:$3 sm:$0xff]
    %s3102 = scalar_lea.vmem [#allocation2], 362
    %v3103 = vld [vmem:[%s3102] ss:$3 sm:$0xff]
    %s3104 = scalar_lea.vmem [#allocation2], 386
    %v3105 = vld [vmem:[%s3104] ss:$3 sm:$0xff]
    %s3106 = scalar_lea.vmem [#allocation2], 410
    %v3107 = vld [vmem:[%s3106] ss:$3 sm:$0xff]
    %s3108 = scalar_lea.vmem [#allocation2], 434
    %v3109 = vld [vmem:[%s3108] ss:$3 sm:$0xff]
    %s3110 = scalar_lea.vmem [#allocation2], 458
    %v3111 = vld [vmem:[%s3110] ss:$3 sm:$0xff]
    %s3112 = scalar_lea.vmem [#allocation2], 482
    %v3113 = vld [vmem:[%s3112] ss:$3 sm:$0xff]
    %s3114 = scalar_lea.vmem [#allocation2], 506
    %v3115 = vld [vmem:[%s3114] ss:$3 sm:$0xff]
    %s3116 = scalar_lea.vmem [#allocation2], 530
    %v3117 = vld [vmem:[%s3116] ss:$3 sm:$0xff]
    %s3118 = scalar_lea.vmem [#allocation2], 554
    %v3119 = vld [vmem:[%s3118] ss:$3 sm:$0xff]
    %s3120 = scalar_lea.vmem [#allocation2], 578
    %v3121 = vld [vmem:[%s3120] ss:$3 sm:$0xff]
    %s3122 = scalar_lea.vmem [#allocation2], 602
    %v3123 = vld [vmem:[%s3122] ss:$3 sm:$0xff]
    %s3124 = scalar_lea.vmem [#allocation2], 626
    %v3125 = vld [vmem:[%s3124] ss:$3 sm:$0xff]
    %s3126 = scalar_lea.vmem [#allocation2], 650
    %v3127 = vld [vmem:[%s3126] ss:$3 sm:$0xff]
    %s3128 = scalar_lea.vmem [#allocation2], 674
    %v3129 = vld [vmem:[%s3128] ss:$3 sm:$0xff]
    %s3130 = scalar_lea.vmem [#allocation2], 698
    %v3131 = vld [vmem:[%s3130] ss:$3 sm:$0xff]
    %s3132 = scalar_lea.vmem [#allocation2], 722
    %v3133 = vld [vmem:[%s3132] ss:$3 sm:$0xff]
    %s3134 = scalar_lea.vmem [#allocation2], 746
    %v3135 = vld [vmem:[%s3134] ss:$3 sm:$0xff]
    %s3136 = scalar_lea.vmem [#allocation2], 770
    %v3137 = vld [vmem:[%s3136] ss:$3 sm:$0xff]
    %s3138 = scalar_lea.vmem [#allocation2], 794
    %v3139 = vld [vmem:[%s3138] ss:$3 sm:$0xff]
    %s3140 = scalar_lea.vmem [#allocation2], 818
    %v3141 = vld [vmem:[%s3140] ss:$3 sm:$0xff]
    %s3142 = scalar_lea.vmem [#allocation2], 842
    %v3143 = vld [vmem:[%s3142] ss:$3 sm:$0xff]
    %s3144 = scalar_lea.vmem [#allocation2], 866
    %v3145 = vld [vmem:[%s3144] ss:$3 sm:$0xff]
    %s3146 = scalar_lea.vmem [#allocation2], 890
    %v3147 = vld [vmem:[%s3146] ss:$3 sm:$0xff]
    %s3148 = scalar_lea.vmem [#allocation2], 914
    %v3149 = vld [vmem:[%s3148] ss:$3 sm:$0xff]
    %s3150 = scalar_lea.vmem [#allocation2], 938
    %v3151 = vld [vmem:[%s3150] ss:$3 sm:$0xff]
    %s3152 = scalar_lea.vmem [#allocation2], 962
    %v3153 = vld [vmem:[%s3152] ss:$3 sm:$0xff]
    %s3154 = scalar_lea.vmem [#allocation2], 986
    %v3155 = vld [vmem:[%s3154] ss:$3 sm:$0xff]
    %s3156 = scalar_lea.vmem [#allocation2], 1010
    %v3157 = vld [vmem:[%s3156] ss:$3 sm:$0xff]
    %s3158 = scalar_lea.vmem [#allocation2], 1034
    %v3159 = vld [vmem:[%s3158] ss:$3 sm:$0xff]
    %s3160 = scalar_lea.vmem [#allocation2], 1058
    %v3161 = vld [vmem:[%s3160] ss:$3 sm:$0xff]
    %s3162 = scalar_lea.vmem [#allocation2], 1082
    %v3163 = vld [vmem:[%s3162] ss:$3 sm:$0xff]
    %s3164 = scalar_lea.vmem [#allocation2], 1106
    %v3165 = vld [vmem:[%s3164] ss:$3 sm:$0xff]
    %s3166 = scalar_lea.vmem [#allocation2], 1130
    %v3167 = vld [vmem:[%s3166] ss:$3 sm:$0xff]
    %v3168 = vmax.f32 %v2881, %v2977
    %v3169 = vmax.f32 %v2883, %v2979
    %v3170 = vmax.f32 %v2885, %v2981
    %v3171 = vmax.f32 %v2887, %v2983
    %v3172 = vmax.f32 %v2889, %v2985
    %v3173 = vmax.f32 %v2891, %v2987
    %v3174 = vmax.f32 %v2893, %v2989
    %v3175 = vmax.f32 %v2895, %v2991
    %v3176 = vmax.f32 %v2897, %v2993
    %v3177 = vmax.f32 %v2899, %v2995
    %v3178 = vmax.f32 %v2901, %v2997
    %v3179 = vmax.f32 %v2903, %v2999
    %v3180 = vmax.f32 %v2905, %v3001
    %v3181 = vmax.f32 %v2907, %v3003
    %v3182 = vmax.f32 %v2909, %v3005
    %v3183 = vmax.f32 %v2911, %v3007
    %v3184 = vmax.f32 %v2913, %v3009
    %v3185 = vmax.f32 %v2915, %v3011
    %v3186 = vmax.f32 %v2917, %v3013
    %v3187 = vmax.f32 %v2919, %v3015
    %v3188 = vmax.f32 %v2921, %v3017
    %v3189 = vmax.f32 %v2923, %v3019
    %v3190 = vmax.f32 %v2925, %v3021
    %v3191 = vmax.f32 %v2927, %v3023
    %v3192 = vmax.f32 %v2929, %v3025
    %v3193 = vmax.f32 %v2931, %v3027
    %v3194 = vmax.f32 %v2933, %v3029
    %v3195 = vmax.f32 %v2935, %v3031
    %v3196 = vmax.f32 %v2937, %v3033
    %v3197 = vmax.f32 %v2939, %v3035
    %v3198 = vmax.f32 %v2941, %v3037
    %v3199 = vmax.f32 %v2943, %v3039
    %v3200 = vmax.f32 %v2945, %v3041
    %v3201 = vmax.f32 %v2947, %v3043
    %v3202 = vmax.f32 %v2949, %v3045
    %v3203 = vmax.f32 %v2951, %v3047
    %v3204 = vmax.f32 %v2953, %v3049
    %v3205 = vmax.f32 %v2955, %v3051
    %v3206 = vmax.f32 %v2957, %v3053
    %v3207 = vmax.f32 %v2959, %v3055
    %v3208 = vmax.f32 %v2961, %v3057
    %v3209 = vmax.f32 %v2963, %v3059
    %v3210 = vmax.f32 %v2965, %v3061
    %v3211 = vmax.f32 %v2967, %v3063
    %v3212 = vmax.f32 %v2969, %v3065
    %v3213 = vmax.f32 %v2971, %v3067
    %v3214 = vmax.f32 %v2973, %v3069
    %v3215 = vmax.f32 %v2975, %v3071
    %v3216 = vmax.f32 %v3168, %v3073
    %v3217 = vmax.f32 %v3169, %v3075
    %v3218 = vmax.f32 %v3170, %v3077
    %v3219 = vmax.f32 %v3171, %v3079
    %v3220 = vmax.f32 %v3172, %v3081
    %v3221 = vmax.f32 %v3173, %v3083
    %v3222 = vmax.f32 %v3174, %v3085
    %v3223 = vmax.f32 %v3175, %v3087
    %v3224 = vmax.f32 %v3176, %v3089
    %v3225 = vmax.f32 %v3177, %v3091
    %v3226 = vmax.f32 %v3178, %v3093
    %v3227 = vmax.f32 %v3179, %v3095
    %v3228 = vmax.f32 %v3180, %v3097
    %v3229 = vmax.f32 %v3181, %v3099
    %v3230 = vmax.f32 %v3182, %v3101
    %v3231 = vmax.f32 %v3183, %v3103
    %v3232 = vmax.f32 %v3184, %v3105
    %v3233 = vmax.f32 %v3185, %v3107
    %v3234 = vmax.f32 %v3186, %v3109
    %v3235 = vmax.f32 %v3187, %v3111
    %v3236 = vmax.f32 %v3188, %v3113
    %v3237 = vmax.f32 %v3189, %v3115
    %v3238 = vmax.f32 %v3190, %v3117
    %v3239 = vmax.f32 %v3191, %v3119
    %v3240 = vmax.f32 %v3192, %v3121
    %v3241 = vmax.f32 %v3193, %v3123
    %v3242 = vmax.f32 %v3194, %v3125
    %v3243 = vmax.f32 %v3195, %v3127
    %v3244 = vmax.f32 %v3196, %v3129
    %v3245 = vmax.f32 %v3197, %v3131
    %v3246 = vmax.f32 %v3198, %v3133
    %v3247 = vmax.f32 %v3199, %v3135
    %v3248 = vmax.f32 %v3200, %v3137
    %v3249 = vmax.f32 %v3201, %v3139
    %v3250 = vmax.f32 %v3202, %v3141
    %v3251 = vmax.f32 %v3203, %v3143
    %v3252 = vmax.f32 %v3204, %v3145
    %v3253 = vmax.f32 %v3205, %v3147
    %v3254 = vmax.f32 %v3206, %v3149
    %v3255 = vmax.f32 %v3207, %v3151
    %v3256 = vmax.f32 %v3208, %v3153
    %v3257 = vmax.f32 %v3209, %v3155
    %v3258 = vmax.f32 %v3210, %v3157
    %v3259 = vmax.f32 %v3211, %v3159
    %v3260 = vmax.f32 %v3212, %v3161
    %v3261 = vmax.f32 %v3213, %v3163
    %v3262 = vmax.f32 %v3214, %v3165
    %v3263 = vmax.f32 %v3215, %v3167
    %v3312 = vrot.slane %v3216, 1
    %v3313 = vrot.slane %v3217, 1
    %v3314 = vsel %vm327, %v3312, %v3313
    %v3315 = vrot.slane %v3218, 1
    %v3316 = vsel %vm327, %v3313, %v3315
    %v3317 = vrot.slane %v3219, 1
    %v3318 = vsel %vm327, %v3315, %v3317
    %v3319 = vrot.slane %v3220, 1
    %v3320 = vsel %vm327, %v3317, %v3319
    %v3321 = vrot.slane %v3221, 1
    %v3322 = vsel %vm327, %v3319, %v3321
    %v3323 = vrot.slane %v3222, 1
    %v3324 = vsel %vm327, %v3321, %v3323
    %v3325 = vrot.slane %v3223, 1
    %v3326 = vsel %vm327, %v3323, %v3325
    %v3327 = vrot.slane %v3224, 1
    %v3328 = vsel %vm327, %v3325, %v3327
    %v3329 = vrot.slane %v3225, 1
    %v3330 = vsel %vm327, %v3327, %v3329
    %v3331 = vrot.slane %v3226, 1
    %v3332 = vsel %vm327, %v3329, %v3331
    %v3333 = vrot.slane %v3227, 1
    %v3334 = vsel %vm327, %v3331, %v3333
    %v3335 = vrot.slane %v3228, 1
    %v3336 = vsel %vm327, %v3333, %v3335
    %v3337 = vrot.slane %v3229, 1
    %v3338 = vsel %vm327, %v3335, %v3337
    %v3339 = vrot.slane %v3230, 1
    %v3340 = vsel %vm327, %v3337, %v3339
    %v3341 = vrot.slane %v3231, 1
    %v3342 = vsel %vm327, %v3339, %v3341
    %v3343 = vrot.slane %v3232, 1
    %v3344 = vsel %vm327, %v3341, %v3343
    %v3345 = vrot.slane %v3233, 1
    %v3346 = vsel %vm327, %v3343, %v3345
    %v3347 = vrot.slane %v3234, 1
    %v3348 = vsel %vm327, %v3345, %v3347
    %v3349 = vrot.slane %v3235, 1
    %v3350 = vsel %vm327, %v3347, %v3349
    %v3351 = vrot.slane %v3236, 1
    %v3352 = vsel %vm327, %v3349, %v3351
    %v3353 = vrot.slane %v3237, 1
    %v3354 = vsel %vm327, %v3351, %v3353
    %v3355 = vrot.slane %v3238, 1
    %v3356 = vsel %vm327, %v3353, %v3355
    %v3357 = vrot.slane %v3239, 1
    %v3358 = vsel %vm327, %v3355, %v3357
    %v3359 = vrot.slane %v3240, 1
    %v3360 = vsel %vm327, %v3357, %v3359
    %v3361 = vrot.slane %v3241, 1
    %v3362 = vsel %vm327, %v3359, %v3361
    %v3363 = vrot.slane %v3242, 1
    %v3364 = vsel %vm327, %v3361, %v3363
    %v3365 = vrot.slane %v3243, 1
    %v3366 = vsel %vm327, %v3363, %v3365
    %v3367 = vrot.slane %v3244, 1
    %v3368 = vsel %vm327, %v3365, %v3367
    %v3369 = vrot.slane %v3245, 1
    %v3370 = vsel %vm327, %v3367, %v3369
    %v3371 = vrot.slane %v3246, 1
    %v3372 = vsel %vm327, %v3369, %v3371
    %v3373 = vrot.slane %v3247, 1
    %v3374 = vsel %vm327, %v3371, %v3373
    %v3375 = vrot.slane %v3248, 1
    %v3376 = vsel %vm327, %v3373, %v3375
    %v3377 = vrot.slane %v3249, 1
    %v3378 = vsel %vm327, %v3375, %v3377
    %v3379 = vrot.slane %v3250, 1
    %v3380 = vsel %vm327, %v3377, %v3379
    %v3381 = vrot.slane %v3251, 1
    %v3382 = vsel %vm327, %v3379, %v3381
    %v3383 = vrot.slane %v3252, 1
    %v3384 = vsel %vm327, %v3381, %v3383
    %v3385 = vrot.slane %v3253, 1
    %v3386 = vsel %vm327, %v3383, %v3385
    %v3387 = vrot.slane %v3254, 1
    %v3388 = vsel %vm327, %v3385, %v3387
    %v3389 = vrot.slane %v3255, 1
    %v3390 = vsel %vm327, %v3387, %v3389
    %v3391 = vrot.slane %v3256, 1
    %v3392 = vsel %vm327, %v3389, %v3391
    %v3393 = vrot.slane %v3257, 1
    %v3394 = vsel %vm327, %v3391, %v3393
    %v3395 = vrot.slane %v3258, 1
    %v3396 = vsel %vm327, %v3393, %v3395
    %v3397 = vrot.slane %v3259, 1
    %v3398 = vsel %vm327, %v3395, %v3397
    %v3399 = vrot.slane %v3260, 1
    %v3400 = vsel %vm327, %v3397, %v3399
    %v3401 = vrot.slane %v3261, 1
    %v3402 = vsel %vm327, %v3399, %v3401
    %v3403 = vrot.slane %v3262, 1
    %v3404 = vsel %vm327, %v3401, %v3403
    %v3405 = vrot.slane %v3263, 1
    %v3406 = vsel %vm327, %v3403, %v3405
    %v3409 = vsel %vm327, %v3405, %v3312
    %v3410 = vrot.slane %v3216, 2
    %v3411 = vrot.slane %v3217, 2
    %v3412 = vsel %vm618, %v3410, %v3411
    %v3413 = vrot.slane %v3218, 2
    %v3414 = vsel %vm618, %v3411, %v3413
    %v3415 = vrot.slane %v3219, 2
    %v3416 = vsel %vm618, %v3413, %v3415
    %v3417 = vrot.slane %v3220, 2
    %v3418 = vsel %vm618, %v3415, %v3417
    %v3419 = vrot.slane %v3221, 2
    %v3420 = vsel %vm618, %v3417, %v3419
    %v3421 = vrot.slane %v3222, 2
    %v3422 = vsel %vm618, %v3419, %v3421
    %v3423 = vrot.slane %v3223, 2
    %v3424 = vsel %vm618, %v3421, %v3423
    %v3425 = vrot.slane %v3224, 2
    %v3426 = vsel %vm618, %v3423, %v3425
    %v3427 = vrot.slane %v3225, 2
    %v3428 = vsel %vm618, %v3425, %v3427
    %v3429 = vrot.slane %v3226, 2
    %v3430 = vsel %vm618, %v3427, %v3429
    %v3431 = vrot.slane %v3227, 2
    %v3432 = vsel %vm618, %v3429, %v3431
    %v3433 = vrot.slane %v3228, 2
    %v3434 = vsel %vm618, %v3431, %v3433
    %v3435 = vrot.slane %v3229, 2
    %v3436 = vsel %vm618, %v3433, %v3435
    %v3437 = vrot.slane %v3230, 2
    %v3438 = vsel %vm618, %v3435, %v3437
    %v3439 = vrot.slane %v3231, 2
    %v3440 = vsel %vm618, %v3437, %v3439
    %v3441 = vrot.slane %v3232, 2
    %v3442 = vsel %vm618, %v3439, %v3441
    %v3443 = vrot.slane %v3233, 2
    %v3444 = vsel %vm618, %v3441, %v3443
    %v3445 = vrot.slane %v3234, 2
    %v3446 = vsel %vm618, %v3443, %v3445
    %v3447 = vrot.slane %v3235, 2
    %v3448 = vsel %vm618, %v3445, %v3447
    %v3449 = vrot.slane %v3236, 2
    %v3450 = vsel %vm618, %v3447, %v3449
    %v3451 = vrot.slane %v3237, 2
    %v3452 = vsel %vm618, %v3449, %v3451
    %v3453 = vrot.slane %v3238, 2
    %v3454 = vsel %vm618, %v3451, %v3453
    %v3455 = vrot.slane %v3239, 2
    %v3456 = vsel %vm618, %v3453, %v3455
    %v3457 = vrot.slane %v3240, 2
    %v3458 = vsel %vm618, %v3455, %v3457
    %v3459 = vrot.slane %v3241, 2
    %v3460 = vsel %vm618, %v3457, %v3459
    %v3461 = vrot.slane %v3242, 2
    %v3462 = vsel %vm618, %v3459, %v3461
    %v3463 = vrot.slane %v3243, 2
    %v3464 = vsel %vm618, %v3461, %v3463
    %v3465 = vrot.slane %v3244, 2
    %v3466 = vsel %vm618, %v3463, %v3465
    %v3467 = vrot.slane %v3245, 2
    %v3468 = vsel %vm618, %v3465, %v3467
    %v3469 = vrot.slane %v3246, 2
    %v3470 = vsel %vm618, %v3467, %v3469
    %v3471 = vrot.slane %v3247, 2
    %v3472 = vsel %vm618, %v3469, %v3471
    %v3473 = vrot.slane %v3248, 2
    %v3474 = vsel %vm618, %v3471, %v3473
    %v3475 = vrot.slane %v3249, 2
    %v3476 = vsel %vm618, %v3473, %v3475
    %v3477 = vrot.slane %v3250, 2
    %v3478 = vsel %vm618, %v3475, %v3477
    %v3479 = vrot.slane %v3251, 2
    %v3480 = vsel %vm618, %v3477, %v3479
    %v3481 = vrot.slane %v3252, 2
    %v3482 = vsel %vm618, %v3479, %v3481
    %v3483 = vrot.slane %v3253, 2
    %v3484 = vsel %vm618, %v3481, %v3483
    %v3485 = vrot.slane %v3254, 2
    %v3486 = vsel %vm618, %v3483, %v3485
    %v3487 = vrot.slane %v3255, 2
    %v3488 = vsel %vm618, %v3485, %v3487
    %v3489 = vrot.slane %v3256, 2
    %v3490 = vsel %vm618, %v3487, %v3489
    %v3491 = vrot.slane %v3257, 2
    %v3492 = vsel %vm618, %v3489, %v3491
    %v3493 = vrot.slane %v3258, 2
    %v3494 = vsel %vm618, %v3491, %v3493
    %v3495 = vrot.slane %v3259, 2
    %v3496 = vsel %vm618, %v3493, %v3495
    %v3497 = vrot.slane %v3260, 2
    %v3498 = vsel %vm618, %v3495, %v3497
    %v3499 = vrot.slane %v3261, 2
    %v3500 = vsel %vm618, %v3497, %v3499
    %v3501 = vrot.slane %v3262, 2
    %v3502 = vsel %vm618, %v3499, %v3501
    %v3503 = vrot.slane %v3263, 2
    %v3504 = vsel %vm618, %v3501, %v3503
    %v3507 = vsel %vm618, %v3503, %v3410
    %3509 = vrot.lane.b32.xlu0 %v3314, 32
    %v3510 = vpop.permute.xlu0 %3509
    %3511 = vrot.lane.b32.xlu0 %v3316, 32
    %v3512 = vpop.permute.xlu0 %3511
    %3513 = vrot.lane.b32.xlu0 %v3318, 32
    %v3514 = vpop.permute.xlu0 %3513
    %3515 = vrot.lane.b32.xlu0 %v3320, 32
    %v3516 = vpop.permute.xlu0 %3515
    %3517 = vrot.lane.b32.xlu0 %v3322, 32
    %v3518 = vpop.permute.xlu0 %3517
    %3519 = vrot.lane.b32.xlu0 %v3324, 32
    %v3520 = vpop.permute.xlu0 %3519
    %3521 = vrot.lane.b32.xlu0 %v3326, 32
    %v3522 = vpop.permute.xlu0 %3521
    %3523 = vrot.lane.b32.xlu0 %v3328, 32
    %v3524 = vpop.permute.xlu0 %3523
    %3525 = vrot.lane.b32.xlu0 %v3330, 32
    %v3526 = vpop.permute.xlu0 %3525
    %3527 = vrot.lane.b32.xlu0 %v3332, 32
    %v3528 = vpop.permute.xlu0 %3527
    %3529 = vrot.lane.b32.xlu0 %v3334, 32
    %v3530 = vpop.permute.xlu0 %3529
    %3531 = vrot.lane.b32.xlu0 %v3336, 32
    %v3532 = vpop.permute.xlu0 %3531
    %3533 = vrot.lane.b32.xlu0 %v3338, 32
    %v3534 = vpop.permute.xlu0 %3533
    %3535 = vrot.lane.b32.xlu0 %v3340, 32
    %v3536 = vpop.permute.xlu0 %3535
    %3537 = vrot.lane.b32.xlu0 %v3342, 32
    %v3538 = vpop.permute.xlu0 %3537
    %3539 = vrot.lane.b32.xlu0 %v3344, 32
    %v3540 = vpop.permute.xlu0 %3539
    %3541 = vrot.lane.b32.xlu0 %v3346, 32
    %v3542 = vpop.permute.xlu0 %3541
    %3543 = vrot.lane.b32.xlu0 %v3348, 32
    %v3544 = vpop.permute.xlu0 %3543
    %3545 = vrot.lane.b32.xlu0 %v3350, 32
    %v3546 = vpop.permute.xlu0 %3545
    %3547 = vrot.lane.b32.xlu0 %v3352, 32
    %v3548 = vpop.permute.xlu0 %3547
    %3549 = vrot.lane.b32.xlu0 %v3354, 32
    %v3550 = vpop.permute.xlu0 %3549
    %3551 = vrot.lane.b32.xlu0 %v3356, 32
    %v3552 = vpop.permute.xlu0 %3551
    %3553 = vrot.lane.b32.xlu0 %v3358, 32
    %v3554 = vpop.permute.xlu0 %3553
    %3555 = vrot.lane.b32.xlu0 %v3360, 32
    %v3556 = vpop.permute.xlu0 %3555
    %3557 = vrot.lane.b32.xlu0 %v3362, 32
    %v3558 = vpop.permute.xlu0 %3557
    %3559 = vrot.lane.b32.xlu0 %v3364, 32
    %v3560 = vpop.permute.xlu0 %3559
    %3561 = vrot.lane.b32.xlu0 %v3366, 32
    %v3562 = vpop.permute.xlu0 %3561
    %3563 = vrot.lane.b32.xlu0 %v3368, 32
    %v3564 = vpop.permute.xlu0 %3563
    %3565 = vrot.lane.b32.xlu0 %v3370, 32
    %v3566 = vpop.permute.xlu0 %3565
    %3567 = vrot.lane.b32.xlu0 %v3372, 32
    %v3568 = vpop.permute.xlu0 %3567
    %3569 = vrot.lane.b32.xlu0 %v3374, 32
    %v3570 = vpop.permute.xlu0 %3569
    %3571 = vrot.lane.b32.xlu0 %v3376, 32
    %v3572 = vpop.permute.xlu0 %3571
    %3573 = vrot.lane.b32.xlu0 %v3378, 32
    %v3574 = vpop.permute.xlu0 %3573
    %3575 = vrot.lane.b32.xlu0 %v3380, 32
    %v3576 = vpop.permute.xlu0 %3575
    %3577 = vrot.lane.b32.xlu0 %v3382, 32
    %v3578 = vpop.permute.xlu0 %3577
    %3579 = vrot.lane.b32.xlu0 %v3384, 32
    %v3580 = vpop.permute.xlu0 %3579
    %3581 = vrot.lane.b32.xlu0 %v3386, 32
    %v3582 = vpop.permute.xlu0 %3581
    %3583 = vrot.lane.b32.xlu0 %v3388, 32
    %v3584 = vpop.permute.xlu0 %3583
    %3585 = vrot.lane.b32.xlu0 %v3390, 32
    %v3586 = vpop.permute.xlu0 %3585
    %3587 = vrot.lane.b32.xlu0 %v3392, 32
    %v3588 = vpop.permute.xlu0 %3587
    %3589 = vrot.lane.b32.xlu0 %v3394, 32
    %v3590 = vpop.permute.xlu0 %3589
    %3591 = vrot.lane.b32.xlu0 %v3396, 32
    %v3592 = vpop.permute.xlu0 %3591
    %3593 = vrot.lane.b32.xlu0 %v3398, 32
    %v3594 = vpop.permute.xlu0 %3593
    %3595 = vrot.lane.b32.xlu0 %v3400, 32
    %v3596 = vpop.permute.xlu0 %3595
    %3597 = vrot.lane.b32.xlu0 %v3402, 32
    %v3598 = vpop.permute.xlu0 %3597
    %3599 = vrot.lane.b32.xlu0 %v3404, 32
    %v3600 = vpop.permute.xlu0 %3599
    %3601 = vrot.lane.b32.xlu0 %v3406, 32
    %v3602 = vpop.permute.xlu0 %3601
    %3603 = vrot.lane.b32.xlu0 %v3409, 32
    %v3604 = vpop.permute.xlu0 %3603
    %3654 = vrot.lane.b32.xlu0 %v3412, 64
    %v3655 = vpop.permute.xlu0 %3654
    %3656 = vrot.lane.b32.xlu0 %v3414, 64
    %v3657 = vpop.permute.xlu0 %3656
    %3658 = vrot.lane.b32.xlu0 %v3416, 64
    %v3659 = vpop.permute.xlu0 %3658
    %3660 = vrot.lane.b32.xlu0 %v3418, 64
    %v3661 = vpop.permute.xlu0 %3660
    %3662 = vrot.lane.b32.xlu0 %v3420, 64
    %v3663 = vpop.permute.xlu0 %3662
    %3664 = vrot.lane.b32.xlu0 %v3422, 64
    %v3665 = vpop.permute.xlu0 %3664
    %3666 = vrot.lane.b32.xlu0 %v3424, 64
    %v3667 = vpop.permute.xlu0 %3666
    %3668 = vrot.lane.b32.xlu0 %v3426, 64
    %v3669 = vpop.permute.xlu0 %3668
    %3670 = vrot.lane.b32.xlu0 %v3428, 64
    %v3671 = vpop.permute.xlu0 %3670
    %3672 = vrot.lane.b32.xlu0 %v3430, 64
    %v3673 = vpop.permute.xlu0 %3672
    %3674 = vrot.lane.b32.xlu0 %v3432, 64
    %v3675 = vpop.permute.xlu0 %3674
    %3676 = vrot.lane.b32.xlu0 %v3434, 64
    %v3677 = vpop.permute.xlu0 %3676
    %3678 = vrot.lane.b32.xlu0 %v3436, 64
    %v3679 = vpop.permute.xlu0 %3678
    %3680 = vrot.lane.b32.xlu0 %v3438, 64
    %v3681 = vpop.permute.xlu0 %3680
    %3682 = vrot.lane.b32.xlu0 %v3440, 64
    %v3683 = vpop.permute.xlu0 %3682
    %3684 = vrot.lane.b32.xlu0 %v3442, 64
    %v3685 = vpop.permute.xlu0 %3684
    %3686 = vrot.lane.b32.xlu0 %v3444, 64
    %v3687 = vpop.permute.xlu0 %3686
    %3688 = vrot.lane.b32.xlu0 %v3446, 64
    %v3689 = vpop.permute.xlu0 %3688
    %3690 = vrot.lane.b32.xlu0 %v3448, 64
    %v3691 = vpop.permute.xlu0 %3690
    %3692 = vrot.lane.b32.xlu0 %v3450, 64
    %v3693 = vpop.permute.xlu0 %3692
    %3694 = vrot.lane.b32.xlu0 %v3452, 64
    %v3695 = vpop.permute.xlu0 %3694
    %3696 = vrot.lane.b32.xlu0 %v3454, 64
    %v3697 = vpop.permute.xlu0 %3696
    %3698 = vrot.lane.b32.xlu0 %v3456, 64
    %v3699 = vpop.permute.xlu0 %3698
    %3700 = vrot.lane.b32.xlu0 %v3458, 64
    %v3701 = vpop.permute.xlu0 %3700
    %3702 = vrot.lane.b32.xlu0 %v3460, 64
    %v3703 = vpop.permute.xlu0 %3702
    %3704 = vrot.lane.b32.xlu0 %v3462, 64
    %v3705 = vpop.permute.xlu0 %3704
    %3706 = vrot.lane.b32.xlu0 %v3464, 64
    %v3707 = vpop.permute.xlu0 %3706
    %3708 = vrot.lane.b32.xlu0 %v3466, 64
    %v3709 = vpop.permute.xlu0 %3708
    %3710 = vrot.lane.b32.xlu0 %v3468, 64
    %v3711 = vpop.permute.xlu0 %3710
    %3712 = vrot.lane.b32.xlu0 %v3470, 64
    %v3713 = vpop.permute.xlu0 %3712
    %3714 = vrot.lane.b32.xlu0 %v3472, 64
    %v3715 = vpop.permute.xlu0 %3714
    %3716 = vrot.lane.b32.xlu0 %v3474, 64
    %v3717 = vpop.permute.xlu0 %3716
    %3718 = vrot.lane.b32.xlu0 %v3476, 64
    %v3719 = vpop.permute.xlu0 %3718
    %3720 = vrot.lane.b32.xlu0 %v3478, 64
    %v3721 = vpop.permute.xlu0 %3720
    %3722 = vrot.lane.b32.xlu0 %v3480, 64
    %v3723 = vpop.permute.xlu0 %3722
    %3724 = vrot.lane.b32.xlu0 %v3482, 64
    %v3725 = vpop.permute.xlu0 %3724
    %3726 = vrot.lane.b32.xlu0 %v3484, 64
    %v3727 = vpop.permute.xlu0 %3726
    %3728 = vrot.lane.b32.xlu0 %v3486, 64
    %v3729 = vpop.permute.xlu0 %3728
    %3730 = vrot.lane.b32.xlu0 %v3488, 64
    %v3731 = vpop.permute.xlu0 %3730
    %3732 = vrot.lane.b32.xlu0 %v3490, 64
    %v3733 = vpop.permute.xlu0 %3732
    %3734 = vrot.lane.b32.xlu0 %v3492, 64
    %v3735 = vpop.permute.xlu0 %3734
    %3736 = vrot.lane.b32.xlu0 %v3494, 64
    %v3737 = vpop.permute.xlu0 %3736
    %3738 = vrot.lane.b32.xlu0 %v3496, 64
    %v3739 = vpop.permute.xlu0 %3738
    %3740 = vrot.lane.b32.xlu0 %v3498, 64
    %v3741 = vpop.permute.xlu0 %3740
    %3742 = vrot.lane.b32.xlu0 %v3500, 64
    %v3743 = vpop.permute.xlu0 %3742
    %3744 = vrot.lane.b32.xlu0 %v3502, 64
    %v3745 = vpop.permute.xlu0 %3744
    %3746 = vrot.lane.b32.xlu0 %v3504, 64
    %v3747 = vpop.permute.xlu0 %3746
    %3748 = vrot.lane.b32.xlu0 %v3507, 64
    %v3749 = vpop.permute.xlu0 %3748
    %v3798 = vsel %vm2736, %v3216, %v3510
    %v3799 = vsel %vm2736, %v3217, %v3512
    %v3800 = vsel %vm2736, %v3218, %v3514
    %v3801 = vsel %vm2736, %v3219, %v3516
    %v3802 = vsel %vm2736, %v3220, %v3518
    %v3803 = vsel %vm2736, %v3221, %v3520
    %v3804 = vsel %vm2736, %v3222, %v3522
    %v3805 = vsel %vm2736, %v3223, %v3524
    %v3806 = vsel %vm2736, %v3224, %v3526
    %v3807 = vsel %vm2736, %v3225, %v3528
    %v3808 = vsel %vm2736, %v3226, %v3530
    %v3809 = vsel %vm2736, %v3227, %v3532
    %v3810 = vsel %vm2736, %v3228, %v3534
    %v3811 = vsel %vm2736, %v3229, %v3536
    %v3812 = vsel %vm2736, %v3230, %v3538
    %v3813 = vsel %vm2736, %v3231, %v3540
    %v3814 = vsel %vm2736, %v3232, %v3542
    %v3815 = vsel %vm2736, %v3233, %v3544
    %v3816 = vsel %vm2736, %v3234, %v3546
    %v3817 = vsel %vm2736, %v3235, %v3548
    %v3818 = vsel %vm2736, %v3236, %v3550
    %v3819 = vsel %vm2736, %v3237, %v3552
    %v3820 = vsel %vm2736, %v3238, %v3554
    %v3821 = vsel %vm2736, %v3239, %v3556
    %v3822 = vsel %vm2736, %v3240, %v3558
    %v3823 = vsel %vm2736, %v3241, %v3560
    %v3824 = vsel %vm2736, %v3242, %v3562
    %v3825 = vsel %vm2736, %v3243, %v3564
    %v3826 = vsel %vm2736, %v3244, %v3566
    %v3827 = vsel %vm2736, %v3245, %v3568
    %v3828 = vsel %vm2736, %v3246, %v3570
    %v3829 = vsel %vm2736, %v3247, %v3572
    %v3830 = vsel %vm2736, %v3248, %v3574
    %v3831 = vsel %vm2736, %v3249, %v3576
    %v3832 = vsel %vm2736, %v3250, %v3578
    %v3833 = vsel %vm2736, %v3251, %v3580
    %v3834 = vsel %vm2736, %v3252, %v3582
    %v3835 = vsel %vm2736, %v3253, %v3584
    %v3836 = vsel %vm2736, %v3254, %v3586
    %v3837 = vsel %vm2736, %v3255, %v3588
    %v3838 = vsel %vm2736, %v3256, %v3590
    %v3839 = vsel %vm2736, %v3257, %v3592
    %v3840 = vsel %vm2736, %v3258, %v3594
    %v3841 = vsel %vm2736, %v3259, %v3596
    %v3842 = vsel %vm2736, %v3260, %v3598
    %v3843 = vsel %vm2736, %v3261, %v3600
    %v3844 = vsel %vm2736, %v3262, %v3602
    %v3845 = vsel %vm2736, %v3263, %v3604
    %v3846 = vsel %vm1342, %v3798, %v3655
    %v3847 = vsel %vm1342, %v3799, %v3657
    %v3848 = vsel %vm1342, %v3800, %v3659
    %v3849 = vsel %vm1342, %v3801, %v3661
    %v3850 = vsel %vm1342, %v3802, %v3663
    %v3851 = vsel %vm1342, %v3803, %v3665
    %v3852 = vsel %vm1342, %v3804, %v3667
    %v3853 = vsel %vm1342, %v3805, %v3669
    %v3854 = vsel %vm1342, %v3806, %v3671
    %v3855 = vsel %vm1342, %v3807, %v3673
    %v3856 = vsel %vm1342, %v3808, %v3675
    %v3857 = vsel %vm1342, %v3809, %v3677
    %v3858 = vsel %vm1342, %v3810, %v3679
    %v3859 = vsel %vm1342, %v3811, %v3681
    %v3860 = vsel %vm1342, %v3812, %v3683
    %v3861 = vsel %vm1342, %v3813, %v3685
    %v3862 = vsel %vm1342, %v3814, %v3687
    %v3863 = vsel %vm1342, %v3815, %v3689
    %v3864 = vsel %vm1342, %v3816, %v3691
    %v3865 = vsel %vm1342, %v3817, %v3693
    %v3866 = vsel %vm1342, %v3818, %v3695
    %v3867 = vsel %vm1342, %v3819, %v3697
    %v3868 = vsel %vm1342, %v3820, %v3699
    %v3869 = vsel %vm1342, %v3821, %v3701
    %v3870 = vsel %vm1342, %v3822, %v3703
    %v3871 = vsel %vm1342, %v3823, %v3705
    %v3872 = vsel %vm1342, %v3824, %v3707
    %v3873 = vsel %vm1342, %v3825, %v3709
    %v3874 = vsel %vm1342, %v3826, %v3711
    %v3875 = vsel %vm1342, %v3827, %v3713
    %v3876 = vsel %vm1342, %v3828, %v3715
    %v3877 = vsel %vm1342, %v3829, %v3717
    %v3878 = vsel %vm1342, %v3830, %v3719
    %v3879 = vsel %vm1342, %v3831, %v3721
    %v3880 = vsel %vm1342, %v3832, %v3723
    %v3881 = vsel %vm1342, %v3833, %v3725
    %v3882 = vsel %vm1342, %v3834, %v3727
    %v3883 = vsel %vm1342, %v3835, %v3729
    %v3884 = vsel %vm1342, %v3836, %v3731
    %v3885 = vsel %vm1342, %v3837, %v3733
    %v3886 = vsel %vm1342, %v3838, %v3735
    %v3887 = vsel %vm1342, %v3839, %v3737
    %v3888 = vsel %vm1342, %v3840, %v3739
    %v3889 = vsel %vm1342, %v3841, %v3741
    %v3890 = vsel %vm1342, %v3842, %v3743
    %v3891 = vsel %vm1342, %v3843, %v3745
    %v3892 = vsel %vm1342, %v3844, %v3747
    %v3893 = vsel %vm1342, %v3845, %v3749
    %v3894 = vld [vmem:[%s3] sm:$0xff]
    %v3895 = vld [vmem:[%s3 + $0x8] sm:$0xff]
    %v3896 = vld [vmem:[%s3 + $0x10] sm:$0xff]
    %v3897 = vld [vmem:[%s3 + $0x18] sm:$0xff]
    %v3898 = vld [vmem:[%s3 + $0x20] sm:$0xff]
    %v3899 = vld [vmem:[%s3 + $0x28] sm:$0xff]
    %v3900 = vld [vmem:[%s3 + $0x30] sm:$0xff]
    %v3901 = vld [vmem:[%s3 + $0x38] sm:$0xff]
    %v3902 = vld [vmem:[%s3 + $0x40] sm:$0xff]
    %v3903 = vld [vmem:[%s3 + $0x48] sm:$0xff]
    %v3904 = vld [vmem:[%s3 + $0x50] sm:$0xff]
    %v3905 = vld [vmem:[%s3 + $0x58] sm:$0xff]
    %v3906 = vld [vmem:[%s4] sm:$0x1]
    %v3908 = vlaneseq
    %v3909 = vshrl.u32 %v3908, 7
    %v3910 = vsub.s32 0, %v3909
    %v3911 = vrot.slane %v3906, %v3910
    %vm3913 = vcmask 785408
    %v3915 = vsel %vm3913, %v3846, 0
    %v3918 = vsel %vm3913, %v3847, 0
    %v3921 = vsel %vm3913, %v3848, 0
    %v3924 = vsel %vm3913, %v3849, 0
    %v3927 = vsel %vm3913, %v3850, 0
    %v3930 = vsel %vm3913, %v3851, 0
    %v3933 = vsel %vm3913, %v3852, 0
    %v3936 = vsel %vm3913, %v3853, 0
    %v3939 = vsel %vm3913, %v3854, 0
    %v3942 = vsel %vm3913, %v3855, 0
    %v3945 = vsel %vm3913, %v3856, 0
    %v3948 = vsel %vm3913, %v3857, 0
    %v3951 = vsel %vm3913, %v3858, 0
    %v3954 = vsel %vm3913, %v3859, 0
    %v3957 = vsel %vm3913, %v3860, 0
    %v3960 = vsel %vm3913, %v3861, 0
    %v3963 = vsel %vm3913, %v3862, 0
    %v3966 = vsel %vm3913, %v3863, 0
    %v3969 = vsel %vm3913, %v3864, 0
    %v3972 = vsel %vm3913, %v3865, 0
    %v3975 = vsel %vm3913, %v3866, 0
    %v3978 = vsel %vm3913, %v3867, 0
    %v3981 = vsel %vm3913, %v3868, 0
    %v3984 = vsel %vm3913, %v3869, 0
    %v3987 = vsel %vm3913, %v3870, 0
    %v3990 = vsel %vm3913, %v3871, 0
    %v3993 = vsel %vm3913, %v3872, 0
    %v3996 = vsel %vm3913, %v3873, 0
    %v3999 = vsel %vm3913, %v3874, 0
    %v4002 = vsel %vm3913, %v3875, 0
    %v4005 = vsel %vm3913, %v3876, 0
    %v4008 = vsel %vm3913, %v3877, 0
    %v4011 = vsel %vm3913, %v3878, 0
    %v4014 = vsel %vm3913, %v3879, 0
    %v4017 = vsel %vm3913, %v3880, 0
    %v4020 = vsel %vm3913, %v3881, 0
    %v4023 = vsel %vm3913, %v3882, 0
    %v4026 = vsel %vm3913, %v3883, 0
    %v4029 = vsel %vm3913, %v3884, 0
    %v4032 = vsel %vm3913, %v3885, 0
    %v4035 = vsel %vm3913, %v3886, 0
    %v4038 = vsel %vm3913, %v3887, 0
    %v4041 = vsel %vm3913, %v3888, 0
    %v4044 = vsel %vm3913, %v3889, 0
    %v4047 = vsel %vm3913, %v3890, 0
    %v4050 = vsel %vm3913, %v3891, 0
    %v4053 = vsel %vm3913, %v3892, 0
    %v4056 = vsel %vm3913, %v3893, 0
    %4058 = vmatprep.subr.mxu0 0.0
    %4059 = vmatpush1.msra.mxu0 %v3894
    %4060 = vmatprep.subr.mxu0 0.0
    %4061 = vmatpush1.msra.mxu0 %v3895
    %4062 = vmatprep.subr.mxu0 0.0
    %4063 = vmatpush1.msra.mxu0 %v3896
    %4064 = vmatprep.subr.mxu0 0.0
    %4065 = vmatpush1.msra.mxu0 %v3897
    %4066 = vmatprep.subr.mxu0 0.0
    %4067 = vmatpush1.msra.mxu0 %v3898
    %4068 = vmatprep.subr.mxu0 0.0
    %4069 = vmatpush1.msra.mxu0 %v3899
    %4070 = vmatprep.subr.mxu0 0.0
    %4071 = vmatpush1.msra.mxu0 %v3900
    %4072 = vmatprep.subr.mxu0 0.0
    %4073 = vmatpush1.msra.mxu0 %v3901
    %4074 = vmatprep.subr.mxu0 0.0
    %4075 = vmatpush1.msra.mxu0 %v3902
    %4076 = vmatprep.subr.mxu0 0.0
    %4077 = vmatpush1.msra.mxu0 %v3903
    %4078 = vmatprep.subr.mxu0 0.0
    %4079 = vmatpush1.msra.mxu0 %v3904
    %4080 = vmatprep.subr.mxu0 0.0
    %4081 = vmatpush1.msra.mxu0 %v3905
    %4082 = vmatprep.subr.mxu0 0.0
    %4083 = vmatpush1.msra.mxu0 0.0
    %4084 = vmatprep.subr.mxu0 0.0
    %4085 = vmatpush1.msra.mxu0 0.0
    %4086 = vmatprep.subr.mxu0 0.0
    %4087 = vmatpush1.msra.mxu0 0.0
    %4088 = vmatprep.subr.mxu0 0.0
    %4089 = vmatpush1.msra.mxu0 0.0
    %4090 = vmatprep.subr.mxu0 0.0
    %4091 = vmatpush1.msra.mxu0 0.0
    %4092 = vmatprep.subr.mxu0 0.0
    %4093 = vmatpush1.msra.mxu0 0.0
    %4094 = vmatprep.subr.mxu0 0.0
    %4095 = vmatpush1.msra.mxu0 0.0
    %4096 = vmatprep.subr.mxu0 0.0
    %4097 = vmatpush1.msra.mxu0 0.0
    %4098 = vmatprep.subr.mxu0 0.0
    %4099 = vmatpush1.msra.mxu0 0.0
    %4100 = vmatprep.subr.mxu0 0.0
    %4101 = vmatpush1.msra.mxu0 0.0
    %4102 = vmatprep.subr.mxu0 0.0
    %4103 = vmatpush1.msra.mxu0 0.0
    %4104 = vmatprep.subr.mxu0 0.0
    %4105 = vmatpush1.msra.mxu0 0.0
    %4106 = vmatprep.subr.mxu0 0.0
    %4107 = vmatpush1.msra.mxu0 0.0
    %4108 = vmatprep.subr.mxu0 0.0
    %4109 = vmatpush1.msra.mxu0 0.0
    %4110 = vmatprep.subr.mxu0 0.0
    %4111 = vmatpush1.msra.mxu0 0.0
    %4112 = vmatprep.subr.mxu0 0.0
    %4113 = vmatpush1.msra.mxu0 0.0
    %4114 = vmatprep.subr.mxu0 0.0
    %4115 = vmatpush1.msra.mxu0 0.0
    %4116 = vmatprep.subr.mxu0 0.0
    %4117 = vmatpush1.msra.mxu0 0.0
    %4118 = vmatprep.subr.mxu0 0.0
    %4119 = vmatpush1.msra.mxu0 0.0
    %4120 = vmatprep.subr.mxu0 0.0
    %4121 = vmatpush1.msra.mxu0 0.0
    %4122 = vmatprep.mubr.f32.mxu0 0.0
    %4123 = vmatmul.mubr.f32.gmra.mrb[0].mxu0 %v3915
    %v4124 = vpop.f32.mrb[0].mxu0
    %v4125 = vadd.f32 %v3911, %v4124
    %v4126 = vpop.f32.mrb[0].mxu0
    %4127 = vmatprep.mubr.f32.mxu0 0.0
    %4128 = vmatmul.mubr.f32.gmra.mrb[0].mxu0 %v3918
    %v4129 = vpop.f32.mrb[0].mxu0
    %v4130 = vadd.f32 %v3911, %v4129
    %v4131 = vpop.f32.mrb[0].mxu0
    %4132 = vmatprep.mubr.f32.mxu0 0.0
    %4133 = vmatmul.mubr.f32.gmra.mrb[0].mxu0 %v3921
    %v4134 = vpop.f32.mrb[0].mxu0
    %v4135 = vadd.f32 %v3911, %v4134
    %v4136 = vpop.f32.mrb[0].mxu0
    %4137 = vmatprep.mubr.f32.mxu0 0.0
    %4138 = vmatmul.mubr.f32.gmra.mrb[0].mxu0 %v3924
    %v4139 = vpop.f32.mrb[0].mxu0
    %v4140 = vadd.f32 %v3911, %v4139
    %v4141 = vpop.f32.mrb[0].mxu0
    %4142 = vmatprep.mubr.f32.mxu0 0.0
    %4143 = vmatmul.mubr.f32.gmra.mrb[0].mxu0 %v3927
    %v4144 = vpop.f32.mrb[0].mxu0
    %v4145 = vadd.f32 %v3911, %v4144
    %v4146 = vpop.f32.mrb[0].mxu0
    %4147 = vmatprep.mubr.f32.mxu0 0.0
    %4148 = vmatmul.mubr.f32.gmra.mrb[0].mxu0 %v3930
    %v4149 = vpop.f32.mrb[0].mxu0
    %v4150 = vadd.f32 %v3911, %v4149
    %v4151 = vpop.f32.mrb[0].mxu0
    %4152 = vmatprep.mubr.f32.mxu0 0.0
    %4153 = vmatmul.mubr.f32.gmra.mrb[0].mxu0 %v3933
    %v4154 = vpop.f32.mrb[0].mxu0
    %v4155 = vadd.f32 %v3911, %v4154
    %v4156 = vpop.f32.mrb[0].mxu0
    %4157 = vmatprep.mubr.f32.mxu0 0.0
    %4158 = vmatmul.mubr.f32.gmra.mrb[0].mxu0 %v3936
    %v4159 = vpop.f32.mrb[0].mxu0
    %v4160 = vadd.f32 %v3911, %v4159
    %v4161 = vpop.f32.mrb[0].mxu0
    %4162 = vmatprep.mubr.f32.mxu0 0.0
    %4163 = vmatmul.mubr.f32.gmra.mrb[0].mxu0 %v3939
    %v4164 = vpop.f32.mrb[0].mxu0
    %v4165 = vadd.f32 %v3911, %v4164
    %v4166 = vpop.f32.mrb[0].mxu0
    %4167 = vmatprep.mubr.f32.mxu0 0.0
    %4168 = vmatmul.mubr.f32.gmra.mrb[0].mxu0 %v3942
    %v4169 = vpop.f32.mrb[0].mxu0
    %v4170 = vadd.f32 %v3911, %v4169
    %v4171 = vpop.f32.mrb[0].mxu0
    %4172 = vmatprep.mubr.f32.mxu0 0.0
    %4173 = vmatmul.mubr.f32.gmra.mrb[0].mxu0 %v3945
    %v4174 = vpop.f32.mrb[0].mxu0
    %v4175 = vadd.f32 %v3911, %v4174
    %v4176 = vpop.f32.mrb[0].mxu0
    %4177 = vmatprep.mubr.f32.mxu0 0.0
    %4178 = vmatmul.mubr.f32.gmra.mrb[0].mxu0 %v3948
    %v4179 = vpop.f32.mrb[0].mxu0
    %v4180 = vadd.f32 %v3911, %v4179
    %v4181 = vpop.f32.mrb[0].mxu0
    %4182 = vmatprep.mubr.f32.mxu0 0.0
    %4183 = vmatmul.mubr.f32.gmra.mrb[0].mxu0 %v3951
    %v4184 = vpop.f32.mrb[0].mxu0
    %v4185 = vadd.f32 %v3911, %v4184
    %v4186 = vpop.f32.mrb[0].mxu0
    %4187 = vmatprep.mubr.f32.mxu0 0.0
    %4188 = vmatmul.mubr.f32.gmra.mrb[0].mxu0 %v3954
    %v4189 = vpop.f32.mrb[0].mxu0
    %v4190 = vadd.f32 %v3911, %v4189
    %v4191 = vpop.f32.mrb[0].mxu0
    %4192 = vmatprep.mubr.f32.mxu0 0.0
    %4193 = vmatmul.mubr.f32.gmra.mrb[0].mxu0 %v3957
    %v4194 = vpop.f32.mrb[0].mxu0
    %v4195 = vadd.f32 %v3911, %v4194
    %v4196 = vpop.f32.mrb[0].mxu0
    %4197 = vmatprep.mubr.f32.mxu0 0.0
    %4198 = vmatmul.mubr.f32.gmra.mrb[0].mxu0 %v3960
    %v4199 = vpop.f32.mrb[0].mxu0
    %v4200 = vadd.f32 %v3911, %v4199
    %v4201 = vpop.f32.mrb[0].mxu0
    %4202 = vmatprep.mubr.f32.mxu0 0.0
    %4203 = vmatmul.mubr.f32.gmra.mrb[0].mxu0 %v3963
    %v4204 = vpop.f32.mrb[0].mxu0
    %v4205 = vadd.f32 %v3911, %v4204
    %v4206 = vpop.f32.mrb[0].mxu0
    %4207 = vmatprep.mubr.f32.mxu0 0.0
    %4208 = vmatmul.mubr.f32.gmra.mrb[0].mxu0 %v3966
    %v4209 = vpop.f32.mrb[0].mxu0
    %v4210 = vadd.f32 %v3911, %v4209
    %v4211 = vpop.f32.mrb[0].mxu0
    %4212 = vmatprep.mubr.f32.mxu0 0.0
    %4213 = vmatmul.mubr.f32.gmra.mrb[0].mxu0 %v3969
    %v4214 = vpop.f32.mrb[0].mxu0
    %v4215 = vadd.f32 %v3911, %v4214
    %v4216 = vpop.f32.mrb[0].mxu0
    %4217 = vmatprep.mubr.f32.mxu0 0.0
    %4218 = vmatmul.mubr.f32.gmra.mrb[0].mxu0 %v3972
    %v4219 = vpop.f32.mrb[0].mxu0
    %v4220 = vadd.f32 %v3911, %v4219
    %v4221 = vpop.f32.mrb[0].mxu0
    %4222 = vmatprep.mubr.f32.mxu0 0.0
    %4223 = vmatmul.mubr.f32.gmra.mrb[0].mxu0 %v3975
    %v4224 = vpop.f32.mrb[0].mxu0
    %v4225 = vadd.f32 %v3911, %v4224
    %v4226 = vpop.f32.mrb[0].mxu0
    %4227 = vmatprep.mubr.f32.mxu0 0.0
    %4228 = vmatmul.mubr.f32.gmra.mrb[0].mxu0 %v3978
    %v4229 = vpop.f32.mrb[0].mxu0
    %v4230 = vadd.f32 %v3911, %v4229
    %v4231 = vpop.f32.mrb[0].mxu0
    %4232 = vmatprep.mubr.f32.mxu0 0.0
    %4233 = vmatmul.mubr.f32.gmra.mrb[0].mxu0 %v3981
    %v4234 = vpop.f32.mrb[0].mxu0
    %v4235 = vadd.f32 %v3911, %v4234
    %v4236 = vpop.f32.mrb[0].mxu0
    %4237 = vmatprep.mubr.f32.mxu0 0.0
    %4238 = vmatmul.mubr.f32.gmra.mrb[0].mxu0 %v3984
    %v4239 = vpop.f32.mrb[0].mxu0
    %v4240 = vadd.f32 %v3911, %v4239
    %v4241 = vpop.f32.mrb[0].mxu0
    %4242 = vmatprep.mubr.f32.mxu0 0.0
    %4243 = vmatmul.mubr.f32.gmra.mrb[0].mxu0 %v3987
    %v4244 = vpop.f32.mrb[0].mxu0
    %v4245 = vadd.f32 %v3911, %v4244
    %v4246 = vpop.f32.mrb[0].mxu0
    %4247 = vmatprep.mubr.f32.mxu0 0.0
    %4248 = vmatmul.mubr.f32.gmra.mrb[0].mxu0 %v3990
    %v4249 = vpop.f32.mrb[0].mxu0
    %v4250 = vadd.f32 %v3911, %v4249
    %v4251 = vpop.f32.mrb[0].mxu0
    %4252 = vmatprep.mubr.f32.mxu0 0.0
    %4253 = vmatmul.mubr.f32.gmra.mrb[0].mxu0 %v3993
    %v4254 = vpop.f32.mrb[0].mxu0
    %v4255 = vadd.f32 %v3911, %v4254
    %v4256 = vpop.f32.mrb[0].mxu0
    %4257 = vmatprep.mubr.f32.mxu0 0.0
    %4258 = vmatmul.mubr.f32.gmra.mrb[0].mxu0 %v3996
    %v4259 = vpop.f32.mrb[0].mxu0
    %v4260 = vadd.f32 %v3911, %v4259
    %v4261 = vpop.f32.mrb[0].mxu0
    %4262 = vmatprep.mubr.f32.mxu0 0.0
    %4263 = vmatmul.mubr.f32.gmra.mrb[0].mxu0 %v3999
    %v4264 = vpop.f32.mrb[0].mxu0
    %v4265 = vadd.f32 %v3911, %v4264
    %v4266 = vpop.f32.mrb[0].mxu0
    %4267 = vmatprep.mubr.f32.mxu0 0.0
    %4268 = vmatmul.mubr.f32.gmra.mrb[0].mxu0 %v4002
    %v4269 = vpop.f32.mrb[0].mxu0
    %v4270 = vadd.f32 %v3911, %v4269
    %v4271 = vpop.f32.mrb[0].mxu0
    %4272 = vmatprep.mubr.f32.mxu0 0.0
    %4273 = vmatmul.mubr.f32.gmra.mrb[0].mxu0 %v4005
    %v4274 = vpop.f32.mrb[0].mxu0
    %v4275 = vadd.f32 %v3911, %v4274
    %v4276 = vpop.f32.mrb[0].mxu0
    %4277 = vmatprep.mubr.f32.mxu0 0.0
    %4278 = vmatmul.mubr.f32.gmra.mrb[0].mxu0 %v4008
    %v4279 = vpop.f32.mrb[0].mxu0
    %v4280 = vadd.f32 %v3911, %v4279
    %v4281 = vpop.f32.mrb[0].mxu0
    %4282 = vmatprep.mubr.f32.mxu0 0.0
    %4283 = vmatmul.mubr.f32.gmra.mrb[0].mxu0 %v4011
    %v4284 = vpop.f32.mrb[0].mxu0
    %v4285 = vadd.f32 %v3911, %v4284
    %v4286 = vpop.f32.mrb[0].mxu0
    %4287 = vmatprep.mubr.f32.mxu0 0.0
    %4288 = vmatmul.mubr.f32.gmra.mrb[0].mxu0 %v4014
    %v4289 = vpop.f32.mrb[0].mxu0
    %v4290 = vadd.f32 %v3911, %v4289
    %v4291 = vpop.f32.mrb[0].mxu0
    %4292 = vmatprep.mubr.f32.mxu0 0.0
    %4293 = vmatmul.mubr.f32.gmra.mrb[0].mxu0 %v4017
    %v4294 = vpop.f32.mrb[0].mxu0
    %v4295 = vadd.f32 %v3911, %v4294
    %v4296 = vpop.f32.mrb[0].mxu0
    %4297 = vmatprep.mubr.f32.mxu0 0.0
    %4298 = vmatmul.mubr.f32.gmra.mrb[0].mxu0 %v4020
    %v4299 = vpop.f32.mrb[0].mxu0
    %v4300 = vadd.f32 %v3911, %v4299
    %v4301 = vpop.f32.mrb[0].mxu0
    %4302 = vmatprep.mubr.f32.mxu0 0.0
    %4303 = vmatmul.mubr.f32.gmra.mrb[0].mxu0 %v4023
    %v4304 = vpop.f32.mrb[0].mxu0
    %v4305 = vadd.f32 %v3911, %v4304
    %v4306 = vpop.f32.mrb[0].mxu0
    %4307 = vmatprep.mubr.f32.mxu0 0.0
    %4308 = vmatmul.mubr.f32.gmra.mrb[0].mxu0 %v4026
    %v4309 = vpop.f32.mrb[0].mxu0
    %v4310 = vadd.f32 %v3911, %v4309
    %v4311 = vpop.f32.mrb[0].mxu0
    %4312 = vmatprep.mubr.f32.mxu0 0.0
    %4313 = vmatmul.mubr.f32.gmra.mrb[0].mxu0 %v4029
    %v4314 = vpop.f32.mrb[0].mxu0
    %v4315 = vadd.f32 %v3911, %v4314
    %v4316 = vpop.f32.mrb[0].mxu0
    %4317 = vmatprep.mubr.f32.mxu0 0.0
    %4318 = vmatmul.mubr.f32.gmra.mrb[0].mxu0 %v4032
    %v4319 = vpop.f32.mrb[0].mxu0
    %v4320 = vadd.f32 %v3911, %v4319
    %v4321 = vpop.f32.mrb[0].mxu0
    %4322 = vmatprep.mubr.f32.mxu0 0.0
    %4323 = vmatmul.mubr.f32.gmra.mrb[0].mxu0 %v4035
    %v4324 = vpop.f32.mrb[0].mxu0
    %v4325 = vadd.f32 %v3911, %v4324
    %v4326 = vpop.f32.mrb[0].mxu0
    %4327 = vmatprep.mubr.f32.mxu0 0.0
    %4328 = vmatmul.mubr.f32.gmra.mrb[0].mxu0 %v4038
    %v4329 = vpop.f32.mrb[0].mxu0
    %v4330 = vadd.f32 %v3911, %v4329
    %v4331 = vpop.f32.mrb[0].mxu0
    %4332 = vmatprep.mubr.f32.mxu0 0.0
    %4333 = vmatmul.mubr.f32.gmra.mrb[0].mxu0 %v4041
    %v4334 = vpop.f32.mrb[0].mxu0
    %v4335 = vadd.f32 %v3911, %v4334
    %v4336 = vpop.f32.mrb[0].mxu0
    %4337 = vmatprep.mubr.f32.mxu0 0.0
    %4338 = vmatmul.mubr.f32.gmra.mrb[0].mxu0 %v4044
    %v4339 = vpop.f32.mrb[0].mxu0
    %v4340 = vadd.f32 %v3911, %v4339
    %v4341 = vpop.f32.mrb[0].mxu0
    %4342 = vmatprep.mubr.f32.mxu0 0.0
    %4343 = vmatmul.mubr.f32.gmra.mrb[0].mxu0 %v4047
    %v4344 = vpop.f32.mrb[0].mxu0
    %v4345 = vadd.f32 %v3911, %v4344
    %v4346 = vpop.f32.mrb[0].mxu0
    %4347 = vmatprep.mubr.f32.mxu0 0.0
    %4348 = vmatmul.mubr.f32.gmra.mrb[0].mxu0 %v4050
    %v4349 = vpop.f32.mrb[0].mxu0
    %v4350 = vadd.f32 %v3911, %v4349
    %v4351 = vpop.f32.mrb[0].mxu0
    %4352 = vmatprep.mubr.f32.mxu0 0.0
    %4353 = vmatmul.mubr.f32.gmra.mrb[0].mxu0 %v4053
    %v4354 = vpop.f32.mrb[0].mxu0
    %v4355 = vadd.f32 %v3911, %v4354
    %v4356 = vpop.f32.mrb[0].mxu0
    %4357 = vmatprep.mubr.f32.mxu0 0.0
    %4358 = vmatmul.mubr.f32.gmra.mrb[0].mxu0 %v4056
    %v4359 = vpop.f32.mrb[0].mxu0
    %v4360 = vadd.f32 %v3911, %v4359
    %v4361 = vpop.f32.mrb[0].mxu0
    %4362 = vdwg.mxu0
    %v4363 = vmax.f32 %v4125, 0.0
    %v4364 = vmax.f32 %v4130, 0.0
    %v4365 = vmax.f32 %v4135, 0.0
    %v4366 = vmax.f32 %v4140, 0.0
    %v4367 = vmax.f32 %v4145, 0.0
    %v4368 = vmax.f32 %v4150, 0.0
    %v4369 = vmax.f32 %v4155, 0.0
    %v4370 = vmax.f32 %v4160, 0.0
    %v4371 = vmax.f32 %v4165, 0.0
    %v4372 = vmax.f32 %v4170, 0.0
    %v4373 = vmax.f32 %v4175, 0.0
    %v4374 = vmax.f32 %v4180, 0.0
    %v4375 = vmax.f32 %v4185, 0.0
    %v4376 = vmax.f32 %v4190, 0.0
    %v4377 = vmax.f32 %v4195, 0.0
    %v4378 = vmax.f32 %v4200, 0.0
    %v4379 = vmax.f32 %v4205, 0.0
    %v4380 = vmax.f32 %v4210, 0.0
    %v4381 = vmax.f32 %v4215, 0.0
    %v4382 = vmax.f32 %v4220, 0.0
    %v4383 = vmax.f32 %v4225, 0.0
    %v4384 = vmax.f32 %v4230, 0.0
    %v4385 = vmax.f32 %v4235, 0.0
    %v4386 = vmax.f32 %v4240, 0.0
    %v4387 = vmax.f32 %v4245, 0.0
    %v4388 = vmax.f32 %v4250, 0.0
    %v4389 = vmax.f32 %v4255, 0.0
    %v4390 = vmax.f32 %v4260, 0.0
    %v4391 = vmax.f32 %v4265, 0.0
    %v4392 = vmax.f32 %v4270, 0.0
    %v4393 = vmax.f32 %v4275, 0.0
    %v4394 = vmax.f32 %v4280, 0.0
    %v4395 = vmax.f32 %v4285, 0.0
    %v4396 = vmax.f32 %v4290, 0.0
    %v4397 = vmax.f32 %v4295, 0.0
    %v4398 = vmax.f32 %v4300, 0.0
    %v4399 = vmax.f32 %v4305, 0.0
    %v4400 = vmax.f32 %v4310, 0.0
    %v4401 = vmax.f32 %v4315, 0.0
    %v4402 = vmax.f32 %v4320, 0.0
    %v4403 = vmax.f32 %v4325, 0.0
    %v4404 = vmax.f32 %v4330, 0.0
    %v4405 = vmax.f32 %v4335, 0.0
    %v4406 = vmax.f32 %v4340, 0.0
    %v4407 = vmax.f32 %v4345, 0.0
    %v4408 = vmax.f32 %v4350, 0.0
    %v4409 = vmax.f32 %v4355, 0.0
    %v4410 = vmax.f32 %v4360, 0.0
    %4411 = vst.msk [vmem:[#allocation3] sm:$0xff] %vm1342, %v4363
    %4412 = vst.msk [vmem:[#allocation3 + $0x8] sm:$0xff] %vm1342, %v4364
    %4413 = vst.msk [vmem:[#allocation3 + $0x10] sm:$0xff] %vm1342, %v4365
    %4414 = vst.msk [vmem:[#allocation3 + $0x18] sm:$0xff] %vm1342, %v4366
    %4415 = vst.msk [vmem:[#allocation3 + $0x20] sm:$0xff] %vm1342, %v4367
    %4416 = vst.msk [vmem:[#allocation3 + $0x28] sm:$0xff] %vm1342, %v4368
    %4417 = vst.msk [vmem:[#allocation3 + $0x30] sm:$0xff] %vm1342, %v4369
    %4418 = vst.msk [vmem:[#allocation3 + $0x38] sm:$0xff] %vm1342, %v4370
    %4419 = vst.msk [vmem:[#allocation3 + $0x40] sm:$0xff] %vm1342, %v4371
    %4420 = vst.msk [vmem:[#allocation3 + $0x48] sm:$0xff] %vm1342, %v4372
    %4421 = vst.msk [vmem:[#allocation3 + $0x50] sm:$0xff] %vm1342, %v4373
    %4422 = vst.msk [vmem:[#allocation3 + $0x58] sm:$0xff] %vm1342, %v4374
    %4423 = vst.msk [vmem:[#allocation3 + $0x60] sm:$0xff] %vm1342, %v4375
    %4424 = vst.msk [vmem:[#allocation3 + $0x68] sm:$0xff] %vm1342, %v4376
    %4425 = vst.msk [vmem:[#allocation3 + $0x70] sm:$0xff] %vm1342, %v4377
    %4426 = vst.msk [vmem:[#allocation3 + $0x78] sm:$0xff] %vm1342, %v4378
    %4427 = vst.msk [vmem:[#allocation3 + $0x80] sm:$0xff] %vm1342, %v4379
    %4428 = vst.msk [vmem:[#allocation3 + $0x88] sm:$0xff] %vm1342, %v4380
    %4429 = vst.msk [vmem:[#allocation3 + $0x90] sm:$0xff] %vm1342, %v4381
    %4430 = vst.msk [vmem:[#allocation3 + $0x98] sm:$0xff] %vm1342, %v4382
    %4431 = vst.msk [vmem:[#allocation3 + $0xa0] sm:$0xff] %vm1342, %v4383
    %4432 = vst.msk [vmem:[#allocation3 + $0xa8] sm:$0xff] %vm1342, %v4384
    %4433 = vst.msk [vmem:[#allocation3 + $0xb0] sm:$0xff] %vm1342, %v4385
    %4434 = vst.msk [vmem:[#allocation3 + $0xb8] sm:$0xff] %vm1342, %v4386
    %4435 = vst.msk [vmem:[#allocation3 + $0xc0] sm:$0xff] %vm1342, %v4387
    %4436 = vst.msk [vmem:[#allocation3 + $0xc8] sm:$0xff] %vm1342, %v4388
    %4437 = vst.msk [vmem:[#allocation3 + $0xd0] sm:$0xff] %vm1342, %v4389
    %4438 = vst.msk [vmem:[#allocation3 + $0xd8] sm:$0xff] %vm1342, %v4390
    %4439 = vst.msk [vmem:[#allocation3 + $0xe0] sm:$0xff] %vm1342, %v4391
    %4440 = vst.msk [vmem:[#allocation3 + $0xe8] sm:$0xff] %vm1342, %v4392
    %4441 = vst.msk [vmem:[#allocation3 + $0xf0] sm:$0xff] %vm1342, %v4393
    %4442 = vst.msk [vmem:[#allocation3 + $0xf8] sm:$0xff] %vm1342, %v4394
    %4443 = vst.msk [vmem:[#allocation3 + $0x100] sm:$0xff] %vm1342, %v4395
    %4444 = vst.msk [vmem:[#allocation3 + $0x108] sm:$0xff] %vm1342, %v4396
    %4445 = vst.msk [vmem:[#allocation3 + $0x110] sm:$0xff] %vm1342, %v4397
    %4446 = vst.msk [vmem:[#allocation3 + $0x118] sm:$0xff] %vm1342, %v4398
    %4447 = vst.msk [vmem:[#allocation3 + $0x120] sm:$0xff] %vm1342, %v4399
    %4448 = vst.msk [vmem:[#allocation3 + $0x128] sm:$0xff] %vm1342, %v4400
    %4449 = vst.msk [vmem:[#allocation3 + $0x130] sm:$0xff] %vm1342, %v4401
    %4450 = vst.msk [vmem:[#allocation3 + $0x138] sm:$0xff] %vm1342, %v4402
    %4451 = vst.msk [vmem:[#allocation3 + $0x140] sm:$0xff] %vm1342, %v4403
    %4452 = vst.msk [vmem:[#allocation3 + $0x148] sm:$0xff] %vm1342, %v4404
    %4453 = vst.msk [vmem:[#allocation3 + $0x150] sm:$0xff] %vm1342, %v4405
    %4454 = vst.msk [vmem:[#allocation3 + $0x158] sm:$0xff] %vm1342, %v4406
    %4455 = vst.msk [vmem:[#allocation3 + $0x160] sm:$0xff] %vm1342, %v4407
    %4456 = vst.msk [vmem:[#allocation3 + $0x168] sm:$0xff] %vm1342, %v4408
    %4457 = vst.msk [vmem:[#allocation3 + $0x170] sm:$0xff] %vm1342, %v4409
    %4458 = vst.msk [vmem:[#allocation3 + $0x178] sm:$0xff] %vm1342, %v4410
    %v4459 = vld [vmem:[#allocation3] ss:$3 sm:$0xff]
    %s4460 = scalar_lea.vmem [#allocation3], 24
    %v4461 = vld [vmem:[%s4460] ss:$3 sm:$0xff]
    %s4462 = scalar_lea.vmem [#allocation3], 48
    %v4463 = vld [vmem:[%s4462] ss:$3 sm:$0xff]
    %s4464 = scalar_lea.vmem [#allocation3], 72
    %v4465 = vld [vmem:[%s4464] ss:$3 sm:$0xff]
    %s4466 = scalar_lea.vmem [#allocation3], 96
    %v4467 = vld [vmem:[%s4466] ss:$3 sm:$0xff]
    %s4468 = scalar_lea.vmem [#allocation3], 120
    %v4469 = vld [vmem:[%s4468] ss:$3 sm:$0xff]
    %s4470 = scalar_lea.vmem [#allocation3], 144
    %v4471 = vld [vmem:[%s4470] ss:$3 sm:$0xff]
    %s4472 = scalar_lea.vmem [#allocation3], 168
    %v4473 = vld [vmem:[%s4472] ss:$3 sm:$0xff]
    %s4474 = scalar_lea.vmem [#allocation3], 192
    %v4475 = vld [vmem:[%s4474] ss:$3 sm:$0xff]
    %s4476 = scalar_lea.vmem [#allocation3], 216
    %v4477 = vld [vmem:[%s4476] ss:$3 sm:$0xff]
    %s4478 = scalar_lea.vmem [#allocation3], 240
    %v4479 = vld [vmem:[%s4478] ss:$3 sm:$0xff]
    %s4480 = scalar_lea.vmem [#allocation3], 264
    %v4481 = vld [vmem:[%s4480] ss:$3 sm:$0xff]
    %s4482 = scalar_lea.vmem [#allocation3], 288
    %v4483 = vld [vmem:[%s4482] ss:$3 sm:$0xff]
    %s4484 = scalar_lea.vmem [#allocation3], 312
    %v4485 = vld [vmem:[%s4484] ss:$3 sm:$0xff]
    %s4486 = scalar_lea.vmem [#allocation3], 336
    %v4487 = vld [vmem:[%s4486] ss:$3 sm:$0xff]
    %s4488 = scalar_lea.vmem [#allocation3], 360
    %v4489 = vld [vmem:[%s4488] ss:$3 sm:$0xff]
    %s4490 = scalar_lea.vmem [#allocation3], 1
    %v4491 = vld [vmem:[%s4490] ss:$3 sm:$0xff]
    %s4492 = scalar_lea.vmem [#allocation3], 25
    %v4493 = vld [vmem:[%s4492] ss:$3 sm:$0xff]
    %s4494 = scalar_lea.vmem [#allocation3], 49
    %v4495 = vld [vmem:[%s4494] ss:$3 sm:$0xff]
    %s4496 = scalar_lea.vmem [#allocation3], 73
    %v4497 = vld [vmem:[%s4496] ss:$3 sm:$0xff]
    %s4498 = scalar_lea.vmem [#allocation3], 97
    %v4499 = vld [vmem:[%s4498] ss:$3 sm:$0xff]
    %s4500 = scalar_lea.vmem [#allocation3], 121
    %v4501 = vld [vmem:[%s4500] ss:$3 sm:$0xff]
    %s4502 = scalar_lea.vmem [#allocation3], 145
    %v4503 = vld [vmem:[%s4502] ss:$3 sm:$0xff]
    %s4504 = scalar_lea.vmem [#allocation3], 169
    %v4505 = vld [vmem:[%s4504] ss:$3 sm:$0xff]
    %s4506 = scalar_lea.vmem [#allocation3], 193
    %v4507 = vld [vmem:[%s4506] ss:$3 sm:$0xff]
    %s4508 = scalar_lea.vmem [#allocation3], 217
    %v4509 = vld [vmem:[%s4508] ss:$3 sm:$0xff]
    %s4510 = scalar_lea.vmem [#allocation3], 241
    %v4511 = vld [vmem:[%s4510] ss:$3 sm:$0xff]
    %s4512 = scalar_lea.vmem [#allocation3], 265
    %v4513 = vld [vmem:[%s4512] ss:$3 sm:$0xff]
    %s4514 = scalar_lea.vmem [#allocation3], 289
    %v4515 = vld [vmem:[%s4514] ss:$3 sm:$0xff]
    %s4516 = scalar_lea.vmem [#allocation3], 313
    %v4517 = vld [vmem:[%s4516] ss:$3 sm:$0xff]
    %s4518 = scalar_lea.vmem [#allocation3], 337
    %v4519 = vld [vmem:[%s4518] ss:$3 sm:$0xff]
    %s4520 = scalar_lea.vmem [#allocation3], 361
    %v4521 = vld [vmem:[%s4520] ss:$3 sm:$0xff]
    %s4522 = scalar_lea.vmem [#allocation3], 2
    %v4523 = vld [vmem:[%s4522] ss:$3 sm:$0xff]
    %s4524 = scalar_lea.vmem [#allocation3], 26
    %v4525 = vld [vmem:[%s4524] ss:$3 sm:$0xff]
    %s4526 = scalar_lea.vmem [#allocation3], 50
    %v4527 = vld [vmem:[%s4526] ss:$3 sm:$0xff]
    %s4528 = scalar_lea.vmem [#allocation3], 74
    %v4529 = vld [vmem:[%s4528] ss:$3 sm:$0xff]
    %s4530 = scalar_lea.vmem [#allocation3], 98
    %v4531 = vld [vmem:[%s4530] ss:$3 sm:$0xff]
    %s4532 = scalar_lea.vmem [#allocation3], 122
    %v4533 = vld [vmem:[%s4532] ss:$3 sm:$0xff]
    %s4534 = scalar_lea.vmem [#allocation3], 146
    %v4535 = vld [vmem:[%s4534] ss:$3 sm:$0xff]
    %s4536 = scalar_lea.vmem [#allocation3], 170
    %v4537 = vld [vmem:[%s4536] ss:$3 sm:$0xff]
    %s4538 = scalar_lea.vmem [#allocation3], 194
    %v4539 = vld [vmem:[%s4538] ss:$3 sm:$0xff]
    %s4540 = scalar_lea.vmem [#allocation3], 218
    %v4541 = vld [vmem:[%s4540] ss:$3 sm:$0xff]
    %s4542 = scalar_lea.vmem [#allocation3], 242
    %v4543 = vld [vmem:[%s4542] ss:$3 sm:$0xff]
    %s4544 = scalar_lea.vmem [#allocation3], 266
    %v4545 = vld [vmem:[%s4544] ss:$3 sm:$0xff]
    %s4546 = scalar_lea.vmem [#allocation3], 290
    %v4547 = vld [vmem:[%s4546] ss:$3 sm:$0xff]
    %s4548 = scalar_lea.vmem [#allocation3], 314
    %v4549 = vld [vmem:[%s4548] ss:$3 sm:$0xff]
    %s4550 = scalar_lea.vmem [#allocation3], 338
    %v4551 = vld [vmem:[%s4550] ss:$3 sm:$0xff]
    %s4552 = scalar_lea.vmem [#allocation3], 362
    %v4553 = vld [vmem:[%s4552] ss:$3 sm:$0xff]
    %v4554 = vmax.f32 %v4459, %v4491
    %v4555 = vmax.f32 %v4461, %v4493
    %v4556 = vmax.f32 %v4463, %v4495
    %v4557 = vmax.f32 %v4465, %v4497
    %v4558 = vmax.f32 %v4467, %v4499
    %v4559 = vmax.f32 %v4469, %v4501
    %v4560 = vmax.f32 %v4471, %v4503
    %v4561 = vmax.f32 %v4473, %v4505
    %v4562 = vmax.f32 %v4475, %v4507
    %v4563 = vmax.f32 %v4477, %v4509
    %v4564 = vmax.f32 %v4479, %v4511
    %v4565 = vmax.f32 %v4481, %v4513
    %v4566 = vmax.f32 %v4483, %v4515
    %v4567 = vmax.f32 %v4485, %v4517
    %v4568 = vmax.f32 %v4487, %v4519
    %v4569 = vmax.f32 %v4489, %v4521
    %v4570 = vmax.f32 %v4554, %v4523
    %v4571 = vmax.f32 %v4555, %v4525
    %v4572 = vmax.f32 %v4556, %v4527
    %v4573 = vmax.f32 %v4557, %v4529
    %v4574 = vmax.f32 %v4558, %v4531
    %v4575 = vmax.f32 %v4559, %v4533
    %v4576 = vmax.f32 %v4560, %v4535
    %v4577 = vmax.f32 %v4561, %v4537
    %v4578 = vmax.f32 %v4562, %v4539
    %v4579 = vmax.f32 %v4563, %v4541
    %v4580 = vmax.f32 %v4564, %v4543
    %v4581 = vmax.f32 %v4565, %v4545
    %v4582 = vmax.f32 %v4566, %v4547
    %v4583 = vmax.f32 %v4567, %v4549
    %v4584 = vmax.f32 %v4568, %v4551
    %v4585 = vmax.f32 %v4569, %v4553
    %v4602 = vrot.slane %v4570, 1
    %v4603 = vrot.slane %v4571, 1
    %v4604 = vsel %vm327, %v4602, %v4603
    %v4605 = vrot.slane %v4572, 1
    %v4606 = vsel %vm327, %v4603, %v4605
    %v4607 = vrot.slane %v4573, 1
    %v4608 = vsel %vm327, %v4605, %v4607
    %v4609 = vrot.slane %v4574, 1
    %v4610 = vsel %vm327, %v4607, %v4609
    %v4611 = vrot.slane %v4575, 1
    %v4612 = vsel %vm327, %v4609, %v4611
    %v4613 = vrot.slane %v4576, 1
    %v4614 = vsel %vm327, %v4611, %v4613
    %v4615 = vrot.slane %v4577, 1
    %v4616 = vsel %vm327, %v4613, %v4615
    %v4617 = vrot.slane %v4578, 1
    %v4618 = vsel %vm327, %v4615, %v4617
    %v4619 = vrot.slane %v4579, 1
    %v4620 = vsel %vm327, %v4617, %v4619
    %v4621 = vrot.slane %v4580, 1
    %v4622 = vsel %vm327, %v4619, %v4621
    %v4623 = vrot.slane %v4581, 1
    %v4624 = vsel %vm327, %v4621, %v4623
    %v4625 = vrot.slane %v4582, 1
    %v4626 = vsel %vm327, %v4623, %v4625
    %v4627 = vrot.slane %v4583, 1
    %v4628 = vsel %vm327, %v4625, %v4627
    %v4629 = vrot.slane %v4584, 1
    %v4630 = vsel %vm327, %v4627, %v4629
    %v4631 = vrot.slane %v4585, 1
    %v4632 = vsel %vm327, %v4629, %v4631
    %v4635 = vsel %vm327, %v4631, %v4602
    %v4636 = vrot.slane %v4570, 2
    %v4637 = vrot.slane %v4571, 2
    %v4638 = vsel %vm618, %v4636, %v4637
    %v4639 = vrot.slane %v4572, 2
    %v4640 = vsel %vm618, %v4637, %v4639
    %v4641 = vrot.slane %v4573, 2
    %v4642 = vsel %vm618, %v4639, %v4641
    %v4643 = vrot.slane %v4574, 2
    %v4644 = vsel %vm618, %v4641, %v4643
    %v4645 = vrot.slane %v4575, 2
    %v4646 = vsel %vm618, %v4643, %v4645
    %v4647 = vrot.slane %v4576, 2
    %v4648 = vsel %vm618, %v4645, %v4647
    %v4649 = vrot.slane %v4577, 2
    %v4650 = vsel %vm618, %v4647, %v4649
    %v4651 = vrot.slane %v4578, 2
    %v4652 = vsel %vm618, %v4649, %v4651
    %v4653 = vrot.slane %v4579, 2
    %v4654 = vsel %vm618, %v4651, %v4653
    %v4655 = vrot.slane %v4580, 2
    %v4656 = vsel %vm618, %v4653, %v4655
    %v4657 = vrot.slane %v4581, 2
    %v4658 = vsel %vm618, %v4655, %v4657
    %v4659 = vrot.slane %v4582, 2
    %v4660 = vsel %vm618, %v4657, %v4659
    %v4661 = vrot.slane %v4583, 2
    %v4662 = vsel %vm618, %v4659, %v4661
    %v4663 = vrot.slane %v4584, 2
    %v4664 = vsel %vm618, %v4661, %v4663
    %v4665 = vrot.slane %v4585, 2
    %v4666 = vsel %vm618, %v4663, %v4665
    %v4669 = vsel %vm618, %v4665, %v4636
    %4671 = vrot.lane.b32.xlu0 %v4604, 64
    %v4672 = vpop.permute.xlu0 %4671
    %4673 = vrot.lane.b32.xlu0 %v4606, 64
    %v4674 = vpop.permute.xlu0 %4673
    %4675 = vrot.lane.b32.xlu0 %v4608, 64
    %v4676 = vpop.permute.xlu0 %4675
    %4677 = vrot.lane.b32.xlu0 %v4610, 64
    %v4678 = vpop.permute.xlu0 %4677
    %4679 = vrot.lane.b32.xlu0 %v4612, 64
    %v4680 = vpop.permute.xlu0 %4679
    %4681 = vrot.lane.b32.xlu0 %v4614, 64
    %v4682 = vpop.permute.xlu0 %4681
    %4683 = vrot.lane.b32.xlu0 %v4616, 64
    %v4684 = vpop.permute.xlu0 %4683
    %4685 = vrot.lane.b32.xlu0 %v4618, 64
    %v4686 = vpop.permute.xlu0 %4685
    %4687 = vrot.lane.b32.xlu0 %v4620, 64
    %v4688 = vpop.permute.xlu0 %4687
    %4689 = vrot.lane.b32.xlu0 %v4622, 64
    %v4690 = vpop.permute.xlu0 %4689
    %4691 = vrot.lane.b32.xlu0 %v4624, 64
    %v4692 = vpop.permute.xlu0 %4691
    %4693 = vrot.lane.b32.xlu0 %v4626, 64
    %v4694 = vpop.permute.xlu0 %4693
    %4695 = vrot.lane.b32.xlu0 %v4628, 64
    %v4696 = vpop.permute.xlu0 %4695
    %4697 = vrot.lane.b32.xlu0 %v4630, 64
    %v4698 = vpop.permute.xlu0 %4697
    %4699 = vrot.lane.b32.xlu0 %v4632, 64
    %v4700 = vpop.permute.xlu0 %4699
    %4701 = vrot.lane.b32.xlu0 %v4635, 64
    %v4702 = vpop.permute.xlu0 %4701
    %v4719 = vsel %vm1342, %v4570, %v4672
    %v4720 = vsel %vm1342, %v4571, %v4674
    %v4721 = vsel %vm1342, %v4572, %v4676
    %v4722 = vsel %vm1342, %v4573, %v4678
    %v4723 = vsel %vm1342, %v4574, %v4680
    %v4724 = vsel %vm1342, %v4575, %v4682
    %v4725 = vsel %vm1342, %v4576, %v4684
    %v4726 = vsel %vm1342, %v4577, %v4686
    %v4727 = vsel %vm1342, %v4578, %v4688
    %v4728 = vsel %vm1342, %v4579, %v4690
    %v4729 = vsel %vm1342, %v4580, %v4692
    %v4730 = vsel %vm1342, %v4581, %v4694
    %v4731 = vsel %vm1342, %v4582, %v4696
    %v4732 = vsel %vm1342, %v4583, %v4698
    %v4733 = vsel %vm1342, %v4584, %v4700
    %v4734 = vsel %vm1342, %v4585, %v4702
    %v4735 = vld [vmem:[%s5] sm:$0xff]
    %v4736 = vld [vmem:[%s5 + $0x8] sm:$0xff]
    %v4737 = vld [vmem:[%s5 + $0x10] sm:$0xff]
    %v4738 = vld [vmem:[%s5 + $0x18] sm:$0xff]
    %v4739 = vld [vmem:[%s5 + $0x20] sm:$0xff]
    %v4740 = vld [vmem:[%s5 + $0x28] sm:$0xff]
    %v4741 = vld [vmem:[%s5 + $0x30] sm:$0xff]
    %v4742 = vld [vmem:[%s5 + $0x38] sm:$0xff]
    %v4743 = vld [vmem:[%s5 + $0x40] sm:$0xff]
    %v4744 = vld [vmem:[%s5 + $0x48] sm:$0xff]
    %v4745 = vld [vmem:[%s5 + $0x50] sm:$0xff]
    %v4746 = vld [vmem:[%s5 + $0x58] sm:$0xff]
    %v4747 = vld [vmem:[%s5 + $0x60] sm:$0xff]
    %v4748 = vld [vmem:[%s5 + $0x68] sm:$0xff]
    %v4749 = vld [vmem:[%s5 + $0x70] sm:$0xff]
    %v4750 = vld [vmem:[%s5 + $0x78] sm:$0xff]
    %v4751 = vld [vmem:[%s5 + $0x80] sm:$0xff]
    %v4752 = vld [vmem:[%s5 + $0x88] sm:$0xff]
    %v4753 = vld [vmem:[%s5 + $0x90] sm:$0xff]
    %v4754 = vld [vmem:[%s5 + $0x98] sm:$0xff]
    %v4755 = vld [vmem:[%s5 + $0xa0] sm:$0xff]
    %v4756 = vld [vmem:[%s5 + $0xa8] sm:$0xff]
    %v4757 = vld [vmem:[%s5 + $0xb0] sm:$0xff]
    %v4758 = vld [vmem:[%s5 + $0xb8] sm:$0xff]
    %v4759 = vld [vmem:[%s6] sm:$0x1]
    %v4761 = vlaneseq
    %v4762 = vshrl.u32 %v4761, 7
    %v4763 = vsub.s32 0, %v4762
    %v4764 = vrot.slane %v4759, %v4763
    %v4766 = vsel %vm1342, %v4638, 0
    %v4768 = vsel %vm1342, %v4640, 0
    %v4770 = vsel %vm1342, %v4642, 0
    %v4772 = vsel %vm1342, %v4644, 0
    %v4774 = vsel %vm1342, %v4646, 0
    %v4776 = vsel %vm1342, %v4648, 0
    %v4778 = vsel %vm1342, %v4650, 0
    %v4780 = vsel %vm1342, %v4652, 0
    %v4782 = vsel %vm1342, %v4654, 0
    %v4784 = vsel %vm1342, %v4656, 0
    %v4786 = vsel %vm1342, %v4658, 0
    %v4788 = vsel %vm1342, %v4660, 0
    %v4790 = vsel %vm1342, %v4662, 0
    %v4792 = vsel %vm1342, %v4664, 0
    %v4794 = vsel %vm1342, %v4666, 0
    %v4797 = vsel %vm1342, %v4669, 0
    %4799 = vmatprep.subr.mxu0 0.0
    %4800 = vmatpush1.msra.mxu0 %v4735
    %4801 = vmatprep.subr.mxu0 0.0
    %4802 = vmatpush1.msra.mxu0 %v4736
    %4803 = vmatprep.subr.mxu0 0.0
    %4804 = vmatpush1.msra.mxu0 %v4737
    %4805 = vmatprep.subr.mxu0 0.0
    %4806 = vmatpush1.msra.mxu0 %v4738
    %4807 = vmatprep.subr.mxu0 0.0
    %4808 = vmatpush1.msra.mxu0 %v4739
    %4809 = vmatprep.subr.mxu0 0.0
    %4810 = vmatpush1.msra.mxu0 %v4740
    %4811 = vmatprep.subr.mxu0 0.0
    %4812 = vmatpush1.msra.mxu0 %v4741
    %4813 = vmatprep.subr.mxu0 0.0
    %4814 = vmatpush1.msra.mxu0 %v4742
    %4815 = vmatprep.subr.mxu0 0.0
    %4816 = vmatpush1.msra.mxu0 %v4743
    %4817 = vmatprep.subr.mxu0 0.0
    %4818 = vmatpush1.msra.mxu0 %v4744
    %4819 = vmatprep.subr.mxu0 0.0
    %4820 = vmatpush1.msra.mxu0 %v4745
    %4821 = vmatprep.subr.mxu0 0.0
    %4822 = vmatpush1.msra.mxu0 %v4746
    %4823 = vmatprep.subr.mxu0 0.0
    %4824 = vmatpush1.msra.mxu0 %v4747
    %4825 = vmatprep.subr.mxu0 0.0
    %4826 = vmatpush1.msra.mxu0 %v4748
    %4827 = vmatprep.subr.mxu0 0.0
    %4828 = vmatpush1.msra.mxu0 %v4749
    %4829 = vmatprep.subr.mxu0 0.0
    %4830 = vmatpush1.msra.mxu0 %v4750
    %4831 = vmatprep.subr.mxu0 0.0
    %4832 = vmatpush1.msra.mxu0 %v4751
    %4833 = vmatprep.subr.mxu0 0.0
    %4834 = vmatpush1.msra.mxu0 %v4752
    %4835 = vmatprep.subr.mxu0 0.0
    %4836 = vmatpush1.msra.mxu0 %v4753
    %4837 = vmatprep.subr.mxu0 0.0
    %4838 = vmatpush1.msra.mxu0 %v4754
    %4839 = vmatprep.subr.mxu0 0.0
    %4840 = vmatpush1.msra.mxu0 %v4755
    %4841 = vmatprep.subr.mxu0 0.0
    %4842 = vmatpush1.msra.mxu0 %v4756
    %4843 = vmatprep.subr.mxu0 0.0
    %4844 = vmatpush1.msra.mxu0 %v4757
    %4845 = vmatprep.subr.mxu0 0.0
    %4846 = vmatpush1.msra.mxu0 %v4758
    %4847 = vmatprep.subr.mxu0 0.0
    %4848 = vmatpush1.msra.mxu0 0.0
    %4849 = vmatprep.subr.mxu0 0.0
    %4850 = vmatpush1.msra.mxu0 0.0
    %4851 = vmatprep.subr.mxu0 0.0
    %4852 = vmatpush1.msra.mxu0 0.0
    %4853 = vmatprep.subr.mxu0 0.0
    %4854 = vmatpush1.msra.mxu0 0.0
    %4855 = vmatprep.subr.mxu0 0.0
    %4856 = vmatpush1.msra.mxu0 0.0
    %4857 = vmatprep.subr.mxu0 0.0
    %4858 = vmatpush1.msra.mxu0 0.0
    %4859 = vmatprep.subr.mxu0 0.0
    %4860 = vmatpush1.msra.mxu0 0.0
    %4861 = vmatprep.subr.mxu0 0.0
    %4862 = vmatpush1.msra.mxu0 0.0
    %4863 = vmatprep.mubr.f32.mxu0 %v4766
    %4864 = vmatmul.mubr.f32.gmra.mrb[0].mxu0 %v4719
    %v4865 = vpop.f32.mrb[0].mxu0
    %v4866 = vadd.f32 %v4764, %v4865
    %v4867 = vpop.f32.mrb[0].mxu0
    %4868 = vmatprep.mubr.f32.mxu0 %v4768
    %4869 = vmatmul.mubr.f32.gmra.mrb[0].mxu0 %v4720
    %v4870 = vpop.f32.mrb[0].mxu0
    %v4871 = vadd.f32 %v4764, %v4870
    %v4872 = vpop.f32.mrb[0].mxu0
    %4873 = vmatprep.mubr.f32.mxu0 %v4770
    %4874 = vmatmul.mubr.f32.gmra.mrb[0].mxu0 %v4721
    %v4875 = vpop.f32.mrb[0].mxu0
    %v4876 = vadd.f32 %v4764, %v4875
    %v4877 = vpop.f32.mrb[0].mxu0
    %4878 = vmatprep.mubr.f32.mxu0 %v4772
    %4879 = vmatmul.mubr.f32.gmra.mrb[0].mxu0 %v4722
    %v4880 = vpop.f32.mrb[0].mxu0
    %v4881 = vadd.f32 %v4764, %v4880
    %v4882 = vpop.f32.mrb[0].mxu0
    %4883 = vmatprep.mubr.f32.mxu0 %v4774
    %4884 = vmatmul.mubr.f32.gmra.mrb[0].mxu0 %v4723
    %v4885 = vpop.f32.mrb[0].mxu0
    %v4886 = vadd.f32 %v4764, %v4885
    %v4887 = vpop.f32.mrb[0].mxu0
    %4888 = vmatprep.mubr.f32.mxu0 %v4776
    %4889 = vmatmul.mubr.f32.gmra.mrb[0].mxu0 %v4724
    %v4890 = vpop.f32.mrb[0].mxu0
    %v4891 = vadd.f32 %v4764, %v4890
    %v4892 = vpop.f32.mrb[0].mxu0
    %4893 = vmatprep.mubr.f32.mxu0 %v4778
    %4894 = vmatmul.mubr.f32.gmra.mrb[0].mxu0 %v4725
    %v4895 = vpop.f32.mrb[0].mxu0
    %v4896 = vadd.f32 %v4764, %v4895
    %v4897 = vpop.f32.mrb[0].mxu0
    %4898 = vmatprep.mubr.f32.mxu0 %v4780
    %4899 = vmatmul.mubr.f32.gmra.mrb[0].mxu0 %v4726
    %v4900 = vpop.f32.mrb[0].mxu0
    %v4901 = vadd.f32 %v4764, %v4900
    %v4902 = vpop.f32.mrb[0].mxu0
    %4903 = vmatprep.mubr.f32.mxu0 %v4782
    %4904 = vmatmul.mubr.f32.gmra.mrb[0].mxu0 %v4727
    %v4905 = vpop.f32.mrb[0].mxu0
    %v4906 = vadd.f32 %v4764, %v4905
    %v4907 = vpop.f32.mrb[0].mxu0
    %4908 = vmatprep.mubr.f32.mxu0 %v4784
    %4909 = vmatmul.mubr.f32.gmra.mrb[0].mxu0 %v4728
    %v4910 = vpop.f32.mrb[0].mxu0
    %v4911 = vadd.f32 %v4764, %v4910
    %v4912 = vpop.f32.mrb[0].mxu0
    %4913 = vmatprep.mubr.f32.mxu0 %v4786
    %4914 = vmatmul.mubr.f32.gmra.mrb[0].mxu0 %v4729
    %v4915 = vpop.f32.mrb[0].mxu0
    %v4916 = vadd.f32 %v4764, %v4915
    %v4917 = vpop.f32.mrb[0].mxu0
    %4918 = vmatprep.mubr.f32.mxu0 %v4788
    %4919 = vmatmul.mubr.f32.gmra.mrb[0].mxu0 %v4730
    %v4920 = vpop.f32.mrb[0].mxu0
    %v4921 = vadd.f32 %v4764, %v4920
    %v4922 = vpop.f32.mrb[0].mxu0
    %4923 = vmatprep.mubr.f32.mxu0 %v4790
    %4924 = vmatmul.mubr.f32.gmra.mrb[0].mxu0 %v4731
    %v4925 = vpop.f32.mrb[0].mxu0
    %v4926 = vadd.f32 %v4764, %v4925
    %v4927 = vpop.f32.mrb[0].mxu0
    %4928 = vmatprep.mubr.f32.mxu0 %v4792
    %4929 = vmatmul.mubr.f32.gmra.mrb[0].mxu0 %v4732
    %v4930 = vpop.f32.mrb[0].mxu0
    %v4931 = vadd.f32 %v4764, %v4930
    %v4932 = vpop.f32.mrb[0].mxu0
    %4933 = vmatprep.mubr.f32.mxu0 %v4794
    %4934 = vmatmul.mubr.f32.gmra.mrb[0].mxu0 %v4733
    %v4935 = vpop.f32.mrb[0].mxu0
    %v4936 = vadd.f32 %v4764, %v4935
    %v4937 = vpop.f32.mrb[0].mxu0
    %4938 = vmatprep.mubr.f32.mxu0 %v4797
    %4939 = vmatmul.mubr.f32.gmra.mrb[0].mxu0 %v4734
    %v4940 = vpop.f32.mrb[0].mxu0
    %v4941 = vadd.f32 %v4764, %v4940
    %v4942 = vpop.f32.mrb[0].mxu0
    %4943 = vdwg.mxu0
    %v4944 = vmax.f32 %v4866, 0.0
    %v4945 = vmax.f32 %v4871, 0.0
    %v4946 = vmax.f32 %v4876, 0.0
    %v4947 = vmax.f32 %v4881, 0.0
    %v4948 = vmax.f32 %v4886, 0.0
    %v4949 = vmax.f32 %v4891, 0.0
    %v4950 = vmax.f32 %v4896, 0.0
    %v4951 = vmax.f32 %v4901, 0.0
    %v4952 = vmax.f32 %v4906, 0.0
    %v4953 = vmax.f32 %v4911, 0.0
    %v4954 = vmax.f32 %v4916, 0.0
    %v4955 = vmax.f32 %v4921, 0.0
    %v4956 = vmax.f32 %v4926, 0.0
    %v4957 = vmax.f32 %v4931, 0.0
    %v4958 = vmax.f32 %v4936, 0.0
    %v4959 = vmax.f32 %v4941, 0.0
    %4960 = vst [vmem:[#allocation4] sm:$0xff] %v4944
    %4961 = vst [vmem:[#allocation4 + $0x8] sm:$0xff] %v4945
    %4962 = vst [vmem:[#allocation4 + $0x10] sm:$0xff] %v4946
    %4963 = vst [vmem:[#allocation4 + $0x18] sm:$0xff] %v4947
    %4964 = vst [vmem:[#allocation4 + $0x20] sm:$0xff] %v4948
    %4965 = vst [vmem:[#allocation4 + $0x28] sm:$0xff] %v4949
    %4966 = vst [vmem:[#allocation4 + $0x30] sm:$0xff] %v4950
    %4967 = vst [vmem:[#allocation4 + $0x38] sm:$0xff] %v4951
    %4968 = vst [vmem:[#allocation4 + $0x40] sm:$0xff] %v4952
    %4969 = vst [vmem:[#allocation4 + $0x48] sm:$0xff] %v4953
    %4970 = vst [vmem:[#allocation4 + $0x50] sm:$0xff] %v4954
    %4971 = vst [vmem:[#allocation4 + $0x58] sm:$0xff] %v4955
    %4972 = vst [vmem:[#allocation4 + $0x60] sm:$0xff] %v4956
    %4973 = vst [vmem:[#allocation4 + $0x68] sm:$0xff] %v4957
    %4974 = vst [vmem:[#allocation4 + $0x70] sm:$0xff] %v4958
    %4975 = vst [vmem:[#allocation4 + $0x78] sm:$0xff] %v4959
    %v4976 = vld [vmem:[#allocation4] ss:$8 sm:$0xf]
    %v4977 = vld [vmem:[#allocation4] ss:$8 sm:$0xf0]
    %v4978 = vor.u32 %v4976, %v4977
    %s4979 = scalar_lea.vmem [#allocation4], 64
    %v4980 = vld [vmem:[%s4979] ss:$8 sm:$0xf]
    %v4981 = vld [vmem:[%s4979] ss:$8 sm:$0xf0]
    %v4982 = vor.u32 %v4980, %v4981
    %s4983 = scalar_lea.vmem [#allocation4], 1
    %v4984 = vld [vmem:[%s4983] ss:$8 sm:$0xf]
    %v4985 = vld [vmem:[%s4983] ss:$8 sm:$0xf0]
    %v4986 = vor.u32 %v4984, %v4985
    %s4987 = scalar_lea.vmem [#allocation4], 65
    %v4988 = vld [vmem:[%s4987] ss:$8 sm:$0xf]
    %v4989 = vld [vmem:[%s4987] ss:$8 sm:$0xf0]
    %v4990 = vor.u32 %v4988, %v4989
    %v4991 = vmax.f32 %v4978, %v4986
    %v4992 = vmax.f32 %v4982, %v4990
    %s4993 = scalar_lea.vmem [#allocation4], 2
    %v4994 = vld [vmem:[%s4993] ss:$8 sm:$0xf]
    %v4995 = vld [vmem:[%s4993] ss:$8 sm:$0xf0]
    %v4996 = vor.u32 %v4994, %v4995
    %s4997 = scalar_lea.vmem [#allocation4], 66
    %v4998 = vld [vmem:[%s4997] ss:$8 sm:$0xf]
    %v4999 = vld [vmem:[%s4997] ss:$8 sm:$0xf0]
    %v5000 = vor.u32 %v4998, %v4999
    %v5001 = vmax.f32 %v4991, %v4996
    %v5002 = vmax.f32 %v4992, %v5000
    %s5003 = scalar_lea.vmem [#allocation4], 3
    %v5004 = vld [vmem:[%s5003] ss:$8 sm:$0xf]
    %v5005 = vld [vmem:[%s5003] ss:$8 sm:$0xf0]
    %v5006 = vor.u32 %v5004, %v5005
    %s5007 = scalar_lea.vmem [#allocation4], 67
    %v5008 = vld [vmem:[%s5007] ss:$8 sm:$0xf]
    %v5009 = vld [vmem:[%s5007] ss:$8 sm:$0xf0]
    %v5010 = vor.u32 %v5008, %v5009
    %v5011 = vmax.f32 %v5001, %v5006
    %v5012 = vmax.f32 %v5002, %v5010
    %v5013 = vld [vmem:[%s7] sm:$0xff]
    %v5014 = vld [vmem:[%s7 + $0x8] sm:$0xff]
    %v5015 = vld [vmem:[%s7 + $0x10] sm:$0xff]
    %v5016 = vld [vmem:[%s7 + $0x18] sm:$0xff]
    %v5017 = vld [vmem:[%s7 + $0x20] sm:$0xff]
    %v5018 = vld [vmem:[%s7 + $0x28] sm:$0xff]
    %v5019 = vld [vmem:[%s7 + $0x30] sm:$0xff]
    %v5020 = vld [vmem:[%s7 + $0x38] sm:$0xff]
    %v5021 = vld [vmem:[%s7 + $0x40] sm:$0xff]
    %v5022 = vld [vmem:[%s7 + $0x48] sm:$0xff]
    %v5023 = vld [vmem:[%s7 + $0x50] sm:$0xff]
    %v5024 = vld [vmem:[%s7 + $0x58] sm:$0xff]
    %v5025 = vld [vmem:[%s7 + $0x60] sm:$0xff]
    %v5026 = vld [vmem:[%s7 + $0x68] sm:$0xff]
    %v5027 = vld [vmem:[%s7 + $0x70] sm:$0xff]
    %v5028 = vld [vmem:[%s7 + $0x78] sm:$0xff]
    %v5029 = vld [vmem:[%s8] sm:$0x1]
    %v5031 = vlaneseq
    %v5032 = vshrl.u32 %v5031, 7
    %v5033 = vsub.s32 0, %v5032
    %v5034 = vrot.slane %v5029, %v5033
    %5036 = vmatprep.subr.mxu0 0.0
    %5037 = vmatpush1.msra.mxu0 %v5013
    %5038 = vmatprep.subr.mxu0 0.0
    %5039 = vmatpush1.msra.mxu0 %v5014
    %5040 = vmatprep.subr.mxu0 0.0
    %5041 = vmatpush1.msra.mxu0 %v5015
    %5042 = vmatprep.subr.mxu0 0.0
    %5043 = vmatpush1.msra.mxu0 %v5016
    %5044 = vmatprep.subr.mxu0 0.0
    %5045 = vmatpush1.msra.mxu0 %v5017
    %5046 = vmatprep.subr.mxu0 0.0
    %5047 = vmatpush1.msra.mxu0 %v5018
    %5048 = vmatprep.subr.mxu0 0.0
    %5049 = vmatpush1.msra.mxu0 %v5019
    %5050 = vmatprep.subr.mxu0 0.0
    %5051 = vmatpush1.msra.mxu0 %v5020
    %5052 = vmatprep.subr.mxu0 0.0
    %5053 = vmatpush1.msra.mxu0 %v5021
    %5054 = vmatprep.subr.mxu0 0.0
    %5055 = vmatpush1.msra.mxu0 %v5022
    %5056 = vmatprep.subr.mxu0 0.0
    %5057 = vmatpush1.msra.mxu0 %v5023
    %5058 = vmatprep.subr.mxu0 0.0
    %5059 = vmatpush1.msra.mxu0 %v5024
    %5060 = vmatprep.subr.mxu0 0.0
    %5061 = vmatpush1.msra.mxu0 %v5025
    %5062 = vmatprep.subr.mxu0 0.0
    %5063 = vmatpush1.msra.mxu0 %v5026
    %5064 = vmatprep.subr.mxu0 0.0
    %5065 = vmatpush1.msra.mxu0 %v5027
    %5066 = vmatprep.subr.mxu0 0.0
    %5067 = vmatpush1.msra.mxu0 %v5028
    %5068 = vmatprep.subr.mxu0 0.0
    %5069 = vmatpush1.msra.mxu0 0.0
    %5070 = vmatprep.subr.mxu0 0.0
    %5071 = vmatpush1.msra.mxu0 0.0
    %5072 = vmatprep.subr.mxu0 0.0
    %5073 = vmatpush1.msra.mxu0 0.0
    %5074 = vmatprep.subr.mxu0 0.0
    %5075 = vmatpush1.msra.mxu0 0.0
    %5076 = vmatprep.subr.mxu0 0.0
    %5077 = vmatpush1.msra.mxu0 0.0
    %5078 = vmatprep.subr.mxu0 0.0
    %5079 = vmatpush1.msra.mxu0 0.0
    %5080 = vmatprep.subr.mxu0 0.0
    %5081 = vmatpush1.msra.mxu0 0.0
    %5082 = vmatprep.subr.mxu0 0.0
    %5083 = vmatpush1.msra.mxu0 0.0
    %5084 = vmatprep.subr.mxu0 0.0
    %5085 = vmatpush1.msra.mxu0 0.0
    %5086 = vmatprep.subr.mxu0 0.0
    %5087 = vmatpush1.msra.mxu0 0.0
    %5088 = vmatprep.subr.mxu0 0.0
    %5089 = vmatpush1.msra.mxu0 0.0
    %5090 = vmatprep.subr.mxu0 0.0
    %5091 = vmatpush1.msra.mxu0 0.0
    %5092 = vmatprep.subr.mxu0 0.0
    %5093 = vmatpush1.msra.mxu0 0.0
    %5094 = vmatprep.subr.mxu0 0.0
    %5095 = vmatpush1.msra.mxu0 0.0
    %5096 = vmatprep.subr.mxu0 0.0
    %5097 = vmatpush1.msra.mxu0 0.0
    %5098 = vmatprep.subr.mxu0 0.0
    %5099 = vmatpush1.msra.mxu0 0.0
    %5100 = vmatprep.mubr.f32.mxu0 0.0
    %5101 = vmatmul.mubr.f32.gmra.mrb[0].mxu0 %v5011
    %v5102 = vpop.f32.mrb[0].mxu0
    %v5103 = vadd.f32 %v5034, %v5102
    %v5104 = vpop.f32.mrb[0].mxu0
    %5105 = vmatprep.mubr.f32.mxu0 0.0
    %5106 = vmatmul.mubr.f32.gmra.mrb[0].mxu0 %v5012
    %v5107 = vpop.f32.mrb[0].mxu0
    %v5108 = vadd.f32 %v5034, %v5107
    %v5109 = vpop.f32.mrb[0].mxu0
    %5110 = vdwg.mxu0
    %v5111 = vmax.f32 %v5103, 0.0
    %v5112 = vmax.f32 %v5108, 0.0
    %v5113 = vld [vmem:[%s9] sm:$0xff]
    %v5114 = vld [vmem:[%s9 + $0x8] sm:$0xff]
    %v5115 = vld [vmem:[%s9 + $0x10] sm:$0xff]
    %v5116 = vld [vmem:[%s9 + $0x18] sm:$0xff]
    %v5117 = vld [vmem:[%s9 + $0x20] sm:$0xff]
    %v5118 = vld [vmem:[%s9 + $0x28] sm:$0xff]
    %v5119 = vld [vmem:[%s9 + $0x30] sm:$0xff]
    %v5120 = vld [vmem:[%s9 + $0x38] sm:$0xff]
    %v5121 = vld [vmem:[%s10] sm:$0x1]
    %v5123 = vlaneseq
    %v5124 = vshrl.u32 %v5123, 7
    %v5125 = vsub.s32 0, %v5124
    %v5126 = vrot.slane %v5121, %v5125
    %v5129 = vsel %vm1342, %v5111, 0
    %v5132 = vsel %vm1342, %v5112, 0
    %5134 = vmatprep.subr.mxu0 0.0
    %5135 = vmatpush1.msra.mxu0 %v5113
    %5136 = vmatprep.subr.mxu0 0.0
    %5137 = vmatpush1.msra.mxu0 %v5114
    %5138 = vmatprep.subr.mxu0 0.0
    %5139 = vmatpush1.msra.mxu0 %v5115
    %5140 = vmatprep.subr.mxu0 0.0
    %5141 = vmatpush1.msra.mxu0 %v5116
    %5142 = vmatprep.subr.mxu0 0.0
    %5143 = vmatpush1.msra.mxu0 %v5117
    %5144 = vmatprep.subr.mxu0 0.0
    %5145 = vmatpush1.msra.mxu0 %v5118
    %5146 = vmatprep.subr.mxu0 0.0
    %5147 = vmatpush1.msra.mxu0 %v5119
    %5148 = vmatprep.subr.mxu0 0.0
    %5149 = vmatpush1.msra.mxu0 %v5120
    %5150 = vmatprep.subr.mxu0 0.0
    %5151 = vmatpush1.msra.mxu0 0.0
    %5152 = vmatprep.subr.mxu0 0.0
    %5153 = vmatpush1.msra.mxu0 0.0
    %5154 = vmatprep.subr.mxu0 0.0
    %5155 = vmatpush1.msra.mxu0 0.0
    %5156 = vmatprep.subr.mxu0 0.0
    %5157 = vmatpush1.msra.mxu0 0.0
    %5158 = vmatprep.subr.mxu0 0.0
    %5159 = vmatpush1.msra.mxu0 0.0
    %5160 = vmatprep.subr.mxu0 0.0
    %5161 = vmatpush1.msra.mxu0 0.0
    %5162 = vmatprep.subr.mxu0 0.0
    %5163 = vmatpush1.msra.mxu0 0.0
    %5164 = vmatprep.subr.mxu0 0.0
    %5165 = vmatpush1.msra.mxu0 0.0
    %5166 = vmatprep.subr.mxu0 0.0
    %5167 = vmatpush1.msra.mxu0 0.0
    %5168 = vmatprep.subr.mxu0 0.0
    %5169 = vmatpush1.msra.mxu0 0.0
    %5170 = vmatprep.subr.mxu0 0.0
    %5171 = vmatpush1.msra.mxu0 0.0
    %5172 = vmatprep.subr.mxu0 0.0
    %5173 = vmatpush1.msra.mxu0 0.0
    %5174 = vmatprep.subr.mxu0 0.0
    %5175 = vmatpush1.msra.mxu0 0.0
    %5176 = vmatprep.subr.mxu0 0.0
    %5177 = vmatpush1.msra.mxu0 0.0
    %5178 = vmatprep.subr.mxu0 0.0
    %5179 = vmatpush1.msra.mxu0 0.0
    %5180 = vmatprep.subr.mxu0 0.0
    %5181 = vmatpush1.msra.mxu0 0.0
    %5182 = vmatprep.subr.mxu0 0.0
    %5183 = vmatpush1.msra.mxu0 0.0
    %5184 = vmatprep.subr.mxu0 0.0
    %5185 = vmatpush1.msra.mxu0 0.0
    %5186 = vmatprep.subr.mxu0 0.0
    %5187 = vmatpush1.msra.mxu0 0.0
    %5188 = vmatprep.subr.mxu0 0.0
    %5189 = vmatpush1.msra.mxu0 0.0
    %5190 = vmatprep.subr.mxu0 0.0
    %5191 = vmatpush1.msra.mxu0 0.0
    %5192 = vmatprep.subr.mxu0 0.0
    %5193 = vmatpush1.msra.mxu0 0.0
    %5194 = vmatprep.subr.mxu0 0.0
    %5195 = vmatpush1.msra.mxu0 0.0
    %5196 = vmatprep.subr.mxu0 0.0
    %5197 = vmatpush1.msra.mxu0 0.0
    %5198 = vmatprep.mubr.f32.mxu0 0.0
    %5199 = vmatmul.mubr.f32.gmra.mrb[0].mxu0 %v5129
    %v5200 = vpop.f32.mrb[0].mxu0
    %v5201 = vadd.f32 %v5126, %v5200
    %v5202 = vpop.f32.mrb[0].mxu0
    %5203 = vmatprep.mubr.f32.mxu0 0.0
    %5204 = vmatmul.mubr.f32.gmra.mrb[0].mxu0 %v5132
    %v5205 = vpop.f32.mrb[0].mxu0
    %v5206 = vadd.f32 %v5126, %v5205
    %v5207 = vpop.f32.mrb[0].mxu0
    %5208 = vdwg.mxu0
    %5209 = vst [vmem:[#allocation5] sm:$0xff] %v5201
    %5210 = vst [vmem:[#allocation5 + $0x8] sm:$0xff] %v5206
    // Predicated region
    $region46: #{tpu_custom_call.1} parent=1 // pred_check
      _
    $region47: #{tpu_custom_call.1} parent=1 // pred_check_branch
      %5212 = sbr.rel (0) target = $region49
    $region48: #{tpu_custom_call.1} parent=1 // pred_region
      %s5214 = ssub.s32 256, 256
      %5215 = vsyncadd [#allocation6], %s5214
      %s5216 = sshll.u32 [#allocation5], 4
      %s5217 = int_to_ptr.vmem [resolvable:$true] %s5216
      %5222 = dma.vmem_to_hbm [thread:$0]  %s5217, 256, %s11, [#allocation6], 128, 128, 8
    $region49: #{tpu_custom_call.1} parent=1 // pred_fallthru
      _
    // Predicated region
    $region50: #{tpu_custom_call.1} parent=1 // pred_check
      _
    $region51: #{tpu_custom_call.1} parent=1 // pred_check_branch
      %5224 = sbr.rel (0) target = $region53
    $region52: #{tpu_custom_call.1} parent=1 // pred_region
      %5225 = dma.done [#allocation6], 256
    $region53: #{tpu_custom_call.1} parent=1 // pred_fallthru
      _
    %5226 = vsyncpa [#allocation6], 1

</llo_original>
